<compile_context>
chip_gen: v6e
topology: v6e:2x2x1
jax: 0.10.0
libtpu: 0.0.40
codegen_flags: <defaults>
</compile_context>

<pallas_src>
import functools

import jax
import jax.numpy as jnp
from jax import lax
from jax.experimental import pallas as pl
from jax.experimental.pallas import tpu as pltpu


def _round_up(x, m):
    return (x + m - 1) // m * m


# ----------------------------------------------------------------------------
# Pallas kernel: one bidirectional LSTM layer.  Grid axis 0 = direction
# (0 = forward, 1 = backward), marked "parallel" for megacore.
# ----------------------------------------------------------------------------
def _bilstm_layer_kernel(x_ref, w_ih_ref, w_hh_ref, b_ref,
                         y_ref, h_last_ref, xg_ref):
    # x_ref      : (S, Bp, Dp)   f32   padded, sequence-major input
    # w_ih_ref   : (Dp, 4Hp)     f32   direction-selected via BlockSpec
    # w_hh_ref   : (Hp, 4Hp)     f32
    # b_ref      : (1, 4Hp)      f32   b_ih + b_hh (gate-column padded)
    # y_ref      : (S, Bp, Hp)   f32   this direction's half of (S,Bp,2Hp) out
    # h_last_ref : (Bp, Hp)      f32   final hidden state for this direction
    # xg_ref     : (S, Bp, 4Hp)  f32   VMEM scratch for hoisted input GEMM
    S, Bp, Dp = x_ref.shape
    Hp = w_hh_ref.shape[0]
    d = pl.program_id(0)

    # ---- hoisted input projection: one big (S*Bp, Dp) x (Dp, 4Hp) GEMM ----
    x_flat = x_ref[...].reshape(S * Bp, Dp)
    xg = jnp.dot(x_flat, w_ih_ref[...], preferred_element_type=jnp.float32)
    xg_ref[...] = (xg + b_ref[...]).reshape(S, Bp, 4 * Hp)

    w_hh = w_hh_ref[...]

    def step(t, carry):
        h, c = carry
        # Backward direction: time reversal by index, no data movement.
        t_src = jnp.where(d == 0, t, S - 1 - t)
        gates = xg_ref[t_src] + jnp.dot(h, w_hh,
                                        preferred_element_type=jnp.float32)
        # PyTorch gate order: input, forget, cell(g), output.
        # Hp = 128 so every gate slice starts at a multiple of 128 lanes.
        i_g = jax.nn.sigmoid(gates[:, 0 * Hp:1 * Hp])
        f_g = jax.nn.sigmoid(gates[:, 1 * Hp:2 * Hp])
        g_g = jnp.tanh(gates[:, 2 * Hp:3 * Hp])
        o_g = jax.nn.sigmoid(gates[:, 3 * Hp:4 * Hp])
        c_new = f_g * c + i_g * g_g
        h_new = o_g * jnp.tanh(c_new)
        y_ref[t_src] = h_new                      # full (8,128) unmasked store
        return h_new, c_new

    h0 = jnp.zeros((Bp, Hp), jnp.float32)
    c0 = jnp.zeros((Bp, Hp), jnp.float32)
    h_f, _ = lax.fori_loop(0, S, step, (h0, c0), unroll=True)
    h_last_ref[...] = h_f


def run_bilstm_layer(x_pad, w_ih_t, w_hh_t, bias):
    """x_pad: (S, Bp, Dp) f32 padded.  Weights stacked per direction.

    Returns:
      y      : (S, Bp, 2*Hp)  fwd half at lanes [0,Hp), bwd half at [Hp,2Hp)
      h_last : (2, Bp, Hp)    final hidden state per direction
    """
    S, Bp, Dp = x_pad.shape
    Hp = w_hh_t.shape[1]
    G = 4 * Hp
    y, h_last = pl.pallas_call(
        _bilstm_layer_kernel,
        out_shape=(
            jax.ShapeDtypeStruct((S, Bp, 2 * Hp), jnp.float32),
            jax.ShapeDtypeStruct((2, Bp, Hp), jnp.float32),
        ),
        grid_spec=pltpu.PrefetchScalarGridSpec(
            num_scalar_prefetch=0,
            grid=(2,),  # direction: 0 = forward, 1 = backward
            in_specs=[
                # x: same block both steps -> Pallas skips the second DMA.
                pl.BlockSpec((S, Bp, Dp), lambda d: (0, 0, 0)),
                pl.BlockSpec((None, Dp, G), lambda d: (d, 0, 0)),
                pl.BlockSpec((None, Hp, G), lambda d: (d, 0, 0)),
                pl.BlockSpec((None, 1, G), lambda d: (d, 0, 0)),
            ],
            out_specs=(
                # each direction writes its own 128-lane half of y
                pl.BlockSpec((S, Bp, Hp), lambda d: (0, 0, d)),
                pl.BlockSpec((None, Bp, Hp), lambda d: (d, 0, 0)),
            ),
            scratch_shapes=[pltpu.VMEM((S, Bp, G), jnp.float32)],
        ),
        compiler_params=pltpu.CompilerParams(
            dimension_semantics=("parallel",)),
    )(x_pad, w_ih_t, w_hh_t, bias)
    return y, h_last


# ----------------------------------------------------------------------------
# Parameter construction: PyTorch-style uniform init, then pad/transposed once
# into the TPU-friendly layout consumed by the kernel.
# ----------------------------------------------------------------------------
def _pad_gate_cols(w, H, Hp):
    """(..., 4H) -> (..., 4Hp); gate k real columns land at [k*Hp, k*Hp+H)."""
    parts = []
    for k in range(4):
        g = w[..., k * H:(k + 1) * H]
        pad = [(0, 0)] * (w.ndim - 1) + [(0, Hp - H)]
        parts.append(jnp.pad(g, pad))
    return jnp.concatenate(parts, axis=-1)


def _pad_direction(raw, layer, H, Hp, E, Ep):
    w_ih_t = _pad_gate_cols(raw["w_ih"].T.astype(jnp.float32), H, Hp)  # (Din,4Hp)
    w_hh_t = _pad_gate_cols(raw["w_hh"].T.astype(jnp.float32), H, Hp)  # (H,4Hp)
    b = _pad_gate_cols((raw["b_ih"] + raw["b_hh"]).astype(jnp.float32)[None, :],
                       H, Hp)                                          # (1,4Hp)
    if layer == 0:
        w_ih_p = jnp.zeros((Ep, 4 * Hp), jnp.float32).at[:E].set(w_ih_t)
    else:
        # layer>0 input is the padded concat [fw | bw] of width 2*Hp:
        # real fw features at rows [0,H), real bw features at rows [Hp,Hp+H).
        w_ih_p = jnp.zeros((2 * Hp, 4 * Hp), jnp.float32)
        w_ih_p = w_ih_p.at[0:H].set(w_ih_t[0:H])
        w_ih_p = w_ih_p.at[Hp:Hp + H].set(w_ih_t[H:2 * H])
    w_hh_p = jnp.zeros((Hp, 4 * Hp), jnp.float32).at[:H].set(w_hh_t)
    return w_ih_p, w_hh_p, b


def init_params(key, vocab_size, embed_dim, hidden_size, num_layers):
    H = hidden_size
    Hp = _round_up(H, 128)
    Ep = _round_up(embed_dim, 128)

    params = {}
    key, k_emb = jax.random.split(key)
    params["emb_table"] = jax.random.normal(
        k_emb, (vocab_size, embed_dim), jnp.float32) * 0.02

    bound = 1.0 / float(hidden_size) ** 0.5
    layers = []
    for layer in range(num_layers):
        d_in = embed_dim if layer == 0 else 2 * hidden_size
        padded_dirs = []
        for _ in range(2):  # forward, backward
            key, k1, k2, k3, k4 = jax.random.split(key, 5)
            raw = {
                "w_ih": jax.random.uniform(k1, (4 * H, d_in),
                                           jnp.float32, -bound, bound),
                "w_hh": jax.random.uniform(k2, (4 * H, H),
                                           jnp.float32, -bound, bound),
                "b_ih": jax.random.uniform(k3, (4 * H,),
                                           jnp.float32, -bound, bound),
                "b_hh": jax.random.uniform(k4, (4 * H,),
                                           jnp.float32, -bound, bound),
            }
            padded_dirs.append(_pad_direction(raw, layer, H, Hp, embed_dim, Ep))
        layers.append({
            "w_ih": jnp.stack([padded_dirs[0][0], padded_dirs[1][0]]),  # (2,Dp,4Hp)
            "w_hh": jnp.stack([padded_dirs[0][1], padded_dirs[1][1]]),  # (2,Hp,4Hp)
            "b":    jnp.stack([padded_dirs[0][2], padded_dirs[1][2]]),  # (2,1,4Hp)
        })
    params["lstm"] = layers
    return params


# ----------------------------------------------------------------------------
# Full forward pass (matches base_network.forward semantics)
# ----------------------------------------------------------------------------
@functools.partial(jax.jit, static_argnames=("num_layers", "hidden_size"))
def base_network_forward(token_ids, params, num_layers, hidden_size):
    # "BERT" embedding stand-in: (B, S) int32 -> (B, S, E) f32 last_hidden_state
    emb = jnp.take(params["emb_table"], token_ids, axis=0)      # (B, S, E)
    B, S, E = emb.shape
    H = hidden_size
    Bp = _round_up(B, 8)
    Ep = params["lstm"][0]["w_ih"].shape[1]                     # padded layer-0 D_in

    # Sequence-major + pad once; stays padded (S, Bp, *) across all layers.
    x = jnp.transpose(emb, (1, 0, 2)).astype(jnp.float32)       # (S, B, E)
    x = jnp.pad(x, ((0, 0), (0, Bp - B), (0, Ep - E)))

    h_last = None
    for layer in range(num_layers):
        lp = params["lstm"][layer]
        # One fused bidirectional kernel per layer; its (S, Bp, 2Hp) output is
        # already the next layer's input layout (no transpose/concat/reverse).
        # (Inter-layer dropout is identity at inference.)
        x, h_last = run_bilstm_layer(x, lp["w_ih"], lp["w_hh"], lp["b"])

    # torch.permute(h_n[-2:], (1,0,2)).reshape(B, -1)
    #   == concat([h_fw_lastlayer, h_bw_lastlayer], axis=-1)  -> (B, 2H)
    out = jnp.concatenate([h_last[0, :B, :H], h_last[1, :B, :H]], axis=-1)
    return out


# ----------------------------------------------------------------------------
if __name__ == "__main__":
    B, S = 2, 8          # batch, sequence length (token ids)
    VOCAB = 64
    EMBED = 32           # stand-in for bert hidden_size
    HIDDEN = 32
    NUM_LAYERS = 2       # bidirectional LSTM

    key = jax.random.PRNGKey(0)
    key, k_tok = jax.random.split(key)
    token_ids = jax.random.randint(k_tok, (B, S), 0, VOCAB, dtype=jnp.int32)

    params = init_params(key, VOCAB, EMBED, HIDDEN, NUM_LAYERS)

    out = base_network_forward(token_ids, params,
                               num_layers=NUM_LAYERS, hidden_size=HIDDEN)
    out = jax.block_until_ready(out)
    assert out.shape == (B, 2 * HIDDEN), out.shape
    print("KERNEL_OK")
</pallas_src>

<mosaic_0001>
module attributes {stable_mosaic.version = 11 : i64} {
  func.func @_bilstm_layer_kernel(%arg0: i32, %arg1: memref<8x8x128xf32, #tpu.memory_space<vmem>>, %arg2: memref<1x128x512xf32, #tpu.memory_space<vmem>>, %arg3: memref<1x128x512xf32, #tpu.memory_space<vmem>>, %arg4: memref<1x1x512xf32, #tpu.memory_space<vmem>>, %arg5: memref<8x8x128xf32, #tpu.memory_space<vmem>>, %arg6: memref<1x8x128xf32, #tpu.memory_space<vmem>>, %arg7: memref<8x8x512xf32, #tpu.memory_space<vmem>>) attributes {dimension_semantics = [#tpu.dimension_semantics<parallel>], iteration_bounds = array<i64: 2>, scalar_prefetch = 0 : i64, scratch_operands = 1 : i64, tpu.core_type = #tpu.core_type<tc>, window_params = [{pipeline_mode = #tpu.pipeline_mode<synchronous>, transform_indices = @transform_0, window_bounds = array<i64: 8, 8, 128>}, {transform_indices = @transform_1, window_bounds = array<i64: 1, 128, 512>}, {transform_indices = @transform_2, window_bounds = array<i64: 1, 128, 512>}, {transform_indices = @transform_3, window_bounds = array<i64: 1, 1, 512>}, {transform_indices = @transform_4, window_bounds = array<i64: 8, 8, 128>}, {transform_indices = @transform_5, window_bounds = array<i64: 1, 8, 128>}]} {
    %c0 = arith.constant 0 : index
    %c0_0 = arith.constant 0 : index
    %c0_1 = arith.constant 0 : index
    %0 = vector.load %arg1[%c0, %c0_0, %c0_1] : memref<8x8x128xf32, #tpu.memory_space<vmem>>, vector<8x8x128xf32>
    %1 = vector.shape_cast %0 : vector<8x8x128xf32> to vector<64x128xf32>
    %c0_2 = arith.constant 0 : index
    %c0_3 = arith.constant 0 : index
    %c0_4 = arith.constant 0 : index
    %2 = vector.load %arg2[%c0_2, %c0_3, %c0_4] : memref<1x128x512xf32, #tpu.memory_space<vmem>>, vector<1x128x512xf32>
    %3 = vector.shape_cast %2 : vector<1x128x512xf32> to vector<128x512xf32>
    %cst = arith.constant dense<0.000000e+00> : vector<64x512xf32>
    %4 = tpu.matmul %1, %3, %cst {dimension_numbers = #tpu.dot_dimension_numbers<[1], [0], [0], [1], [0, 0, 1, 1], [], []>} : vector<64x128xf32>, vector<128x512xf32>, vector<64x512xf32> -> vector<64x512xf32>
    %c0_5 = arith.constant 0 : index
    %c0_6 = arith.constant 0 : index
    %c0_7 = arith.constant 0 : index
    %5 = vector.load %arg4[%c0_5, %c0_6, %c0_7] : memref<1x1x512xf32, #tpu.memory_space<vmem>>, vector<1x1x512xf32>
    %6 = vector.shape_cast %5 : vector<1x1x512xf32> to vector<1x512xf32>
    %7 = vector.broadcast %6 : vector<1x512xf32> to vector<64x512xf32>
    %8 = arith.addf %4, %7 : vector<64x512xf32>
    %9 = vector.shape_cast %8 : vector<64x512xf32> to vector<8x8x512xf32>
    %c0_8 = arith.constant 0 : index
    %c0_9 = arith.constant 0 : index
    %c0_10 = arith.constant 0 : index
    %10 = vector.load %arg7[%c0_8, %c0_9, %c0_10] : memref<8x8x512xf32, #tpu.memory_space<vmem>>, vector<8x8x512xf32>
    tpu.vector_store %arg7[%c0_8, %c0_9, %c0_10], %9 {strides = array<i32>} : memref<8x8x512xf32, #tpu.memory_space<vmem>>, vector<8x8x512xf32>,
    %c0_11 = arith.constant 0 : index
    %c0_12 = arith.constant 0 : index
    %c0_13 = arith.constant 0 : index
    %11 = vector.load %arg3[%c0_11, %c0_12, %c0_13] : memref<1x128x512xf32, #tpu.memory_space<vmem>>, vector<1x128x512xf32>
    %12 = vector.shape_cast %11 : vector<1x128x512xf32> to vector<128x512xf32>
    %cst_14 = arith.constant 0.000000e+00 : f32
    %13 = vector.broadcast %cst_14 : f32 to vector<8x128xf32>
    %cst_15 = arith.constant 0.000000e+00 : f32
    %14 = vector.broadcast %cst_15 : f32 to vector<8x128xf32>
    %c0_i32 = arith.constant 0 : i32
    %c0_i32_16 = arith.constant 0 : i32
    %15 = arith.cmpi eq, %arg0, %c0_i32_16 : i32
    %c7_i32 = arith.constant 7 : i32
    %16 = arith.subi %c7_i32, %c0_i32 : i32
    %17 = arith.select %15, %c0_i32, %16 : i32
    %18 = arith.index_cast %17 : i32 to index
    %c0_17 = arith.constant 0 : index
    %c0_18 = arith.constant 0 : index
    %19 = vector.load %arg7[%18, %c0_17, %c0_18] : memref<8x8x512xf32, #tpu.memory_space<vmem>>, vector<1x8x512xf32>
    %20 = vector.shape_cast %19 : vector<1x8x512xf32> to vector<8x512xf32>
    %cst_19 = arith.constant dense<0.000000e+00> : vector<8x512xf32>
    %21 = tpu.matmul %13, %12, %cst_19 {dimension_numbers = #tpu.dot_dimension_numbers<[1], [0], [0], [1], [0, 0, 1, 1], [], []>} : vector<8x128xf32>, vector<128x512xf32>, vector<8x512xf32> -> vector<8x512xf32>
    %22 = arith.addf %20, %21 : vector<8x512xf32>
    %23 = vector.extract_strided_slice %22 {offsets = [0, 0], sizes = [8, 128], strides = [1, 1]} : vector<8x512xf32> to vector<8x128xf32>
    %24 = arith.negf %23 : vector<8x128xf32>
    %25 = math.exp %24 : vector<8x128xf32>
    %cst_20 = arith.constant 1.000000e+00 : f32
    %26 = vector.broadcast %cst_20 : f32 to vector<8x128xf32>
    %27 = arith.addf %26, %25 : vector<8x128xf32>
    %28 = arith.divf %26, %27 : vector<8x128xf32>
    %29 = vector.extract_strided_slice %22 {offsets = [0, 128], sizes = [8, 128], strides = [1, 1]} : vector<8x512xf32> to vector<8x128xf32>
    %30 = arith.negf %29 : vector<8x128xf32>
    %31 = math.exp %30 : vector<8x128xf32>
    %cst_21 = arith.constant 1.000000e+00 : f32
    %32 = vector.broadcast %cst_21 : f32 to vector<8x128xf32>
    %33 = arith.addf %32, %31 : vector<8x128xf32>
    %34 = arith.divf %32, %33 : vector<8x128xf32>
    %35 = vector.extract_strided_slice %22 {offsets = [0, 256], sizes = [8, 128], strides = [1, 1]} : vector<8x512xf32> to vector<8x128xf32>
    %36 = math.tanh %35 : vector<8x128xf32>
    %37 = vector.extract_strided_slice %22 {offsets = [0, 384], sizes = [8, 128], strides = [1, 1]} : vector<8x512xf32> to vector<8x128xf32>
    %38 = arith.negf %37 : vector<8x128xf32>
    %39 = math.exp %38 : vector<8x128xf32>
    %cst_22 = arith.constant 1.000000e+00 : f32
    %40 = vector.broadcast %cst_22 : f32 to vector<8x128xf32>
    %41 = arith.addf %40, %39 : vector<8x128xf32>
    %42 = arith.divf %40, %41 : vector<8x128xf32>
    %43 = arith.mulf %34, %14 : vector<8x128xf32>
    %44 = arith.mulf %28, %36 : vector<8x128xf32>
    %45 = arith.addf %43, %44 : vector<8x128xf32>
    %46 = math.tanh %45 : vector<8x128xf32>
    %47 = arith.mulf %42, %46 : vector<8x128xf32>
    %48 = arith.index_cast %17 : i32 to index
    %c0_23 = arith.constant 0 : index
    %c0_24 = arith.constant 0 : index
    %49 = vector.load %arg5[%48, %c0_23, %c0_24] : memref<8x8x128xf32, #tpu.memory_space<vmem>>, vector<1x8x128xf32>
    %50 = vector.shape_cast %49 : vector<1x8x128xf32> to vector<8x128xf32>
    %51 = vector.shape_cast %47 : vector<8x128xf32> to vector<1x8x128xf32>
    tpu.vector_store %arg5[%48, %c0_23, %c0_24], %51 {strides = array<i32>} : memref<8x8x128xf32, #tpu.memory_space<vmem>>, vector<1x8x128xf32>,
    %c1_i32 = arith.constant 1 : i32
    %c0_i32_25 = arith.constant 0 : i32
    %52 = arith.cmpi eq, %arg0, %c0_i32_25 : i32
    %c7_i32_26 = arith.constant 7 : i32
    %53 = arith.subi %c7_i32_26, %c1_i32 : i32
    %54 = arith.select %52, %c1_i32, %53 : i32
    %55 = arith.index_cast %54 : i32 to index
    %c0_27 = arith.constant 0 : index
    %c0_28 = arith.constant 0 : index
    %56 = vector.load %arg7[%55, %c0_27, %c0_28] : memref<8x8x512xf32, #tpu.memory_space<vmem>>, vector<1x8x512xf32>
    %57 = vector.shape_cast %56 : vector<1x8x512xf32> to vector<8x512xf32>
    %cst_29 = arith.constant dense<0.000000e+00> : vector<8x512xf32>
    %58 = tpu.matmul %47, %12, %cst_29 {dimension_numbers = #tpu.dot_dimension_numbers<[1], [0], [0], [1], [0, 0, 1, 1], [], []>} : vector<8x128xf32>, vector<128x512xf32>, vector<8x512xf32> -> vector<8x512xf32>
    %59 = arith.addf %57, %58 : vector<8x512xf32>
    %60 = vector.extract_strided_slice %59 {offsets = [0, 0], sizes = [8, 128], strides = [1, 1]} : vector<8x512xf32> to vector<8x128xf32>
    %61 = arith.negf %60 : vector<8x128xf32>
    %62 = math.exp %61 : vector<8x128xf32>
    %cst_30 = arith.constant 1.000000e+00 : f32
    %63 = vector.broadcast %cst_30 : f32 to vector<8x128xf32>
    %64 = arith.addf %63, %62 : vector<8x128xf32>
    %65 = arith.divf %63, %64 : vector<8x128xf32>
    %66 = vector.extract_strided_slice %59 {offsets = [0, 128], sizes = [8, 128], strides = [1, 1]} : vector<8x512xf32> to vector<8x128xf32>
    %67 = arith.negf %66 : vector<8x128xf32>
    %68 = math.exp %67 : vector<8x128xf32>
    %cst_31 = arith.constant 1.000000e+00 : f32
    %69 = vector.broadcast %cst_31 : f32 to vector<8x128xf32>
    %70 = arith.addf %69, %68 : vector<8x128xf32>
    %71 = arith.divf %69, %70 : vector<8x128xf32>
    %72 = vector.extract_strided_slice %59 {offsets = [0, 256], sizes = [8, 128], strides = [1, 1]} : vector<8x512xf32> to vector<8x128xf32>
    %73 = math.tanh %72 : vector<8x128xf32>
    %74 = vector.extract_strided_slice %59 {offsets = [0, 384], sizes = [8, 128], strides = [1, 1]} : vector<8x512xf32> to vector<8x128xf32>
    %75 = arith.negf %74 : vector<8x128xf32>
    %76 = math.exp %75 : vector<8x128xf32>
    %cst_32 = arith.constant 1.000000e+00 : f32
    %77 = vector.broadcast %cst_32 : f32 to vector<8x128xf32>
    %78 = arith.addf %77, %76 : vector<8x128xf32>
    %79 = arith.divf %77, %78 : vector<8x128xf32>
    %80 = arith.mulf %71, %45 : vector<8x128xf32>
    %81 = arith.mulf %65, %73 : vector<8x128xf32>
    %82 = arith.addf %80, %81 : vector<8x128xf32>
    %83 = math.tanh %82 : vector<8x128xf32>
    %84 = arith.mulf %79, %83 : vector<8x128xf32>
    %85 = arith.index_cast %54 : i32 to index
    %c0_33 = arith.constant 0 : index
    %c0_34 = arith.constant 0 : index
    %86 = vector.load %arg5[%85, %c0_33, %c0_34] : memref<8x8x128xf32, #tpu.memory_space<vmem>>, vector<1x8x128xf32>
    %87 = vector.shape_cast %86 : vector<1x8x128xf32> to vector<8x128xf32>
    %88 = vector.shape_cast %84 : vector<8x128xf32> to vector<1x8x128xf32>
    tpu.vector_store %arg5[%85, %c0_33, %c0_34], %88 {strides = array<i32>} : memref<8x8x128xf32, #tpu.memory_space<vmem>>, vector<1x8x128xf32>,
    %c2_i32 = arith.constant 2 : i32
    %c0_i32_35 = arith.constant 0 : i32
    %89 = arith.cmpi eq, %arg0, %c0_i32_35 : i32
    %c7_i32_36 = arith.constant 7 : i32
    %90 = arith.subi %c7_i32_36, %c2_i32 : i32
    %91 = arith.select %89, %c2_i32, %90 : i32
    %92 = arith.index_cast %91 : i32 to index
    %c0_37 = arith.constant 0 : index
    %c0_38 = arith.constant 0 : index
    %93 = vector.load %arg7[%92, %c0_37, %c0_38] : memref<8x8x512xf32, #tpu.memory_space<vmem>>, vector<1x8x512xf32>
    %94 = vector.shape_cast %93 : vector<1x8x512xf32> to vector<8x512xf32>
    %cst_39 = arith.constant dense<0.000000e+00> : vector<8x512xf32>
    %95 = tpu.matmul %84, %12, %cst_39 {dimension_numbers = #tpu.dot_dimension_numbers<[1], [0], [0], [1], [0, 0, 1, 1], [], []>} : vector<8x128xf32>, vector<128x512xf32>, vector<8x512xf32> -> vector<8x512xf32>
    %96 = arith.addf %94, %95 : vector<8x512xf32>
    %97 = vector.extract_strided_slice %96 {offsets = [0, 0], sizes = [8, 128], strides = [1, 1]} : vector<8x512xf32> to vector<8x128xf32>
    %98 = arith.negf %97 : vector<8x128xf32>
    %99 = math.exp %98 : vector<8x128xf32>
    %cst_40 = arith.constant 1.000000e+00 : f32
    %100 = vector.broadcast %cst_40 : f32 to vector<8x128xf32>
    %101 = arith.addf %100, %99 : vector<8x128xf32>
    %102 = arith.divf %100, %101 : vector<8x128xf32>
    %103 = vector.extract_strided_slice %96 {offsets = [0, 128], sizes = [8, 128], strides = [1, 1]} : vector<8x512xf32> to vector<8x128xf32>
    %104 = arith.negf %103 : vector<8x128xf32>
    %105 = math.exp %104 : vector<8x128xf32>
    %cst_41 = arith.constant 1.000000e+00 : f32
    %106 = vector.broadcast %cst_41 : f32 to vector<8x128xf32>
    %107 = arith.addf %106, %105 : vector<8x128xf32>
    %108 = arith.divf %106, %107 : vector<8x128xf32>
    %109 = vector.extract_strided_slice %96 {offsets = [0, 256], sizes = [8, 128], strides = [1, 1]} : vector<8x512xf32> to vector<8x128xf32>
    %110 = math.tanh %109 : vector<8x128xf32>
    %111 = vector.extract_strided_slice %96 {offsets = [0, 384], sizes = [8, 128], strides = [1, 1]} : vector<8x512xf32> to vector<8x128xf32>
    %112 = arith.negf %111 : vector<8x128xf32>
    %113 = math.exp %112 : vector<8x128xf32>
    %cst_42 = arith.constant 1.000000e+00 : f32
    %114 = vector.broadcast %cst_42 : f32 to vector<8x128xf32>
    %115 = arith.addf %114, %113 : vector<8x128xf32>
    %116 = arith.divf %114, %115 : vector<8x128xf32>
    %117 = arith.mulf %108, %82 : vector<8x128xf32>
    %118 = arith.mulf %102, %110 : vector<8x128xf32>
    %119 = arith.addf %117, %118 : vector<8x128xf32>
    %120 = math.tanh %119 : vector<8x128xf32>
    %121 = arith.mulf %116, %120 : vector<8x128xf32>
    %122 = arith.index_cast %91 : i32 to index
    %c0_43 = arith.constant 0 : index
    %c0_44 = arith.constant 0 : index
    %123 = vector.load %arg5[%122, %c0_43, %c0_44] : memref<8x8x128xf32, #tpu.memory_space<vmem>>, vector<1x8x128xf32>
    %124 = vector.shape_cast %123 : vector<1x8x128xf32> to vector<8x128xf32>
    %125 = vector.shape_cast %121 : vector<8x128xf32> to vector<1x8x128xf32>
    tpu.vector_store %arg5[%122, %c0_43, %c0_44], %125 {strides = array<i32>} : memref<8x8x128xf32, #tpu.memory_space<vmem>>, vector<1x8x128xf32>,
    %c3_i32 = arith.constant 3 : i32
    %c0_i32_45 = arith.constant 0 : i32
    %126 = arith.cmpi eq, %arg0, %c0_i32_45 : i32
    %c7_i32_46 = arith.constant 7 : i32
    %127 = arith.subi %c7_i32_46, %c3_i32 : i32
    %128 = arith.select %126, %c3_i32, %127 : i32
    %129 = arith.index_cast %128 : i32 to index
    %c0_47 = arith.constant 0 : index
    %c0_48 = arith.constant 0 : index
    %130 = vector.load %arg7[%129, %c0_47, %c0_48] : memref<8x8x512xf32, #tpu.memory_space<vmem>>, vector<1x8x512xf32>
    %131 = vector.shape_cast %130 : vector<1x8x512xf32> to vector<8x512xf32>
    %cst_49 = arith.constant dense<0.000000e+00> : vector<8x512xf32>
    %132 = tpu.matmul %121, %12, %cst_49 {dimension_numbers = #tpu.dot_dimension_numbers<[1], [0], [0], [1], [0, 0, 1, 1], [], []>} : vector<8x128xf32>, vector<128x512xf32>, vector<8x512xf32> -> vector<8x512xf32>
    %133 = arith.addf %131, %132 : vector<8x512xf32>
    %134 = vector.extract_strided_slice %133 {offsets = [0, 0], sizes = [8, 128], strides = [1, 1]} : vector<8x512xf32> to vector<8x128xf32>
    %135 = arith.negf %134 : vector<8x128xf32>
    %136 = math.exp %135 : vector<8x128xf32>
    %cst_50 = arith.constant 1.000000e+00 : f32
    %137 = vector.broadcast %cst_50 : f32 to vector<8x128xf32>
    %138 = arith.addf %137, %136 : vector<8x128xf32>
    %139 = arith.divf %137, %138 : vector<8x128xf32>
    %140 = vector.extract_strided_slice %133 {offsets = [0, 128], sizes = [8, 128], strides = [1, 1]} : vector<8x512xf32> to vector<8x128xf32>
    %141 = arith.negf %140 : vector<8x128xf32>
    %142 = math.exp %141 : vector<8x128xf32>
    %cst_51 = arith.constant 1.000000e+00 : f32
    %143 = vector.broadcast %cst_51 : f32 to vector<8x128xf32>
    %144 = arith.addf %143, %142 : vector<8x128xf32>
    %145 = arith.divf %143, %144 : vector<8x128xf32>
    %146 = vector.extract_strided_slice %133 {offsets = [0, 256], sizes = [8, 128], strides = [1, 1]} : vector<8x512xf32> to vector<8x128xf32>
    %147 = math.tanh %146 : vector<8x128xf32>
    %148 = vector.extract_strided_slice %133 {offsets = [0, 384], sizes = [8, 128], strides = [1, 1]} : vector<8x512xf32> to vector<8x128xf32>
    %149 = arith.negf %148 : vector<8x128xf32>
    %150 = math.exp %149 : vector<8x128xf32>
    %cst_52 = arith.constant 1.000000e+00 : f32
    %151 = vector.broadcast %cst_52 : f32 to vector<8x128xf32>
    %152 = arith.addf %151, %150 : vector<8x128xf32>
    %153 = arith.divf %151, %152 : vector<8x128xf32>
    %154 = arith.mulf %145, %119 : vector<8x128xf32>
    %155 = arith.mulf %139, %147 : vector<8x128xf32>
    %156 = arith.addf %154, %155 : vector<8x128xf32>
    %157 = math.tanh %156 : vector<8x128xf32>
    %158 = arith.mulf %153, %157 : vector<8x128xf32>
    %159 = arith.index_cast %128 : i32 to index
    %c0_53 = arith.constant 0 : index
    %c0_54 = arith.constant 0 : index
    %160 = vector.load %arg5[%159, %c0_53, %c0_54] : memref<8x8x128xf32, #tpu.memory_space<vmem>>, vector<1x8x128xf32>
    %161 = vector.shape_cast %160 : vector<1x8x128xf32> to vector<8x128xf32>
    %162 = vector.shape_cast %158 : vector<8x128xf32> to vector<1x8x128xf32>
    tpu.vector_store %arg5[%159, %c0_53, %c0_54], %162 {strides = array<i32>} : memref<8x8x128xf32, #tpu.memory_space<vmem>>, vector<1x8x128xf32>,
    %c4_i32 = arith.constant 4 : i32
    %c0_i32_55 = arith.constant 0 : i32
    %163 = arith.cmpi eq, %arg0, %c0_i32_55 : i32
    %c7_i32_56 = arith.constant 7 : i32
    %164 = arith.subi %c7_i32_56, %c4_i32 : i32
    %165 = arith.select %163, %c4_i32, %164 : i32
    %166 = arith.index_cast %165 : i32 to index
    %c0_57 = arith.constant 0 : index
    %c0_58 = arith.constant 0 : index
    %167 = vector.load %arg7[%166, %c0_57, %c0_58] : memref<8x8x512xf32, #tpu.memory_space<vmem>>, vector<1x8x512xf32>
    %168 = vector.shape_cast %167 : vector<1x8x512xf32> to vector<8x512xf32>
    %cst_59 = arith.constant dense<0.000000e+00> : vector<8x512xf32>
    %169 = tpu.matmul %158, %12, %cst_59 {dimension_numbers = #tpu.dot_dimension_numbers<[1], [0], [0], [1], [0, 0, 1, 1], [], []>} : vector<8x128xf32>, vector<128x512xf32>, vector<8x512xf32> -> vector<8x512xf32>
    %170 = arith.addf %168, %169 : vector<8x512xf32>
    %171 = vector.extract_strided_slice %170 {offsets = [0, 0], sizes = [8, 128], strides = [1, 1]} : vector<8x512xf32> to vector<8x128xf32>
    %172 = arith.negf %171 : vector<8x128xf32>
    %173 = math.exp %172 : vector<8x128xf32>
    %cst_60 = arith.constant 1.000000e+00 : f32
    %174 = vector.broadcast %cst_60 : f32 to vector<8x128xf32>
    %175 = arith.addf %174, %173 : vector<8x128xf32>
    %176 = arith.divf %174, %175 : vector<8x128xf32>
    %177 = vector.extract_strided_slice %170 {offsets = [0, 128], sizes = [8, 128], strides = [1, 1]} : vector<8x512xf32> to vector<8x128xf32>
    %178 = arith.negf %177 : vector<8x128xf32>
    %179 = math.exp %178 : vector<8x128xf32>
    %cst_61 = arith.constant 1.000000e+00 : f32
    %180 = vector.broadcast %cst_61 : f32 to vector<8x128xf32>
    %181 = arith.addf %180, %179 : vector<8x128xf32>
    %182 = arith.divf %180, %181 : vector<8x128xf32>
    %183 = vector.extract_strided_slice %170 {offsets = [0, 256], sizes = [8, 128], strides = [1, 1]} : vector<8x512xf32> to vector<8x128xf32>
    %184 = math.tanh %183 : vector<8x128xf32>
    %185 = vector.extract_strided_slice %170 {offsets = [0, 384], sizes = [8, 128], strides = [1, 1]} : vector<8x512xf32> to vector<8x128xf32>
    %186 = arith.negf %185 : vector<8x128xf32>
    %187 = math.exp %186 : vector<8x128xf32>
    %cst_62 = arith.constant 1.000000e+00 : f32
    %188 = vector.broadcast %cst_62 : f32 to vector<8x128xf32>
    %189 = arith.addf %188, %187 : vector<8x128xf32>
    %190 = arith.divf %188, %189 : vector<8x128xf32>
    %191 = arith.mulf %182, %156 : vector<8x128xf32>
    %192 = arith.mulf %176, %184 : vector<8x128xf32>
    %193 = arith.addf %191, %192 : vector<8x128xf32>
    %194 = math.tanh %193 : vector<8x128xf32>
    %195 = arith.mulf %190, %194 : vector<8x128xf32>
    %196 = arith.index_cast %165 : i32 to index
    %c0_63 = arith.constant 0 : index
    %c0_64 = arith.constant 0 : index
    %197 = vector.load %arg5[%196, %c0_63, %c0_64] : memref<8x8x128xf32, #tpu.memory_space<vmem>>, vector<1x8x128xf32>
    %198 = vector.shape_cast %197 : vector<1x8x128xf32> to vector<8x128xf32>
    %199 = vector.shape_cast %195 : vector<8x128xf32> to vector<1x8x128xf32>
    tpu.vector_store %arg5[%196, %c0_63, %c0_64], %199 {strides = array<i32>} : memref<8x8x128xf32, #tpu.memory_space<vmem>>, vector<1x8x128xf32>,
    %c5_i32 = arith.constant 5 : i32
    %c0_i32_65 = arith.constant 0 : i32
    %200 = arith.cmpi eq, %arg0, %c0_i32_65 : i32
    %c7_i32_66 = arith.constant 7 : i32
    %201 = arith.subi %c7_i32_66, %c5_i32 : i32
    %202 = arith.select %200, %c5_i32, %201 : i32
    %203 = arith.index_cast %202 : i32 to index
    %c0_67 = arith.constant 0 : index
    %c0_68 = arith.constant 0 : index
    %204 = vector.load %arg7[%203, %c0_67, %c0_68] : memref<8x8x512xf32, #tpu.memory_space<vmem>>, vector<1x8x512xf32>
    %205 = vector.shape_cast %204 : vector<1x8x512xf32> to vector<8x512xf32>
    %cst_69 = arith.constant dense<0.000000e+00> : vector<8x512xf32>
    %206 = tpu.matmul %195, %12, %cst_69 {dimension_numbers = #tpu.dot_dimension_numbers<[1], [0], [0], [1], [0, 0, 1, 1], [], []>} : vector<8x128xf32>, vector<128x512xf32>, vector<8x512xf32> -> vector<8x512xf32>
    %207 = arith.addf %205, %206 : vector<8x512xf32>
    %208 = vector.extract_strided_slice %207 {offsets = [0, 0], sizes = [8, 128], strides = [1, 1]} : vector<8x512xf32> to vector<8x128xf32>
    %209 = arith.negf %208 : vector<8x128xf32>
    %210 = math.exp %209 : vector<8x128xf32>
    %cst_70 = arith.constant 1.000000e+00 : f32
    %211 = vector.broadcast %cst_70 : f32 to vector<8x128xf32>
    %212 = arith.addf %211, %210 : vector<8x128xf32>
    %213 = arith.divf %211, %212 : vector<8x128xf32>
    %214 = vector.extract_strided_slice %207 {offsets = [0, 128], sizes = [8, 128], strides = [1, 1]} : vector<8x512xf32> to vector<8x128xf32>
    %215 = arith.negf %214 : vector<8x128xf32>
    %216 = math.exp %215 : vector<8x128xf32>
    %cst_71 = arith.constant 1.000000e+00 : f32
    %217 = vector.broadcast %cst_71 : f32 to vector<8x128xf32>
    %218 = arith.addf %217, %216 : vector<8x128xf32>
    %219 = arith.divf %217, %218 : vector<8x128xf32>
    %220 = vector.extract_strided_slice %207 {offsets = [0, 256], sizes = [8, 128], strides = [1, 1]} : vector<8x512xf32> to vector<8x128xf32>
    %221 = math.tanh %220 : vector<8x128xf32>
    %222 = vector.extract_strided_slice %207 {offsets = [0, 384], sizes = [8, 128], strides = [1, 1]} : vector<8x512xf32> to vector<8x128xf32>
    %223 = arith.negf %222 : vector<8x128xf32>
    %224 = math.exp %223 : vector<8x128xf32>
    %cst_72 = arith.constant 1.000000e+00 : f32
    %225 = vector.broadcast %cst_72 : f32 to vector<8x128xf32>
    %226 = arith.addf %225, %224 : vector<8x128xf32>
    %227 = arith.divf %225, %226 : vector<8x128xf32>
    %228 = arith.mulf %219, %193 : vector<8x128xf32>
    %229 = arith.mulf %213, %221 : vector<8x128xf32>
    %230 = arith.addf %228, %229 : vector<8x128xf32>
    %231 = math.tanh %230 : vector<8x128xf32>
    %232 = arith.mulf %227, %231 : vector<8x128xf32>
    %233 = arith.index_cast %202 : i32 to index
    %c0_73 = arith.constant 0 : index
    %c0_74 = arith.constant 0 : index
    %234 = vector.load %arg5[%233, %c0_73, %c0_74] : memref<8x8x128xf32, #tpu.memory_space<vmem>>, vector<1x8x128xf32>
    %235 = vector.shape_cast %234 : vector<1x8x128xf32> to vector<8x128xf32>
    %236 = vector.shape_cast %232 : vector<8x128xf32> to vector<1x8x128xf32>
    tpu.vector_store %arg5[%233, %c0_73, %c0_74], %236 {strides = array<i32>} : memref<8x8x128xf32, #tpu.memory_space<vmem>>, vector<1x8x128xf32>,
    %c6_i32 = arith.constant 6 : i32
    %c0_i32_75 = arith.constant 0 : i32
    %237 = arith.cmpi eq, %arg0, %c0_i32_75 : i32
    %c7_i32_76 = arith.constant 7 : i32
    %238 = arith.subi %c7_i32_76, %c6_i32 : i32
    %239 = arith.select %237, %c6_i32, %238 : i32
    %240 = arith.index_cast %239 : i32 to index
    %c0_77 = arith.constant 0 : index
    %c0_78 = arith.constant 0 : index
    %241 = vector.load %arg7[%240, %c0_77, %c0_78] : memref<8x8x512xf32, #tpu.memory_space<vmem>>, vector<1x8x512xf32>
    %242 = vector.shape_cast %241 : vector<1x8x512xf32> to vector<8x512xf32>
    %cst_79 = arith.constant dense<0.000000e+00> : vector<8x512xf32>
    %243 = tpu.matmul %232, %12, %cst_79 {dimension_numbers = #tpu.dot_dimension_numbers<[1], [0], [0], [1], [0, 0, 1, 1], [], []>} : vector<8x128xf32>, vector<128x512xf32>, vector<8x512xf32> -> vector<8x512xf32>
    %244 = arith.addf %242, %243 : vector<8x512xf32>
    %245 = vector.extract_strided_slice %244 {offsets = [0, 0], sizes = [8, 128], strides = [1, 1]} : vector<8x512xf32> to vector<8x128xf32>
    %246 = arith.negf %245 : vector<8x128xf32>
    %247 = math.exp %246 : vector<8x128xf32>
    %cst_80 = arith.constant 1.000000e+00 : f32
    %248 = vector.broadcast %cst_80 : f32 to vector<8x128xf32>
    %249 = arith.addf %248, %247 : vector<8x128xf32>
    %250 = arith.divf %248, %249 : vector<8x128xf32>
    %251 = vector.extract_strided_slice %244 {offsets = [0, 128], sizes = [8, 128], strides = [1, 1]} : vector<8x512xf32> to vector<8x128xf32>
    %252 = arith.negf %251 : vector<8x128xf32>
    %253 = math.exp %252 : vector<8x128xf32>
    %cst_81 = arith.constant 1.000000e+00 : f32
    %254 = vector.broadcast %cst_81 : f32 to vector<8x128xf32>
    %255 = arith.addf %254, %253 : vector<8x128xf32>
    %256 = arith.divf %254, %255 : vector<8x128xf32>
    %257 = vector.extract_strided_slice %244 {offsets = [0, 256], sizes = [8, 128], strides = [1, 1]} : vector<8x512xf32> to vector<8x128xf32>
    %258 = math.tanh %257 : vector<8x128xf32>
    %259 = vector.extract_strided_slice %244 {offsets = [0, 384], sizes = [8, 128], strides = [1, 1]} : vector<8x512xf32> to vector<8x128xf32>
    %260 = arith.negf %259 : vector<8x128xf32>
    %261 = math.exp %260 : vector<8x128xf32>
    %cst_82 = arith.constant 1.000000e+00 : f32
    %262 = vector.broadcast %cst_82 : f32 to vector<8x128xf32>
    %263 = arith.addf %262, %261 : vector<8x128xf32>
    %264 = arith.divf %262, %263 : vector<8x128xf32>
    %265 = arith.mulf %256, %230 : vector<8x128xf32>
    %266 = arith.mulf %250, %258 : vector<8x128xf32>
    %267 = arith.addf %265, %266 : vector<8x128xf32>
    %268 = math.tanh %267 : vector<8x128xf32>
    %269 = arith.mulf %264, %268 : vector<8x128xf32>
    %270 = arith.index_cast %239 : i32 to index
    %c0_83 = arith.constant 0 : index
    %c0_84 = arith.constant 0 : index
    %271 = vector.load %arg5[%270, %c0_83, %c0_84] : memref<8x8x128xf32, #tpu.memory_space<vmem>>, vector<1x8x128xf32>
    %272 = vector.shape_cast %271 : vector<1x8x128xf32> to vector<8x128xf32>
    %273 = vector.shape_cast %269 : vector<8x128xf32> to vector<1x8x128xf32>
    tpu.vector_store %arg5[%270, %c0_83, %c0_84], %273 {strides = array<i32>} : memref<8x8x128xf32, #tpu.memory_space<vmem>>, vector<1x8x128xf32>,
    %c7_i32_85 = arith.constant 7 : i32
    %c0_i32_86 = arith.constant 0 : i32
    %274 = arith.cmpi eq, %arg0, %c0_i32_86 : i32
    %c7_i32_87 = arith.constant 7 : i32
    %275 = arith.subi %c7_i32_87, %c7_i32_85 : i32
    %276 = arith.select %274, %c7_i32_85, %275 : i32
    %277 = arith.index_cast %276 : i32 to index
    %c0_88 = arith.constant 0 : index
    %c0_89 = arith.constant 0 : index
    %278 = vector.load %arg7[%277, %c0_88, %c0_89] : memref<8x8x512xf32, #tpu.memory_space<vmem>>, vector<1x8x512xf32>
    %279 = vector.shape_cast %278 : vector<1x8x512xf32> to vector<8x512xf32>
    %cst_90 = arith.constant dense<0.000000e+00> : vector<8x512xf32>
    %280 = tpu.matmul %269, %12, %cst_90 {dimension_numbers = #tpu.dot_dimension_numbers<[1], [0], [0], [1], [0, 0, 1, 1], [], []>} : vector<8x128xf32>, vector<128x512xf32>, vector<8x512xf32> -> vector<8x512xf32>
    %281 = arith.addf %279, %280 : vector<8x512xf32>
    %282 = vector.extract_strided_slice %281 {offsets = [0, 0], sizes = [8, 128], strides = [1, 1]} : vector<8x512xf32> to vector<8x128xf32>
    %283 = arith.negf %282 : vector<8x128xf32>
    %284 = math.exp %283 : vector<8x128xf32>
    %cst_91 = arith.constant 1.000000e+00 : f32
    %285 = vector.broadcast %cst_91 : f32 to vector<8x128xf32>
    %286 = arith.addf %285, %284 : vector<8x128xf32>
    %287 = arith.divf %285, %286 : vector<8x128xf32>
    %288 = vector.extract_strided_slice %281 {offsets = [0, 128], sizes = [8, 128], strides = [1, 1]} : vector<8x512xf32> to vector<8x128xf32>
    %289 = arith.negf %288 : vector<8x128xf32>
    %290 = math.exp %289 : vector<8x128xf32>
    %cst_92 = arith.constant 1.000000e+00 : f32
    %291 = vector.broadcast %cst_92 : f32 to vector<8x128xf32>
    %292 = arith.addf %291, %290 : vector<8x128xf32>
    %293 = arith.divf %291, %292 : vector<8x128xf32>
    %294 = vector.extract_strided_slice %281 {offsets = [0, 256], sizes = [8, 128], strides = [1, 1]} : vector<8x512xf32> to vector<8x128xf32>
    %295 = math.tanh %294 : vector<8x128xf32>
    %296 = vector.extract_strided_slice %281 {offsets = [0, 384], sizes = [8, 128], strides = [1, 1]} : vector<8x512xf32> to vector<8x128xf32>
    %297 = arith.negf %296 : vector<8x128xf32>
    %298 = math.exp %297 : vector<8x128xf32>
    %cst_93 = arith.constant 1.000000e+00 : f32
    %299 = vector.broadcast %cst_93 : f32 to vector<8x128xf32>
    %300 = arith.addf %299, %298 : vector<8x128xf32>
    %301 = arith.divf %299, %300 : vector<8x128xf32>
    %302 = arith.mulf %293, %267 : vector<8x128xf32>
    %303 = arith.mulf %287, %295 : vector<8x128xf32>
    %304 = arith.addf %302, %303 : vector<8x128xf32>
    %305 = math.tanh %304 : vector<8x128xf32>
    %306 = arith.mulf %301, %305 : vector<8x128xf32>
    %307 = arith.index_cast %276 : i32 to index
    %c0_94 = arith.constant 0 : index
    %c0_95 = arith.constant 0 : index
    %308 = vector.load %arg5[%307, %c0_94, %c0_95] : memref<8x8x128xf32, #tpu.memory_space<vmem>>, vector<1x8x128xf32>
    %309 = vector.shape_cast %308 : vector<1x8x128xf32> to vector<8x128xf32>
    %310 = vector.shape_cast %306 : vector<8x128xf32> to vector<1x8x128xf32>
    tpu.vector_store %arg5[%307, %c0_94, %c0_95], %310 {strides = array<i32>} : memref<8x8x128xf32, #tpu.memory_space<vmem>>, vector<1x8x128xf32>,
    %c8_i32 = arith.constant 8 : i32
    %c0_96 = arith.constant 0 : index
    %c0_97 = arith.constant 0 : index
    %c0_98 = arith.constant 0 : index
    %311 = vector.load %arg6[%c0_96, %c0_97, %c0_98] : memref<1x8x128xf32, #tpu.memory_space<vmem>>, vector<1x8x128xf32>
    %312 = vector.shape_cast %311 : vector<1x8x128xf32> to vector<8x128xf32>
    %313 = vector.shape_cast %306 : vector<8x128xf32> to vector<1x8x128xf32>
    tpu.vector_store %arg6[%c0_96, %c0_97, %c0_98], %313 {strides = array<i32>} : memref<1x8x128xf32, #tpu.memory_space<vmem>>, vector<1x8x128xf32>,
    return
  }
  func.func @transform_0(%arg0: i32) -> (i32, i32, i32) {
    %c0_i32 = arith.constant 0 : i32
    %c0_i32_0 = arith.constant 0 : i32
    %c0_i32_1 = arith.constant 0 : i32
    %c0_i32_2 = arith.constant 0 : i32
    return %c0_i32, %c0_i32_0, %c0_i32_1 : i32, i32, i32
  }
  func.func @transform_1(%arg0: i32) -> (i32, i32, i32) {
    %c0_i32 = arith.constant 0 : i32
    %c0_i32_0 = arith.constant 0 : i32
    %c0_i32_1 = arith.constant 0 : i32
    return %arg0, %c0_i32, %c0_i32_0 : i32, i32, i32
  }
  func.func @transform_2(%arg0: i32) -> (i32, i32, i32) {
    %c0_i32 = arith.constant 0 : i32
    %c0_i32_0 = arith.constant 0 : i32
    %c0_i32_1 = arith.constant 0 : i32
    return %arg0, %c0_i32, %c0_i32_0 : i32, i32, i32
  }
  func.func @transform_3(%arg0: i32) -> (i32, i32, i32) {
    %c0_i32 = arith.constant 0 : i32
    %c0_i32_0 = arith.constant 0 : i32
    %c0_i32_1 = arith.constant 0 : i32
    return %arg0, %c0_i32, %c0_i32_0 : i32, i32, i32
  }
  func.func @transform_4(%arg0: i32) -> (i32, i32, i32) {
    %c0_i32 = arith.constant 0 : i32
    %c0_i32_0 = arith.constant 0 : i32
    %c0_i32_1 = arith.constant 0 : i32
    return %c0_i32, %c0_i32_0, %arg0 : i32, i32, i32
  }
  func.func @transform_5(%arg0: i32) -> (i32, i32, i32) {
    %c0_i32 = arith.constant 0 : i32
    %c0_i32_0 = arith.constant 0 : i32
    %c0_i32_1 = arith.constant 0 : i32
    return %arg0, %c0_i32, %c0_i32_0 : i32, i32, i32
  }
}

module attributes {stable_mosaic.version = 11 : i64} {
  func.func @_bilstm_layer_kernel(%arg0: i32, %arg1: memref<8x8x256xf32, #tpu.memory_space<vmem>>, %arg2: memref<1x256x512xf32, #tpu.memory_space<vmem>>, %arg3: memref<1x128x512xf32, #tpu.memory_space<vmem>>, %arg4: memref<1x1x512xf32, #tpu.memory_space<vmem>>, %arg5: memref<8x8x128xf32, #tpu.memory_space<vmem>>, %arg6: memref<1x8x128xf32, #tpu.memory_space<vmem>>, %arg7: memref<8x8x512xf32, #tpu.memory_space<vmem>>) attributes {dimension_semantics = [#tpu.dimension_semantics<parallel>], iteration_bounds = array<i64: 2>, scalar_prefetch = 0 : i64, scratch_operands = 1 : i64, tpu.core_type = #tpu.core_type<tc>, window_params = [{pipeline_mode = #tpu.pipeline_mode<synchronous>, transform_indices = @transform_0, window_bounds = array<i64: 8, 8, 256>}, {transform_indices = @transform_1, window_bounds = array<i64: 1, 256, 512>}, {transform_indices = @transform_2, window_bounds = array<i64: 1, 128, 512>}, {transform_indices = @transform_3, window_bounds = array<i64: 1, 1, 512>}, {transform_indices = @transform_4, window_bounds = array<i64: 8, 8, 128>}, {transform_indices = @transform_5, window_bounds = array<i64: 1, 8, 128>}]} {
    %c0 = arith.constant 0 : index
    %c0_0 = arith.constant 0 : index
    %c0_1 = arith.constant 0 : index
    %0 = vector.load %arg1[%c0, %c0_0, %c0_1] : memref<8x8x256xf32, #tpu.memory_space<vmem>>, vector<8x8x256xf32>
    %1 = vector.shape_cast %0 : vector<8x8x256xf32> to vector<64x256xf32>
    %c0_2 = arith.constant 0 : index
    %c0_3 = arith.constant 0 : index
    %c0_4 = arith.constant 0 : index
    %2 = vector.load %arg2[%c0_2, %c0_3, %c0_4] : memref<1x256x512xf32, #tpu.memory_space<vmem>>, vector<1x256x512xf32>
    %3 = vector.shape_cast %2 : vector<1x256x512xf32> to vector<256x512xf32>
    %cst = arith.constant dense<0.000000e+00> : vector<64x512xf32>
    %4 = tpu.matmul %1, %3, %cst {dimension_numbers = #tpu.dot_dimension_numbers<[1], [0], [0], [1], [0, 0, 1, 1], [], []>} : vector<64x256xf32>, vector<256x512xf32>, vector<64x512xf32> -> vector<64x512xf32>
    %c0_5 = arith.constant 0 : index
    %c0_6 = arith.constant 0 : index
    %c0_7 = arith.constant 0 : index
    %5 = vector.load %arg4[%c0_5, %c0_6, %c0_7] : memref<1x1x512xf32, #tpu.memory_space<vmem>>, vector<1x1x512xf32>
    %6 = vector.shape_cast %5 : vector<1x1x512xf32> to vector<1x512xf32>
    %7 = vector.broadcast %6 : vector<1x512xf32> to vector<64x512xf32>
    %8 = arith.addf %4, %7 : vector<64x512xf32>
    %9 = vector.shape_cast %8 : vector<64x512xf32> to vector<8x8x512xf32>
    %c0_8 = arith.constant 0 : index
    %c0_9 = arith.constant 0 : index
    %c0_10 = arith.constant 0 : index
    %10 = vector.load %arg7[%c0_8, %c0_9, %c0_10] : memref<8x8x512xf32, #tpu.memory_space<vmem>>, vector<8x8x512xf32>
    tpu.vector_store %arg7[%c0_8, %c0_9, %c0_10], %9 {strides = array<i32>} : memref<8x8x512xf32, #tpu.memory_space<vmem>>, vector<8x8x512xf32>,
    %c0_11 = arith.constant 0 : index
    %c0_12 = arith.constant 0 : index
    %c0_13 = arith.constant 0 : index
    %11 = vector.load %arg3[%c0_11, %c0_12, %c0_13] : memref<1x128x512xf32, #tpu.memory_space<vmem>>, vector<1x128x512xf32>
    %12 = vector.shape_cast %11 : vector<1x128x512xf32> to vector<128x512xf32>
    %cst_14 = arith.constant 0.000000e+00 : f32
    %13 = vector.broadcast %cst_14 : f32 to vector<8x128xf32>
    %cst_15 = arith.constant 0.000000e+00 : f32
    %14 = vector.broadcast %cst_15 : f32 to vector<8x128xf32>
    %c0_i32 = arith.constant 0 : i32
    %c0_i32_16 = arith.constant 0 : i32
    %15 = arith.cmpi eq, %arg0, %c0_i32_16 : i32
    %c7_i32 = arith.constant 7 : i32
    %16 = arith.subi %c7_i32, %c0_i32 : i32
    %17 = arith.select %15, %c0_i32, %16 : i32
    %18 = arith.index_cast %17 : i32 to index
    %c0_17 = arith.constant 0 : index
    %c0_18 = arith.constant 0 : index
    %19 = vector.load %arg7[%18, %c0_17, %c0_18] : memref<8x8x512xf32, #tpu.memory_space<vmem>>, vector<1x8x512xf32>
    %20 = vector.shape_cast %19 : vector<1x8x512xf32> to vector<8x512xf32>
    %cst_19 = arith.constant dense<0.000000e+00> : vector<8x512xf32>
    %21 = tpu.matmul %13, %12, %cst_19 {dimension_numbers = #tpu.dot_dimension_numbers<[1], [0], [0], [1], [0, 0, 1, 1], [], []>} : vector<8x128xf32>, vector<128x512xf32>, vector<8x512xf32> -> vector<8x512xf32>
    %22 = arith.addf %20, %21 : vector<8x512xf32>
    %23 = vector.extract_strided_slice %22 {offsets = [0, 0], sizes = [8, 128], strides = [1, 1]} : vector<8x512xf32> to vector<8x128xf32>
    %24 = arith.negf %23 : vector<8x128xf32>
    %25 = math.exp %24 : vector<8x128xf32>
    %cst_20 = arith.constant 1.000000e+00 : f32
    %26 = vector.broadcast %cst_20 : f32 to vector<8x128xf32>
    %27 = arith.addf %26, %25 : vector<8x128xf32>
    %28 = arith.divf %26, %27 : vector<8x128xf32>
    %29 = vector.extract_strided_slice %22 {offsets = [0, 128], sizes = [8, 128], strides = [1, 1]} : vector<8x512xf32> to vector<8x128xf32>
    %30 = arith.negf %29 : vector<8x128xf32>
    %31 = math.exp %30 : vector<8x128xf32>
    %cst_21 = arith.constant 1.000000e+00 : f32
    %32 = vector.broadcast %cst_21 : f32 to vector<8x128xf32>
    %33 = arith.addf %32, %31 : vector<8x128xf32>
    %34 = arith.divf %32, %33 : vector<8x128xf32>
    %35 = vector.extract_strided_slice %22 {offsets = [0, 256], sizes = [8, 128], strides = [1, 1]} : vector<8x512xf32> to vector<8x128xf32>
    %36 = math.tanh %35 : vector<8x128xf32>
    %37 = vector.extract_strided_slice %22 {offsets = [0, 384], sizes = [8, 128], strides = [1, 1]} : vector<8x512xf32> to vector<8x128xf32>
    %38 = arith.negf %37 : vector<8x128xf32>
    %39 = math.exp %38 : vector<8x128xf32>
    %cst_22 = arith.constant 1.000000e+00 : f32
    %40 = vector.broadcast %cst_22 : f32 to vector<8x128xf32>
    %41 = arith.addf %40, %39 : vector<8x128xf32>
    %42 = arith.divf %40, %41 : vector<8x128xf32>
    %43 = arith.mulf %34, %14 : vector<8x128xf32>
    %44 = arith.mulf %28, %36 : vector<8x128xf32>
    %45 = arith.addf %43, %44 : vector<8x128xf32>
    %46 = math.tanh %45 : vector<8x128xf32>
    %47 = arith.mulf %42, %46 : vector<8x128xf32>
    %48 = arith.index_cast %17 : i32 to index
    %c0_23 = arith.constant 0 : index
    %c0_24 = arith.constant 0 : index
    %49 = vector.load %arg5[%48, %c0_23, %c0_24] : memref<8x8x128xf32, #tpu.memory_space<vmem>>, vector<1x8x128xf32>
    %50 = vector.shape_cast %49 : vector<1x8x128xf32> to vector<8x128xf32>
    %51 = vector.shape_cast %47 : vector<8x128xf32> to vector<1x8x128xf32>
    tpu.vector_store %arg5[%48, %c0_23, %c0_24], %51 {strides = array<i32>} : memref<8x8x128xf32, #tpu.memory_space<vmem>>, vector<1x8x128xf32>,
    %c1_i32 = arith.constant 1 : i32
    %c0_i32_25 = arith.constant 0 : i32
    %52 = arith.cmpi eq, %arg0, %c0_i32_25 : i32
    %c7_i32_26 = arith.constant 7 : i32
    %53 = arith.subi %c7_i32_26, %c1_i32 : i32
    %54 = arith.select %52, %c1_i32, %53 : i32
    %55 = arith.index_cast %54 : i32 to index
    %c0_27 = arith.constant 0 : index
    %c0_28 = arith.constant 0 : index
    %56 = vector.load %arg7[%55, %c0_27, %c0_28] : memref<8x8x512xf32, #tpu.memory_space<vmem>>, vector<1x8x512xf32>
    %57 = vector.shape_cast %56 : vector<1x8x512xf32> to vector<8x512xf32>
    %cst_29 = arith.constant dense<0.000000e+00> : vector<8x512xf32>
    %58 = tpu.matmul %47, %12, %cst_29 {dimension_numbers = #tpu.dot_dimension_numbers<[1], [0], [0], [1], [0, 0, 1, 1], [], []>} : vector<8x128xf32>, vector<128x512xf32>, vector<8x512xf32> -> vector<8x512xf32>
    %59 = arith.addf %57, %58 : vector<8x512xf32>
    %60 = vector.extract_strided_slice %59 {offsets = [0, 0], sizes = [8, 128], strides = [1, 1]} : vector<8x512xf32> to vector<8x128xf32>
    %61 = arith.negf %60 : vector<8x128xf32>
    %62 = math.exp %61 : vector<8x128xf32>
    %cst_30 = arith.constant 1.000000e+00 : f32
    %63 = vector.broadcast %cst_30 : f32 to vector<8x128xf32>
    %64 = arith.addf %63, %62 : vector<8x128xf32>
    %65 = arith.divf %63, %64 : vector<8x128xf32>
    %66 = vector.extract_strided_slice %59 {offsets = [0, 128], sizes = [8, 128], strides = [1, 1]} : vector<8x512xf32> to vector<8x128xf32>
    %67 = arith.negf %66 : vector<8x128xf32>
    %68 = math.exp %67 : vector<8x128xf32>
    %cst_31 = arith.constant 1.000000e+00 : f32
    %69 = vector.broadcast %cst_31 : f32 to vector<8x128xf32>
    %70 = arith.addf %69, %68 : vector<8x128xf32>
    %71 = arith.divf %69, %70 : vector<8x128xf32>
    %72 = vector.extract_strided_slice %59 {offsets = [0, 256], sizes = [8, 128], strides = [1, 1]} : vector<8x512xf32> to vector<8x128xf32>
    %73 = math.tanh %72 : vector<8x128xf32>
    %74 = vector.extract_strided_slice %59 {offsets = [0, 384], sizes = [8, 128], strides = [1, 1]} : vector<8x512xf32> to vector<8x128xf32>
    %75 = arith.negf %74 : vector<8x128xf32>
    %76 = math.exp %75 : vector<8x128xf32>
    %cst_32 = arith.constant 1.000000e+00 : f32
    %77 = vector.broadcast %cst_32 : f32 to vector<8x128xf32>
    %78 = arith.addf %77, %76 : vector<8x128xf32>
    %79 = arith.divf %77, %78 : vector<8x128xf32>
    %80 = arith.mulf %71, %45 : vector<8x128xf32>
    %81 = arith.mulf %65, %73 : vector<8x128xf32>
    %82 = arith.addf %80, %81 : vector<8x128xf32>
    %83 = math.tanh %82 : vector<8x128xf32>
    %84 = arith.mulf %79, %83 : vector<8x128xf32>
    %85 = arith.index_cast %54 : i32 to index
    %c0_33 = arith.constant 0 : index
    %c0_34 = arith.constant 0 : index
    %86 = vector.load %arg5[%85, %c0_33, %c0_34] : memref<8x8x128xf32, #tpu.memory_space<vmem>>, vector<1x8x128xf32>
    %87 = vector.shape_cast %86 : vector<1x8x128xf32> to vector<8x128xf32>
    %88 = vector.shape_cast %84 : vector<8x128xf32> to vector<1x8x128xf32>
    tpu.vector_store %arg5[%85, %c0_33, %c0_34], %88 {strides = array<i32>} : memref<8x8x128xf32, #tpu.memory_space<vmem>>, vector<1x8x128xf32>,
    %c2_i32 = arith.constant 2 : i32
    %c0_i32_35 = arith.constant 0 : i32
    %89 = arith.cmpi eq, %arg0, %c0_i32_35 : i32
    %c7_i32_36 = arith.constant 7 : i32
    %90 = arith.subi %c7_i32_36, %c2_i32 : i32
    %91 = arith.select %89, %c2_i32, %90 : i32
    %92 = arith.index_cast %91 : i32 to index
    %c0_37 = arith.constant 0 : index
    %c0_38 = arith.constant 0 : index
    %93 = vector.load %arg7[%92, %c0_37, %c0_38] : memref<8x8x512xf32, #tpu.memory_space<vmem>>, vector<1x8x512xf32>
    %94 = vector.shape_cast %93 : vector<1x8x512xf32> to vector<8x512xf32>
    %cst_39 = arith.constant dense<0.000000e+00> : vector<8x512xf32>
    %95 = tpu.matmul %84, %12, %cst_39 {dimension_numbers = #tpu.dot_dimension_numbers<[1], [0], [0], [1], [0, 0, 1, 1], [], []>} : vector<8x128xf32>, vector<128x512xf32>, vector<8x512xf32> -> vector<8x512xf32>
    %96 = arith.addf %94, %95 : vector<8x512xf32>
    %97 = vector.extract_strided_slice %96 {offsets = [0, 0], sizes = [8, 128], strides = [1, 1]} : vector<8x512xf32> to vector<8x128xf32>
    %98 = arith.negf %97 : vector<8x128xf32>
    %99 = math.exp %98 : vector<8x128xf32>
    %cst_40 = arith.constant 1.000000e+00 : f32
    %100 = vector.broadcast %cst_40 : f32 to vector<8x128xf32>
    %101 = arith.addf %100, %99 : vector<8x128xf32>
    %102 = arith.divf %100, %101 : vector<8x128xf32>
    %103 = vector.extract_strided_slice %96 {offsets = [0, 128], sizes = [8, 128], strides = [1, 1]} : vector<8x512xf32> to vector<8x128xf32>
    %104 = arith.negf %103 : vector<8x128xf32>
    %105 = math.exp %104 : vector<8x128xf32>
    %cst_41 = arith.constant 1.000000e+00 : f32
    %106 = vector.broadcast %cst_41 : f32 to vector<8x128xf32>
    %107 = arith.addf %106, %105 : vector<8x128xf32>
    %108 = arith.divf %106, %107 : vector<8x128xf32>
    %109 = vector.extract_strided_slice %96 {offsets = [0, 256], sizes = [8, 128], strides = [1, 1]} : vector<8x512xf32> to vector<8x128xf32>
    %110 = math.tanh %109 : vector<8x128xf32>
    %111 = vector.extract_strided_slice %96 {offsets = [0, 384], sizes = [8, 128], strides = [1, 1]} : vector<8x512xf32> to vector<8x128xf32>
    %112 = arith.negf %111 : vector<8x128xf32>
    %113 = math.exp %112 : vector<8x128xf32>
    %cst_42 = arith.constant 1.000000e+00 : f32
    %114 = vector.broadcast %cst_42 : f32 to vector<8x128xf32>
    %115 = arith.addf %114, %113 : vector<8x128xf32>
    %116 = arith.divf %114, %115 : vector<8x128xf32>
    %117 = arith.mulf %108, %82 : vector<8x128xf32>
    %118 = arith.mulf %102, %110 : vector<8x128xf32>
    %119 = arith.addf %117, %118 : vector<8x128xf32>
    %120 = math.tanh %119 : vector<8x128xf32>
    %121 = arith.mulf %116, %120 : vector<8x128xf32>
    %122 = arith.index_cast %91 : i32 to index
    %c0_43 = arith.constant 0 : index
    %c0_44 = arith.constant 0 : index
    %123 = vector.load %arg5[%122, %c0_43, %c0_44] : memref<8x8x128xf32, #tpu.memory_space<vmem>>, vector<1x8x128xf32>
    %124 = vector.shape_cast %123 : vector<1x8x128xf32> to vector<8x128xf32>
    %125 = vector.shape_cast %121 : vector<8x128xf32> to vector<1x8x128xf32>
    tpu.vector_store %arg5[%122, %c0_43, %c0_44], %125 {strides = array<i32>} : memref<8x8x128xf32, #tpu.memory_space<vmem>>, vector<1x8x128xf32>,
    %c3_i32 = arith.constant 3 : i32
    %c0_i32_45 = arith.constant 0 : i32
    %126 = arith.cmpi eq, %arg0, %c0_i32_45 : i32
    %c7_i32_46 = arith.constant 7 : i32
    %127 = arith.subi %c7_i32_46, %c3_i32 : i32
    %128 = arith.select %126, %c3_i32, %127 : i32
    %129 = arith.index_cast %128 : i32 to index
    %c0_47 = arith.constant 0 : index
    %c0_48 = arith.constant 0 : index
    %130 = vector.load %arg7[%129, %c0_47, %c0_48] : memref<8x8x512xf32, #tpu.memory_space<vmem>>, vector<1x8x512xf32>
    %131 = vector.shape_cast %130 : vector<1x8x512xf32> to vector<8x512xf32>
    %cst_49 = arith.constant dense<0.000000e+00> : vector<8x512xf32>
    %132 = tpu.matmul %121, %12, %cst_49 {dimension_numbers = #tpu.dot_dimension_numbers<[1], [0], [0], [1], [0, 0, 1, 1], [], []>} : vector<8x128xf32>, vector<128x512xf32>, vector<8x512xf32> -> vector<8x512xf32>
    %133 = arith.addf %131, %132 : vector<8x512xf32>
    %134 = vector.extract_strided_slice %133 {offsets = [0, 0], sizes = [8, 128], strides = [1, 1]} : vector<8x512xf32> to vector<8x128xf32>
    %135 = arith.negf %134 : vector<8x128xf32>
    %136 = math.exp %135 : vector<8x128xf32>
    %cst_50 = arith.constant 1.000000e+00 : f32
    %137 = vector.broadcast %cst_50 : f32 to vector<8x128xf32>
    %138 = arith.addf %137, %136 : vector<8x128xf32>
    %139 = arith.divf %137, %138 : vector<8x128xf32>
    %140 = vector.extract_strided_slice %133 {offsets = [0, 128], sizes = [8, 128], strides = [1, 1]} : vector<8x512xf32> to vector<8x128xf32>
    %141 = arith.negf %140 : vector<8x128xf32>
    %142 = math.exp %141 : vector<8x128xf32>
    %cst_51 = arith.constant 1.000000e+00 : f32
    %143 = vector.broadcast %cst_51 : f32 to vector<8x128xf32>
    %144 = arith.addf %143, %142 : vector<8x128xf32>
    %145 = arith.divf %143, %144 : vector<8x128xf32>
    %146 = vector.extract_strided_slice %133 {offsets = [0, 256], sizes = [8, 128], strides = [1, 1]} : vector<8x512xf32> to vector<8x128xf32>
    %147 = math.tanh %146 : vector<8x128xf32>
    %148 = vector.extract_strided_slice %133 {offsets = [0, 384], sizes = [8, 128], strides = [1, 1]} : vector<8x512xf32> to vector<8x128xf32>
    %149 = arith.negf %148 : vector<8x128xf32>
    %150 = math.exp %149 : vector<8x128xf32>
    %cst_52 = arith.constant 1.000000e+00 : f32
    %151 = vector.broadcast %cst_52 : f32 to vector<8x128xf32>
    %152 = arith.addf %151, %150 : vector<8x128xf32>
    %153 = arith.divf %151, %152 : vector<8x128xf32>
    %154 = arith.mulf %145, %119 : vector<8x128xf32>
    %155 = arith.mulf %139, %147 : vector<8x128xf32>
    %156 = arith.addf %154, %155 : vector<8x128xf32>
    %157 = math.tanh %156 : vector<8x128xf32>
    %158 = arith.mulf %153, %157 : vector<8x128xf32>
    %159 = arith.index_cast %128 : i32 to index
    %c0_53 = arith.constant 0 : index
    %c0_54 = arith.constant 0 : index
    %160 = vector.load %arg5[%159, %c0_53, %c0_54] : memref<8x8x128xf32, #tpu.memory_space<vmem>>, vector<1x8x128xf32>
    %161 = vector.shape_cast %160 : vector<1x8x128xf32> to vector<8x128xf32>
    %162 = vector.shape_cast %158 : vector<8x128xf32> to vector<1x8x128xf32>
    tpu.vector_store %arg5[%159, %c0_53, %c0_54], %162 {strides = array<i32>} : memref<8x8x128xf32, #tpu.memory_space<vmem>>, vector<1x8x128xf32>,
    %c4_i32 = arith.constant 4 : i32
    %c0_i32_55 = arith.constant 0 : i32
    %163 = arith.cmpi eq, %arg0, %c0_i32_55 : i32
    %c7_i32_56 = arith.constant 7 : i32
    %164 = arith.subi %c7_i32_56, %c4_i32 : i32
    %165 = arith.select %163, %c4_i32, %164 : i32
    %166 = arith.index_cast %165 : i32 to index
    %c0_57 = arith.constant 0 : index
    %c0_58 = arith.constant 0 : index
    %167 = vector.load %arg7[%166, %c0_57, %c0_58] : memref<8x8x512xf32, #tpu.memory_space<vmem>>, vector<1x8x512xf32>
    %168 = vector.shape_cast %167 : vector<1x8x512xf32> to vector<8x512xf32>
    %cst_59 = arith.constant dense<0.000000e+00> : vector<8x512xf32>
    %169 = tpu.matmul %158, %12, %cst_59 {dimension_numbers = #tpu.dot_dimension_numbers<[1], [0], [0], [1], [0, 0, 1, 1], [], []>} : vector<8x128xf32>, vector<128x512xf32>, vector<8x512xf32> -> vector<8x512xf32>
    %170 = arith.addf %168, %169 : vector<8x512xf32>
    %171 = vector.extract_strided_slice %170 {offsets = [0, 0], sizes = [8, 128], strides = [1, 1]} : vector<8x512xf32> to vector<8x128xf32>
    %172 = arith.negf %171 : vector<8x128xf32>
    %173 = math.exp %172 : vector<8x128xf32>
    %cst_60 = arith.constant 1.000000e+00 : f32
    %174 = vector.broadcast %cst_60 : f32 to vector<8x128xf32>
    %175 = arith.addf %174, %173 : vector<8x128xf32>
    %176 = arith.divf %174, %175 : vector<8x128xf32>
    %177 = vector.extract_strided_slice %170 {offsets = [0, 128], sizes = [8, 128], strides = [1, 1]} : vector<8x512xf32> to vector<8x128xf32>
    %178 = arith.negf %177 : vector<8x128xf32>
    %179 = math.exp %178 : vector<8x128xf32>
    %cst_61 = arith.constant 1.000000e+00 : f32
    %180 = vector.broadcast %cst_61 : f32 to vector<8x128xf32>
    %181 = arith.addf %180, %179 : vector<8x128xf32>
    %182 = arith.divf %180, %181 : vector<8x128xf32>
    %183 = vector.extract_strided_slice %170 {offsets = [0, 256], sizes = [8, 128], strides = [1, 1]} : vector<8x512xf32> to vector<8x128xf32>
    %184 = math.tanh %183 : vector<8x128xf32>
    %185 = vector.extract_strided_slice %170 {offsets = [0, 384], sizes = [8, 128], strides = [1, 1]} : vector<8x512xf32> to vector<8x128xf32>
    %186 = arith.negf %185 : vector<8x128xf32>
    %187 = math.exp %186 : vector<8x128xf32>
    %cst_62 = arith.constant 1.000000e+00 : f32
    %188 = vector.broadcast %cst_62 : f32 to vector<8x128xf32>
    %189 = arith.addf %188, %187 : vector<8x128xf32>
    %190 = arith.divf %188, %189 : vector<8x128xf32>
    %191 = arith.mulf %182, %156 : vector<8x128xf32>
    %192 = arith.mulf %176, %184 : vector<8x128xf32>
    %193 = arith.addf %191, %192 : vector<8x128xf32>
    %194 = math.tanh %193 : vector<8x128xf32>
    %195 = arith.mulf %190, %194 : vector<8x128xf32>
    %196 = arith.index_cast %165 : i32 to index
    %c0_63 = arith.constant 0 : index
    %c0_64 = arith.constant 0 : index
    %197 = vector.load %arg5[%196, %c0_63, %c0_64] : memref<8x8x128xf32, #tpu.memory_space<vmem>>, vector<1x8x128xf32>
    %198 = vector.shape_cast %197 : vector<1x8x128xf32> to vector<8x128xf32>
    %199 = vector.shape_cast %195 : vector<8x128xf32> to vector<1x8x128xf32>
    tpu.vector_store %arg5[%196, %c0_63, %c0_64], %199 {strides = array<i32>} : memref<8x8x128xf32, #tpu.memory_space<vmem>>, vector<1x8x128xf32>,
    %c5_i32 = arith.constant 5 : i32
    %c0_i32_65 = arith.constant 0 : i32
    %200 = arith.cmpi eq, %arg0, %c0_i32_65 : i32
    %c7_i32_66 = arith.constant 7 : i32
    %201 = arith.subi %c7_i32_66, %c5_i32 : i32
    %202 = arith.select %200, %c5_i32, %201 : i32
    %203 = arith.index_cast %202 : i32 to index
    %c0_67 = arith.constant 0 : index
    %c0_68 = arith.constant 0 : index
    %204 = vector.load %arg7[%203, %c0_67, %c0_68] : memref<8x8x512xf32, #tpu.memory_space<vmem>>, vector<1x8x512xf32>
    %205 = vector.shape_cast %204 : vector<1x8x512xf32> to vector<8x512xf32>
    %cst_69 = arith.constant dense<0.000000e+00> : vector<8x512xf32>
    %206 = tpu.matmul %195, %12, %cst_69 {dimension_numbers = #tpu.dot_dimension_numbers<[1], [0], [0], [1], [0, 0, 1, 1], [], []>} : vector<8x128xf32>, vector<128x512xf32>, vector<8x512xf32> -> vector<8x512xf32>
    %207 = arith.addf %205, %206 : vector<8x512xf32>
    %208 = vector.extract_strided_slice %207 {offsets = [0, 0], sizes = [8, 128], strides = [1, 1]} : vector<8x512xf32> to vector<8x128xf32>
    %209 = arith.negf %208 : vector<8x128xf32>
    %210 = math.exp %209 : vector<8x128xf32>
    %cst_70 = arith.constant 1.000000e+00 : f32
    %211 = vector.broadcast %cst_70 : f32 to vector<8x128xf32>
    %212 = arith.addf %211, %210 : vector<8x128xf32>
    %213 = arith.divf %211, %212 : vector<8x128xf32>
    %214 = vector.extract_strided_slice %207 {offsets = [0, 128], sizes = [8, 128], strides = [1, 1]} : vector<8x512xf32> to vector<8x128xf32>
    %215 = arith.negf %214 : vector<8x128xf32>
    %216 = math.exp %215 : vector<8x128xf32>
    %cst_71 = arith.constant 1.000000e+00 : f32
    %217 = vector.broadcast %cst_71 : f32 to vector<8x128xf32>
    %218 = arith.addf %217, %216 : vector<8x128xf32>
    %219 = arith.divf %217, %218 : vector<8x128xf32>
    %220 = vector.extract_strided_slice %207 {offsets = [0, 256], sizes = [8, 128], strides = [1, 1]} : vector<8x512xf32> to vector<8x128xf32>
    %221 = math.tanh %220 : vector<8x128xf32>
    %222 = vector.extract_strided_slice %207 {offsets = [0, 384], sizes = [8, 128], strides = [1, 1]} : vector<8x512xf32> to vector<8x128xf32>
    %223 = arith.negf %222 : vector<8x128xf32>
    %224 = math.exp %223 : vector<8x128xf32>
    %cst_72 = arith.constant 1.000000e+00 : f32
    %225 = vector.broadcast %cst_72 : f32 to vector<8x128xf32>
    %226 = arith.addf %225, %224 : vector<8x128xf32>
    %227 = arith.divf %225, %226 : vector<8x128xf32>
    %228 = arith.mulf %219, %193 : vector<8x128xf32>
    %229 = arith.mulf %213, %221 : vector<8x128xf32>
    %230 = arith.addf %228, %229 : vector<8x128xf32>
    %231 = math.tanh %230 : vector<8x128xf32>
    %232 = arith.mulf %227, %231 : vector<8x128xf32>
    %233 = arith.index_cast %202 : i32 to index
    %c0_73 = arith.constant 0 : index
    %c0_74 = arith.constant 0 : index
    %234 = vector.load %arg5[%233, %c0_73, %c0_74] : memref<8x8x128xf32, #tpu.memory_space<vmem>>, vector<1x8x128xf32>
    %235 = vector.shape_cast %234 : vector<1x8x128xf32> to vector<8x128xf32>
    %236 = vector.shape_cast %232 : vector<8x128xf32> to vector<1x8x128xf32>
    tpu.vector_store %arg5[%233, %c0_73, %c0_74], %236 {strides = array<i32>} : memref<8x8x128xf32, #tpu.memory_space<vmem>>, vector<1x8x128xf32>,
    %c6_i32 = arith.constant 6 : i32
    %c0_i32_75 = arith.constant 0 : i32
    %237 = arith.cmpi eq, %arg0, %c0_i32_75 : i32
    %c7_i32_76 = arith.constant 7 : i32
    %238 = arith.subi %c7_i32_76, %c6_i32 : i32
    %239 = arith.select %237, %c6_i32, %238 : i32
    %240 = arith.index_cast %239 : i32 to index
    %c0_77 = arith.constant 0 : index
    %c0_78 = arith.constant 0 : index
    %241 = vector.load %arg7[%240, %c0_77, %c0_78] : memref<8x8x512xf32, #tpu.memory_space<vmem>>, vector<1x8x512xf32>
    %242 = vector.shape_cast %241 : vector<1x8x512xf32> to vector<8x512xf32>
    %cst_79 = arith.constant dense<0.000000e+00> : vector<8x512xf32>
    %243 = tpu.matmul %232, %12, %cst_79 {dimension_numbers = #tpu.dot_dimension_numbers<[1], [0], [0], [1], [0, 0, 1, 1], [], []>} : vector<8x128xf32>, vector<128x512xf32>, vector<8x512xf32> -> vector<8x512xf32>
    %244 = arith.addf %242, %243 : vector<8x512xf32>
    %245 = vector.extract_strided_slice %244 {offsets = [0, 0], sizes = [8, 128], strides = [1, 1]} : vector<8x512xf32> to vector<8x128xf32>
    %246 = arith.negf %245 : vector<8x128xf32>
    %247 = math.exp %246 : vector<8x128xf32>
    %cst_80 = arith.constant 1.000000e+00 : f32
    %248 = vector.broadcast %cst_80 : f32 to vector<8x128xf32>
    %249 = arith.addf %248, %247 : vector<8x128xf32>
    %250 = arith.divf %248, %249 : vector<8x128xf32>
    %251 = vector.extract_strided_slice %244 {offsets = [0, 128], sizes = [8, 128], strides = [1, 1]} : vector<8x512xf32> to vector<8x128xf32>
    %252 = arith.negf %251 : vector<8x128xf32>
    %253 = math.exp %252 : vector<8x128xf32>
    %cst_81 = arith.constant 1.000000e+00 : f32
    %254 = vector.broadcast %cst_81 : f32 to vector<8x128xf32>
    %255 = arith.addf %254, %253 : vector<8x128xf32>
    %256 = arith.divf %254, %255 : vector<8x128xf32>
    %257 = vector.extract_strided_slice %244 {offsets = [0, 256], sizes = [8, 128], strides = [1, 1]} : vector<8x512xf32> to vector<8x128xf32>
    %258 = math.tanh %257 : vector<8x128xf32>
    %259 = vector.extract_strided_slice %244 {offsets = [0, 384], sizes = [8, 128], strides = [1, 1]} : vector<8x512xf32> to vector<8x128xf32>
    %260 = arith.negf %259 : vector<8x128xf32>
    %261 = math.exp %260 : vector<8x128xf32>
    %cst_82 = arith.constant 1.000000e+00 : f32
    %262 = vector.broadcast %cst_82 : f32 to vector<8x128xf32>
    %263 = arith.addf %262, %261 : vector<8x128xf32>
    %264 = arith.divf %262, %263 : vector<8x128xf32>
    %265 = arith.mulf %256, %230 : vector<8x128xf32>
    %266 = arith.mulf %250, %258 : vector<8x128xf32>
    %267 = arith.addf %265, %266 : vector<8x128xf32>
    %268 = math.tanh %267 : vector<8x128xf32>
    %269 = arith.mulf %264, %268 : vector<8x128xf32>
    %270 = arith.index_cast %239 : i32 to index
    %c0_83 = arith.constant 0 : index
    %c0_84 = arith.constant 0 : index
    %271 = vector.load %arg5[%270, %c0_83, %c0_84] : memref<8x8x128xf32, #tpu.memory_space<vmem>>, vector<1x8x128xf32>
    %272 = vector.shape_cast %271 : vector<1x8x128xf32> to vector<8x128xf32>
    %273 = vector.shape_cast %269 : vector<8x128xf32> to vector<1x8x128xf32>
    tpu.vector_store %arg5[%270, %c0_83, %c0_84], %273 {strides = array<i32>} : memref<8x8x128xf32, #tpu.memory_space<vmem>>, vector<1x8x128xf32>,
    %c7_i32_85 = arith.constant 7 : i32
    %c0_i32_86 = arith.constant 0 : i32
    %274 = arith.cmpi eq, %arg0, %c0_i32_86 : i32
    %c7_i32_87 = arith.constant 7 : i32
    %275 = arith.subi %c7_i32_87, %c7_i32_85 : i32
    %276 = arith.select %274, %c7_i32_85, %275 : i32
    %277 = arith.index_cast %276 : i32 to index
    %c0_88 = arith.constant 0 : index
    %c0_89 = arith.constant 0 : index
    %278 = vector.load %arg7[%277, %c0_88, %c0_89] : memref<8x8x512xf32, #tpu.memory_space<vmem>>, vector<1x8x512xf32>
    %279 = vector.shape_cast %278 : vector<1x8x512xf32> to vector<8x512xf32>
    %cst_90 = arith.constant dense<0.000000e+00> : vector<8x512xf32>
    %280 = tpu.matmul %269, %12, %cst_90 {dimension_numbers = #tpu.dot_dimension_numbers<[1], [0], [0], [1], [0, 0, 1, 1], [], []>} : vector<8x128xf32>, vector<128x512xf32>, vector<8x512xf32> -> vector<8x512xf32>
    %281 = arith.addf %279, %280 : vector<8x512xf32>
    %282 = vector.extract_strided_slice %281 {offsets = [0, 0], sizes = [8, 128], strides = [1, 1]} : vector<8x512xf32> to vector<8x128xf32>
    %283 = arith.negf %282 : vector<8x128xf32>
    %284 = math.exp %283 : vector<8x128xf32>
    %cst_91 = arith.constant 1.000000e+00 : f32
    %285 = vector.broadcast %cst_91 : f32 to vector<8x128xf32>
    %286 = arith.addf %285, %284 : vector<8x128xf32>
    %287 = arith.divf %285, %286 : vector<8x128xf32>
    %288 = vector.extract_strided_slice %281 {offsets = [0, 128], sizes = [8, 128], strides = [1, 1]} : vector<8x512xf32> to vector<8x128xf32>
    %289 = arith.negf %288 : vector<8x128xf32>
    %290 = math.exp %289 : vector<8x128xf32>
    %cst_92 = arith.constant 1.000000e+00 : f32
    %291 = vector.broadcast %cst_92 : f32 to vector<8x128xf32>
    %292 = arith.addf %291, %290 : vector<8x128xf32>
    %293 = arith.divf %291, %292 : vector<8x128xf32>
    %294 = vector.extract_strided_slice %281 {offsets = [0, 256], sizes = [8, 128], strides = [1, 1]} : vector<8x512xf32> to vector<8x128xf32>
    %295 = math.tanh %294 : vector<8x128xf32>
    %296 = vector.extract_strided_slice %281 {offsets = [0, 384], sizes = [8, 128], strides = [1, 1]} : vector<8x512xf32> to vector<8x128xf32>
    %297 = arith.negf %296 : vector<8x128xf32>
    %298 = math.exp %297 : vector<8x128xf32>
    %cst_93 = arith.constant 1.000000e+00 : f32
    %299 = vector.broadcast %cst_93 : f32 to vector<8x128xf32>
    %300 = arith.addf %299, %298 : vector<8x128xf32>
    %301 = arith.divf %299, %300 : vector<8x128xf32>
    %302 = arith.mulf %293, %267 : vector<8x128xf32>
    %303 = arith.mulf %287, %295 : vector<8x128xf32>
    %304 = arith.addf %302, %303 : vector<8x128xf32>
    %305 = math.tanh %304 : vector<8x128xf32>
    %306 = arith.mulf %301, %305 : vector<8x128xf32>
    %307 = arith.index_cast %276 : i32 to index
    %c0_94 = arith.constant 0 : index
    %c0_95 = arith.constant 0 : index
    %308 = vector.load %arg5[%307, %c0_94, %c0_95] : memref<8x8x128xf32, #tpu.memory_space<vmem>>, vector<1x8x128xf32>
    %309 = vector.shape_cast %308 : vector<1x8x128xf32> to vector<8x128xf32>
    %310 = vector.shape_cast %306 : vector<8x128xf32> to vector<1x8x128xf32>
    tpu.vector_store %arg5[%307, %c0_94, %c0_95], %310 {strides = array<i32>} : memref<8x8x128xf32, #tpu.memory_space<vmem>>, vector<1x8x128xf32>,
    %c8_i32 = arith.constant 8 : i32
    %c0_96 = arith.constant 0 : index
    %c0_97 = arith.constant 0 : index
    %c0_98 = arith.constant 0 : index
    %311 = vector.load %arg6[%c0_96, %c0_97, %c0_98] : memref<1x8x128xf32, #tpu.memory_space<vmem>>, vector<1x8x128xf32>
    %312 = vector.shape_cast %311 : vector<1x8x128xf32> to vector<8x128xf32>
    %313 = vector.shape_cast %306 : vector<8x128xf32> to vector<1x8x128xf32>
    tpu.vector_store %arg6[%c0_96, %c0_97, %c0_98], %313 {strides = array<i32>} : memref<1x8x128xf32, #tpu.memory_space<vmem>>, vector<1x8x128xf32>,
    return
  }
  func.func @transform_0(%arg0: i32) -> (i32, i32, i32) {
    %c0_i32 = arith.constant 0 : i32
    %c0_i32_0 = arith.constant 0 : i32
    %c0_i32_1 = arith.constant 0 : i32
    %c0_i32_2 = arith.constant 0 : i32
    return %c0_i32, %c0_i32_0, %c0_i32_1 : i32, i32, i32
  }
  func.func @transform_1(%arg0: i32) -> (i32, i32, i32) {
    %c0_i32 = arith.constant 0 : i32
    %c0_i32_0 = arith.constant 0 : i32
    %c0_i32_1 = arith.constant 0 : i32
    return %arg0, %c0_i32, %c0_i32_0 : i32, i32, i32
  }
  func.func @transform_2(%arg0: i32) -> (i32, i32, i32) {
    %c0_i32 = arith.constant 0 : i32
    %c0_i32_0 = arith.constant 0 : i32
    %c0_i32_1 = arith.constant 0 : i32
    return %arg0, %c0_i32, %c0_i32_0 : i32, i32, i32
  }
  func.func @transform_3(%arg0: i32) -> (i32, i32, i32) {
    %c0_i32 = arith.constant 0 : i32
    %c0_i32_0 = arith.constant 0 : i32
    %c0_i32_1 = arith.constant 0 : i32
    return %arg0, %c0_i32, %c0_i32_0 : i32, i32, i32
  }
  func.func @transform_4(%arg0: i32) -> (i32, i32, i32) {
    %c0_i32 = arith.constant 0 : i32
    %c0_i32_0 = arith.constant 0 : i32
    %c0_i32_1 = arith.constant 0 : i32
    return %c0_i32, %c0_i32_0, %arg0 : i32, i32, i32
  }
  func.func @transform_5(%arg0: i32) -> (i32, i32, i32) {
    %c0_i32 = arith.constant 0 : i32
    %c0_i32_0 = arith.constant 0 : i32
    %c0_i32_1 = arith.constant 0 : i32
    return %arg0, %c0_i32, %c0_i32_0 : i32, i32, i32
  }
}

</mosaic_0001>

<llo_original>
// kernel: base_network_forward.2
$region0: #{base_network_forward.2}
  #allocation0 [shape = 'u32[]', space=smem, size = 0x4, offset = 0x4, fixed_abs, tag = 'smem constant byte address 0x4 - core index']
  #allocation1 [shape = 'u32[144,128]{1,0:T(1,128)}', space=vmem, size = 0x12000, scoped, tag = 'internal scratch']
  #allocation2 [shape = 'f32[8,8,512]{2,1,0:T(8,128)}', space=vmem, size = 0x20000, scoped, tag = 'scratch operand']
  %s0 = inlined_call_operand.vmem [shape: f32[8,8,128], index: 0, kind: input, shape index: {}]
  %s1 = inlined_call_operand.hbm [shape: f32[2,128,512], index: 1, kind: input, shape index: {}]
  %s2 = inlined_call_operand.hbm [shape: f32[2,128,512], index: 2, kind: input, shape index: {}]
  %s3 = inlined_call_operand.hbm [shape: f32[2,1,512], index: 3, kind: input, shape index: {}]
  %s4 = inlined_call_operand.vmem [shape: f32[8,8,256], index: 4, kind: output, shape index: {0}]
  %s5 = inlined_call_operand.hbm [shape: f32[2,8,128], index: 5, kind: output, shape index: {1}]
  %6 = xla_tuple %s4, %s5
  %s7 = sld [smem:[#allocation0]]
  $region103: #{base_network_forward.2} parent=0
    _
  %s9 = ssub.s32 1, %s7
  %s10 = scalar_select 0, %s9, %s7
  $region1: #{base_network_forward.2} parent=0
    #allocation3 [shape = 'u8[524288]{0}', space=vmem, size = 0x80000, scoped, tag = 'input window, operand 1']
    #allocation4 [shape = 's32[2]{0}', space=sflag, size = 0x8, scoped, tag = 'scoped memory for base_network_forward.2']
    #allocation5 [shape = 's32[2]{0}', space=sflag, size = 0x8, scoped, tag = 'scoped memory for base_network_forward.2']
    #allocation6 [shape = 'u8[524288]{0}', space=vmem, size = 0x80000, scoped, tag = 'input window, operand 2']
    #allocation7 [shape = 's32[2]{0}', space=sflag, size = 0x8, scoped, tag = 'scoped memory for base_network_forward.2']
    #allocation8 [shape = 'u8[4096]{0}', space=vmem, size = 0x1000, scoped, tag = 'input window, operand 3']
    #allocation9 [shape = 'u8[65536]{0}', space=vmem, size = 0x10000, scoped, tag = 'output window, operand 0']
    #allocation10 [shape = 'u8[8192]{0}', space=vmem, size = 0x2000, scoped, tag = 'output window, operand 1']
    %11 = vsyncpa [#allocation4], 0
    %s12 = scalar_lea.sflag [#allocation4], 1
    %13 = vsyncpa %s12, 0
    %14 = vsyncpa [#allocation7], 0
    %s15 = scalar_lea.sflag [#allocation7], 1
    %16 = vsyncpa %s15, 0
    %17 = vsyncpa [#allocation5], 0
    %s18 = scalar_lea.sflag [#allocation5], 1
    %19 = vsyncpa %s18, 0
    loop: start=0, step=1, limit=4
    $region2: #{base_network_forward.2} parent=1 // loop_pre_header
      _
    $region3: #{base_network_forward.2} parent=1 // loop_header
      %s21 = sphi 0, %s25
      %p22 = scmp.ge.s32.totalorder %s21, 4
      %s29 = sphi 0, %s29
      %s31 = sphi 0, %s29
      %s32 = sphi 0, %s31
      %s46 = sphi 0, %s32
      %s52 = sphi 0, %s54
      %s55 = sphi 0, %s52
      %s56 = sphi 0, %s55
      %s72 = sphi 0, %s56
      %s78 = sphi 0, %s80
      %s81 = sphi 0, %s78
      %s82 = sphi 0, %s81
      %s98 = sphi 0, %s82
      %s104 = sphi 0, %s106
      %s107 = sphi 0, %s104
      %s108 = sphi 0, %s107
      %s124 = sphi 0, %s108
      %s130 = sphi 0, %s132
      %s133 = sphi 0, %s130
      %s134 = sphi 0, %s133
      %s150 = sphi 0, %s134
      %s156 = sphi 0, %s158
      %s159 = sphi 0, %s156
      %s160 = sphi 0, %s159
      %s176 = sphi 0, %s160
    $region4: #{base_network_forward.2} parent=1 // loop_header_branch
      %24 = sbr.rel (%p22) target = $region8
    $region5: #{base_network_forward.2} parent=1 // loop_body
      %s26 = ssub.s32 %s21, 1
      %s27 = ssub.s32 %s21, 2
      %s28 = sadd.s32 %s21, 1
      %s30 = sadd.s32 %s29, 1
      %p33 = scmp.eq.s32.totalorder %s21, 1
      %p34 = scmp.ne.s32.totalorder %s29, %s31
      %p35 = scmp.eq.s32.totalorder %s21, 0
      %p36 = por %p34, %p35
      %p37 = scmp.ne.s32.totalorder %s29, %s31
      %p38 = scmp.eq.s32.totalorder %s26, 1
      %p39 = por %p37, %p38
      %p40 = scmp.ne.s32.totalorder %s31, %s32
      %p41 = scmp.eq.s32.totalorder %s26, 0
      %p42 = por %p40, %p41
      %p43 = scmp.ne.s32.totalorder %s31, %s32
      %p44 = scmp.eq.s32.totalorder %s27, 1
      %p45 = por %p43, %p44
      %p47 = scmp.ne.s32.totalorder %s32, %s46
      %p48 = scmp.eq.s32.totalorder %s27, 0
      %p49 = por %p47, %p48
      %s50 = ssub.s32 %s21, %s28
      %p51 = scmp.eq.s32.totalorder %s50, 0
      %s53 = sadd.s32 %s52, 1
      %s54 = scalar_select %p51, %s52, %s53
      %p57 = pneg %p51
      %p58 = scmp.eq.s32.totalorder %s21, 1
      %p59 = por %p57, %p58
      %p60 = scmp.ne.s32.totalorder %s52, %s55
      %p61 = scmp.eq.s32.totalorder %s21, 0
      %p62 = por %p60, %p61
      %p63 = scmp.ne.s32.totalorder %s52, %s55
      %p64 = scmp.eq.s32.totalorder %s26, 1
      %p65 = por %p63, %p64
      %p66 = scmp.ne.s32.totalorder %s55, %s56
      %p67 = scmp.eq.s32.totalorder %s26, 0
      %p68 = por %p66, %p67
      %p69 = scmp.ne.s32.totalorder %s55, %s56
      %p70 = scmp.eq.s32.totalorder %s27, 1
      %p71 = por %p69, %p70
      %p73 = scmp.ne.s32.totalorder %s56, %s72
      %p74 = scmp.eq.s32.totalorder %s27, 0
      %p75 = por %p73, %p74
      %s76 = ssub.s32 %s21, %s28
      %p77 = scmp.eq.s32.totalorder %s76, 0
      %s79 = sadd.s32 %s78, 1
      %s80 = scalar_select %p77, %s78, %s79
      %p83 = pneg %p77
      %p84 = scmp.eq.s32.totalorder %s21, 1
      %p85 = por %p83, %p84
      %p86 = scmp.ne.s32.totalorder %s78, %s81
      %p87 = scmp.eq.s32.totalorder %s21, 0
      %p88 = por %p86, %p87
      %p89 = scmp.ne.s32.totalorder %s78, %s81
      %p90 = scmp.eq.s32.totalorder %s26, 1
      %p91 = por %p89, %p90
      %p92 = scmp.ne.s32.totalorder %s81, %s82
      %p93 = scmp.eq.s32.totalorder %s26, 0
      %p94 = por %p92, %p93
      %p95 = scmp.ne.s32.totalorder %s81, %s82
      %p96 = scmp.eq.s32.totalorder %s27, 1
      %p97 = por %p95, %p96
      %p99 = scmp.ne.s32.totalorder %s82, %s98
      %p100 = scmp.eq.s32.totalorder %s27, 0
      %p101 = por %p99, %p100
      %s102 = ssub.s32 %s21, %s28
      %p103 = scmp.eq.s32.totalorder %s102, 0
      %s105 = sadd.s32 %s104, 1
      %s106 = scalar_select %p103, %s104, %s105
      %p109 = pneg %p103
      %p110 = scmp.eq.s32.totalorder %s21, 1
      %p111 = por %p109, %p110
      %p112 = scmp.ne.s32.totalorder %s104, %s107
      %p113 = scmp.eq.s32.totalorder %s21, 0
      %p114 = por %p112, %p113
      %p115 = scmp.ne.s32.totalorder %s104, %s107
      %p116 = scmp.eq.s32.totalorder %s26, 1
      %p117 = por %p115, %p116
      %p118 = scmp.ne.s32.totalorder %s107, %s108
      %p119 = scmp.eq.s32.totalorder %s26, 0
      %p120 = por %p118, %p119
      %p121 = scmp.ne.s32.totalorder %s107, %s108
      %p122 = scmp.eq.s32.totalorder %s27, 1
      %p123 = por %p121, %p122
      %p125 = scmp.ne.s32.totalorder %s108, %s124
      %p126 = scmp.eq.s32.totalorder %s27, 0
      %p127 = por %p125, %p126
      %s128 = ssub.s32 %s21, %s28
      %p129 = scmp.eq.s32.totalorder %s128, 0
      %s131 = sadd.s32 %s130, 1
      %s132 = scalar_select %p129, %s130, %s131
      %p135 = pneg %p129
      %p136 = scmp.eq.s32.totalorder %s21, 1
      %p137 = por %p135, %p136
      %p138 = scmp.ne.s32.totalorder %s130, %s133
      %p139 = scmp.eq.s32.totalorder %s21, 0
      %p140 = por %p138, %p139
      %p141 = scmp.ne.s32.totalorder %s130, %s133
      %p142 = scmp.eq.s32.totalorder %s26, 1
      %p143 = por %p141, %p142
      %p144 = scmp.ne.s32.totalorder %s133, %s134
      %p145 = scmp.eq.s32.totalorder %s26, 0
      %p146 = por %p144, %p145
      %p147 = scmp.ne.s32.totalorder %s133, %s134
      %p148 = scmp.eq.s32.totalorder %s27, 1
      %p149 = por %p147, %p148
      %p151 = scmp.ne.s32.totalorder %s134, %s150
      %p152 = scmp.eq.s32.totalorder %s27, 0
      %p153 = por %p151, %p152
      %s154 = ssub.s32 %s21, %s28
      %p155 = scmp.eq.s32.totalorder %s154, 0
      %s157 = sadd.s32 %s156, 1
      %s158 = scalar_select %p155, %s156, %s157
      %p161 = pneg %p155
      %p162 = scmp.eq.s32.totalorder %s21, 1
      %p163 = por %p161, %p162
      %p164 = scmp.ne.s32.totalorder %s156, %s159
      %p165 = scmp.eq.s32.totalorder %s21, 0
      %p166 = por %p164, %p165
      %p167 = scmp.ne.s32.totalorder %s156, %s159
      %p168 = scmp.eq.s32.totalorder %s26, 1
      %p169 = por %p167, %p168
      %p170 = scmp.ne.s32.totalorder %s159, %s160
      %p171 = scmp.eq.s32.totalorder %s26, 0
      %p172 = por %p170, %p171
      %p173 = scmp.ne.s32.totalorder %s159, %s160
      %p174 = scmp.eq.s32.totalorder %s27, 1
      %p175 = por %p173, %p174
      %p177 = scmp.ne.s32.totalorder %s160, %s176
      %p178 = scmp.eq.s32.totalorder %s27, 0
      %p179 = por %p177, %p178
      %p180 = scmp.le.s32.totalorder 1, %s21
      %p181 = scmp.lt.s32.totalorder %s21, 3
      %p182 = pnand %p180, %p181
      %p183 = pneg %p182
      // Predicated region
      $region9: #{base_network_forward.2} parent=5 // pred_check
        _
      $region10: #{base_network_forward.2} parent=5 // pred_check_branch
        %185 = sbr.rel (%p182) target = $region12
      $region11: #{base_network_forward.2} parent=5 // pred_region
        %s186 = ssub.s32 %s21, 1
        // Predicated region
        $region13: #{base_network_forward.2} parent=11 // pred_check
          %p187 = pneg %p42
        $region14: #{base_network_forward.2} parent=11 // pred_check_branch
          %189 = sbr.rel (%p187) target = $region16
        $region15: #{base_network_forward.2} parent=11 // pred_region
          _
        $region16: #{base_network_forward.2} parent=11 // pred_fallthru
          _
      $region12: #{base_network_forward.2} parent=5 // pred_fallthru
        _
      %p190 = scmp.lt.s32.totalorder %s21, 2
      // Predicated region
      $region17: #{base_network_forward.2} parent=5 // pred_check
        %p191 = pneg %p190
      $region18: #{base_network_forward.2} parent=5 // pred_check_branch
        %193 = sbr.rel (%p191) target = $region20
      $region19: #{base_network_forward.2} parent=5 // pred_region
        // Predicated region
        $region21: #{base_network_forward.2} parent=19 // pred_check
          %p194 = pneg %p62
        $region22: #{base_network_forward.2} parent=19 // pred_check_branch
          %196 = sbr.rel (%p194) target = $region24
        $region23: #{base_network_forward.2} parent=19 // pred_region
          %s197 = sand.u32 %s52, 1
          %s198 = scalar_lea.sflag [#allocation4], %s197
          %s199 = sand.u32 %s52, 1
          %s200 = smul.addr %s199, 512
          %s201 = scalar_lea.vmem [#allocation3], %s200
          %s203 = ssub.s32 8192, 8192
          %204 = vsyncadd %s198, %s203
          %s205 = smul.addr %s21, 64
          %s206 = smul.addr %s205, 128
          %s207 = scalar_lea.hbm %s1, %s206
          %s208 = sshll.u32 %s201, 4
          %s209 = int_to_ptr.vmem [resolvable:$true] %s208
          %214 = dma.hbm_to_vmem [thread:$0]  %s207, 8192, %s209, %s198, 512, 512, 32
        $region24: #{base_network_forward.2} parent=19 // pred_fallthru
          _
        // Predicated region
        $region25: #{base_network_forward.2} parent=19 // pred_check
          %p215 = pneg %p88
        $region26: #{base_network_forward.2} parent=19 // pred_check_branch
          %217 = sbr.rel (%p215) target = $region28
        $region27: #{base_network_forward.2} parent=19 // pred_region
          %s218 = sand.u32 %s21, 1
          %s219 = scalar_lea.sflag [#allocation7], %s218
          %s220 = sand.u32 %s78, 1
          %s221 = smul.addr %s220, 512
          %s222 = scalar_lea.vmem [#allocation6], %s221
          %s224 = ssub.s32 8192, 8192
          %225 = vsyncadd %s219, %s224
          %s226 = smul.addr %s21, 64
          %s227 = smul.addr %s226, 128
          %s228 = scalar_lea.hbm %s2, %s227
          %s229 = sshll.u32 %s222, 4
          %s230 = int_to_ptr.vmem [resolvable:$true] %s229
          %235 = dma.hbm_to_vmem [thread:$0]  %s228, 8192, %s230, %s219, 512, 512, 32
        $region28: #{base_network_forward.2} parent=19 // pred_fallthru
          _
        // Predicated region
        $region29: #{base_network_forward.2} parent=19 // pred_check
          %p236 = pneg %p114
        $region30: #{base_network_forward.2} parent=19 // pred_check_branch
          %238 = sbr.rel (%p236) target = $region32
        $region31: #{base_network_forward.2} parent=19 // pred_region
          %s239 = sand.u32 %s21, 1
          %s240 = scalar_lea.sflag [#allocation7], %s239
          %s241 = sand.u32 %s104, 1
          %s242 = smul.addr %s241, 4
          %s243 = scalar_lea.vmem [#allocation8], %s242
          %s245 = ssub.s32 64, 64
          %246 = vsyncadd %s240, %s245
          %s247 = smul.addr %s21, 4
          %s248 = smul.addr %s247, 16
          %s249 = scalar_lea.hbm %s3, %s248
          %s251 = sshll.u32 %s243, 4
          %s252 = int_to_ptr.vmem [resolvable:$true] %s251
          %254 = dma.hbm_to_vmem [thread:$0]  %s249, 64, %s252, %s240
        $region32: #{base_network_forward.2} parent=19 // pred_fallthru
          _
      $region20: #{base_network_forward.2} parent=5 // pred_fallthru
        _
      %p255 = scmp.le.s32.totalorder 1, %s21
      %p256 = scmp.lt.s32.totalorder %s21, 3
      %p257 = pnand %p255, %p256
      %p258 = pneg %p257
      // Predicated region
      $region33: #{base_network_forward.2} parent=5 // pred_check
        _
      $region34: #{base_network_forward.2} parent=5 // pred_check_branch
        %260 = sbr.rel (%p257) target = $region36
      $region35: #{base_network_forward.2} parent=5 // pred_region
        %s261 = ssub.s32 %s21, 1
        %s262 = sand.u32 %s55, 1
        %s263 = scalar_lea.sflag [#allocation4], %s262
        %s264 = sand.u32 %s55, 1
        %s265 = smul.addr %s264, 512
        %s266 = scalar_lea.vmem [#allocation3], %s265
        // Predicated region
        $region37: #{base_network_forward.2} parent=35 // pred_check
          %p267 = pneg %p68
        $region38: #{base_network_forward.2} parent=35 // pred_check_branch
          %269 = sbr.rel (%p267) target = $region40
        $region39: #{base_network_forward.2} parent=35 // pred_region
          %270 = dma.done %s263, 8192
        $region40: #{base_network_forward.2} parent=35 // pred_fallthru
          _
        %s271 = sand.u32 %s26, 1
        %s272 = scalar_lea.sflag [#allocation7], %s271
        %s273 = sand.u32 %s81, 1
        %s274 = smul.addr %s273, 512
        %s275 = scalar_lea.vmem [#allocation6], %s274
        // Predicated region
        $region41: #{base_network_forward.2} parent=35 // pred_check
          %p276 = pneg %p94
        $region42: #{base_network_forward.2} parent=35 // pred_check_branch
          %278 = sbr.rel (%p276) target = $region44
        $region43: #{base_network_forward.2} parent=35 // pred_region
          %279 = dma.done %s272, 8192
        $region44: #{base_network_forward.2} parent=35 // pred_fallthru
          _
        %s280 = sand.u32 %s26, 1
        %s281 = scalar_lea.sflag [#allocation7], %s280
        %s282 = sand.u32 %s107, 1
        %s283 = smul.addr %s282, 4
        %s284 = scalar_lea.vmem [#allocation8], %s283
        // Predicated region
        $region45: #{base_network_forward.2} parent=35 // pred_check
          %p285 = pneg %p120
        $region46: #{base_network_forward.2} parent=35 // pred_check_branch
          %287 = sbr.rel (%p285) target = $region48
        $region47: #{base_network_forward.2} parent=35 // pred_region
          %288 = dma.done %s281, 64
        $region48: #{base_network_forward.2} parent=35 // pred_fallthru
          _
        %p289 = pneg %p42
        %p290 = pneg %p39
        %s291 = sand.u32 %s55, 1
        %s292 = scalar_lea.sflag [#allocation4], %s291
        %s293 = sand.u32 %s55, 1
        %s294 = smul.addr %s293, 512
        %s295 = scalar_lea.vmem [#allocation3], %s294
        %p296 = pneg %p68
        %p297 = pneg %p65
        %s298 = sand.u32 %s26, 1
        %s299 = scalar_lea.sflag [#allocation7], %s298
        %s300 = sand.u32 %s81, 1
        %s301 = smul.addr %s300, 512
        %s302 = scalar_lea.vmem [#allocation6], %s301
        %p303 = pneg %p94
        %p304 = pneg %p91
        %s305 = sand.u32 %s26, 1
        %s306 = scalar_lea.sflag [#allocation7], %s305
        %s307 = sand.u32 %s107, 1
        %s308 = smul.addr %s307, 4
        %s309 = scalar_lea.vmem [#allocation8], %s308
        %p310 = pneg %p120
        %p311 = pneg %p117
        %p312 = pneg %p146
        %p313 = pneg %p143
        %s314 = sand.u32 %s133, 1
        %s315 = sand.u32 %s133, 1
        %s316 = smul.addr %s315, 64
        %s317 = scalar_lea.vmem [#allocation9], %s316
        %p318 = pneg %p172
        %p319 = pneg %p169
        %s320 = sand.u32 %s159, 1
        %s321 = scalar_lea.sflag [#allocation5], %s320
        %s322 = sand.u32 %s159, 1
        %s323 = smul.addr %s322, 8
        %s324 = scalar_lea.vmem [#allocation10], %s323
        %v325 = vld [vmem:[%s0] sm:$0xff]
        %v326 = vld [vmem:[%s0 + $0x8] sm:$0xff]
        %v327 = vld [vmem:[%s0 + $0x10] sm:$0xff]
        %v328 = vld [vmem:[%s0 + $0x18] sm:$0xff]
        %v329 = vld [vmem:[%s0 + $0x20] sm:$0xff]
        %v330 = vld [vmem:[%s0 + $0x28] sm:$0xff]
        %v331 = vld [vmem:[%s0 + $0x30] sm:$0xff]
        %v332 = vld [vmem:[%s0 + $0x38] sm:$0xff]
        %v333 = vld [vmem:[%s266] sm:$0xff]
        %v334 = vld [vmem:[%s266 + $0x8] sm:$0xff]
        %v335 = vld [vmem:[%s266 + $0x10] sm:$0xff]
        %v336 = vld [vmem:[%s266 + $0x18] sm:$0xff]
        %v337 = vld [vmem:[%s266 + $0x20] sm:$0xff]
        %v338 = vld [vmem:[%s266 + $0x28] sm:$0xff]
        %v339 = vld [vmem:[%s266 + $0x30] sm:$0xff]
        %v340 = vld [vmem:[%s266 + $0x38] sm:$0xff]
        %v341 = vld [vmem:[%s266 + $0x40] sm:$0xff]
        %v342 = vld [vmem:[%s266 + $0x48] sm:$0xff]
        %v343 = vld [vmem:[%s266 + $0x50] sm:$0xff]
        %v344 = vld [vmem:[%s266 + $0x58] sm:$0xff]
        %v345 = vld [vmem:[%s266 + $0x60] sm:$0xff]
        %v346 = vld [vmem:[%s266 + $0x68] sm:$0xff]
        %v347 = vld [vmem:[%s266 + $0x70] sm:$0xff]
        %v348 = vld [vmem:[%s266 + $0x78] sm:$0xff]
        %v349 = vld [vmem:[%s266 + $0x80] sm:$0xff]
        %v350 = vld [vmem:[%s266 + $0x88] sm:$0xff]
        %v351 = vld [vmem:[%s266 + $0x90] sm:$0xff]
        %v352 = vld [vmem:[%s266 + $0x98] sm:$0xff]
        %v353 = vld [vmem:[%s266 + $0xa0] sm:$0xff]
        %v354 = vld [vmem:[%s266 + $0xa8] sm:$0xff]
        %v355 = vld [vmem:[%s266 + $0xb0] sm:$0xff]
        %v356 = vld [vmem:[%s266 + $0xb8] sm:$0xff]
        %v357 = vld [vmem:[%s266 + $0xc0] sm:$0xff]
        %v358 = vld [vmem:[%s266 + $0xc8] sm:$0xff]
        %v359 = vld [vmem:[%s266 + $0xd0] sm:$0xff]
        %v360 = vld [vmem:[%s266 + $0xd8] sm:$0xff]
        %v361 = vld [vmem:[%s266 + $0xe0] sm:$0xff]
        %v362 = vld [vmem:[%s266 + $0xe8] sm:$0xff]
        %v363 = vld [vmem:[%s266 + $0xf0] sm:$0xff]
        %v364 = vld [vmem:[%s266 + $0xf8] sm:$0xff]
        %v365 = vld [vmem:[%s266 + $0x100] sm:$0xff]
        %v366 = vld [vmem:[%s266 + $0x108] sm:$0xff]
        %v367 = vld [vmem:[%s266 + $0x110] sm:$0xff]
        %v368 = vld [vmem:[%s266 + $0x118] sm:$0xff]
        %v369 = vld [vmem:[%s266 + $0x120] sm:$0xff]
        %v370 = vld [vmem:[%s266 + $0x128] sm:$0xff]
        %v371 = vld [vmem:[%s266 + $0x130] sm:$0xff]
        %v372 = vld [vmem:[%s266 + $0x138] sm:$0xff]
        %v373 = vld [vmem:[%s266 + $0x140] sm:$0xff]
        %v374 = vld [vmem:[%s266 + $0x148] sm:$0xff]
        %v375 = vld [vmem:[%s266 + $0x150] sm:$0xff]
        %v376 = vld [vmem:[%s266 + $0x158] sm:$0xff]
        %v377 = vld [vmem:[%s266 + $0x160] sm:$0xff]
        %v378 = vld [vmem:[%s266 + $0x168] sm:$0xff]
        %v379 = vld [vmem:[%s266 + $0x170] sm:$0xff]
        %v380 = vld [vmem:[%s266 + $0x178] sm:$0xff]
        %v381 = vld [vmem:[%s266 + $0x180] sm:$0xff]
        %v382 = vld [vmem:[%s266 + $0x188] sm:$0xff]
        %v383 = vld [vmem:[%s266 + $0x190] sm:$0xff]
        %v384 = vld [vmem:[%s266 + $0x198] sm:$0xff]
        %v385 = vld [vmem:[%s266 + $0x1a0] sm:$0xff]
        %v386 = vld [vmem:[%s266 + $0x1a8] sm:$0xff]
        %v387 = vld [vmem:[%s266 + $0x1b0] sm:$0xff]
        %v388 = vld [vmem:[%s266 + $0x1b8] sm:$0xff]
        %v389 = vld [vmem:[%s266 + $0x1c0] sm:$0xff]
        %v390 = vld [vmem:[%s266 + $0x1c8] sm:$0xff]
        %v391 = vld [vmem:[%s266 + $0x1d0] sm:$0xff]
        %v392 = vld [vmem:[%s266 + $0x1d8] sm:$0xff]
        %v393 = vld [vmem:[%s266 + $0x1e0] sm:$0xff]
        %v394 = vld [vmem:[%s266 + $0x1e8] sm:$0xff]
        %v395 = vld [vmem:[%s266 + $0x1f0] sm:$0xff]
        %v396 = vld [vmem:[%s266 + $0x1f8] sm:$0xff]
        %v397 = vld [vmem:[%s284] sm:$0xf]
        %v399 = vlaneseq
        %v400 = vshrl.u32 %v399, 7
        %v401 = vsub.s32 0, %v400
        %v402 = vrot.slane %v397, %v401
        %v403 = vlaneseq
        %v404 = vshrl.u32 %v403, 7
        %v405 = vsub.s32 1, %v404
        %v406 = vrot.slane %v397, %v405
        %v407 = vlaneseq
        %v408 = vshrl.u32 %v407, 7
        %v409 = vsub.s32 2, %v408
        %v410 = vrot.slane %v397, %v409
        %v411 = vlaneseq
        %v412 = vshrl.u32 %v411, 7
        %v413 = vsub.s32 3, %v412
        %v414 = vrot.slane %v397, %v413
        %419 = vmatprep.subr.mxu0 %v394
        %420 = vmatpush1.msra.mxu0 %v393
        %421 = vmatprep.subr.mxu0 %v390
        %422 = vmatpush1.msra.mxu0 %v389
        %423 = vmatprep.subr.mxu0 %v386
        %424 = vmatpush1.msra.mxu0 %v385
        %425 = vmatprep.subr.mxu0 %v382
        %426 = vmatpush1.msra.mxu0 %v381
        %427 = vmatprep.subr.mxu0 %v378
        %428 = vmatpush1.msra.mxu0 %v377
        %429 = vmatprep.subr.mxu0 %v374
        %430 = vmatpush1.msra.mxu0 %v373
        %431 = vmatprep.subr.mxu0 %v370
        %432 = vmatpush1.msra.mxu0 %v369
        %433 = vmatprep.subr.mxu0 %v366
        %434 = vmatpush1.msra.mxu0 %v365
        %435 = vmatprep.subr.mxu0 %v362
        %436 = vmatpush1.msra.mxu0 %v361
        %437 = vmatprep.subr.mxu0 %v358
        %438 = vmatpush1.msra.mxu0 %v357
        %439 = vmatprep.subr.mxu0 %v354
        %440 = vmatpush1.msra.mxu0 %v353
        %441 = vmatprep.subr.mxu0 %v350
        %442 = vmatpush1.msra.mxu0 %v349
        %443 = vmatprep.subr.mxu0 %v346
        %444 = vmatpush1.msra.mxu0 %v345
        %445 = vmatprep.subr.mxu0 %v342
        %446 = vmatpush1.msra.mxu0 %v341
        %447 = vmatprep.subr.mxu0 %v338
        %448 = vmatpush1.msra.mxu0 %v337
        %449 = vmatprep.subr.mxu0 %v334
        %450 = vmatpush1.msra.mxu0 %v333
        %451 = vmatprep.subr.mxu0 0.0
        %452 = vmatpush2.msra.mxu0 0.0
        %453 = vmatprep.subr.mxu0 0.0
        %454 = vmatpush2.msra.mxu0 0.0
        %455 = vmatprep.subr.mxu0 0.0
        %456 = vmatpush2.msra.mxu0 0.0
        %457 = vmatprep.subr.mxu0 0.0
        %458 = vmatpush2.msra.mxu0 0.0
        %459 = vmatprep.subr.mxu0 0.0
        %460 = vmatpush2.msra.mxu0 0.0
        %461 = vmatprep.subr.mxu0 0.0
        %462 = vmatpush2.msra.mxu0 0.0
        %463 = vmatprep.subr.mxu0 0.0
        %464 = vmatpush2.msra.mxu0 0.0
        %465 = vmatprep.subr.mxu0 0.0
        %466 = vmatpush2.msra.mxu0 0.0
        %467 = vmatprep.subr.mxu0 0.0
        %468 = vmatpush2.msra.mxu0 0.0
        %469 = vmatprep.subr.mxu0 0.0
        %470 = vmatpush2.msra.mxu0 0.0
        %471 = vmatprep.subr.mxu0 0.0
        %472 = vmatpush2.msra.mxu0 0.0
        %473 = vmatprep.subr.mxu0 0.0
        %474 = vmatpush2.msra.mxu0 0.0
        %475 = vmatprep.subr.mxu0 0.0
        %476 = vmatpush2.msra.mxu0 0.0
        %477 = vmatprep.subr.mxu0 0.0
        %478 = vmatpush2.msra.mxu0 0.0
        %479 = vmatprep.subr.mxu0 0.0
        %480 = vmatpush2.msra.mxu0 0.0
        %481 = vmatprep.subr.mxu0 0.0
        %482 = vmatpush2.msra.mxu0 0.0
        %483 = vmatprep.mubr.f32.mxu0 0.0
        %484 = vmatmul.mubr.f32.gmra.mxu0 %v325
        %v485 = vpop.f32.mrf.mxu0
        %v486 = vadd.f32 %v402, %v485
        %v487 = vpop.f32.mrf.mxu0
        %v488 = vadd.f32 %v406, %v487
        %489 = vmatprep.mubr.f32.mxu0 0.0
        %490 = vmatmul.mubr.f32.gmra.mxu0 %v326
        %v491 = vpop.f32.mrf.mxu0
        %v492 = vadd.f32 %v402, %v491
        %v493 = vpop.f32.mrf.mxu0
        %v494 = vadd.f32 %v406, %v493
        %495 = vmatprep.mubr.f32.mxu0 0.0
        %496 = vmatmul.mubr.f32.gmra.mxu0 %v327
        %v497 = vpop.f32.mrf.mxu0
        %v498 = vadd.f32 %v402, %v497
        %v499 = vpop.f32.mrf.mxu0
        %v500 = vadd.f32 %v406, %v499
        %501 = vmatprep.mubr.f32.mxu0 0.0
        %502 = vmatmul.mubr.f32.gmra.mxu0 %v328
        %v503 = vpop.f32.mrf.mxu0
        %v504 = vadd.f32 %v402, %v503
        %v505 = vpop.f32.mrf.mxu0
        %v506 = vadd.f32 %v406, %v505
        %507 = vmatprep.mubr.f32.mxu0 0.0
        %508 = vmatmul.mubr.f32.gmra.mxu0 %v329
        %v509 = vpop.f32.mrf.mxu0
        %v510 = vadd.f32 %v402, %v509
        %v511 = vpop.f32.mrf.mxu0
        %v512 = vadd.f32 %v406, %v511
        %513 = vmatprep.mubr.f32.mxu0 0.0
        %514 = vmatmul.mubr.f32.gmra.mxu0 %v330
        %v515 = vpop.f32.mrf.mxu0
        %v516 = vadd.f32 %v402, %v515
        %v517 = vpop.f32.mrf.mxu0
        %v518 = vadd.f32 %v406, %v517
        %519 = vmatprep.mubr.f32.mxu0 0.0
        %520 = vmatmul.mubr.f32.gmra.mxu0 %v331
        %v521 = vpop.f32.mrf.mxu0
        %v522 = vadd.f32 %v402, %v521
        %v523 = vpop.f32.mrf.mxu0
        %v524 = vadd.f32 %v406, %v523
        %525 = vmatprep.mubr.f32.mxu0 0.0
        %526 = vmatmul.mubr.f32.gmra.mxu0 %v332
        %v527 = vpop.f32.mrf.mxu0
        %v528 = vadd.f32 %v402, %v527
        %v529 = vpop.f32.mrf.mxu0
        %v530 = vadd.f32 %v406, %v529
        %531 = vdwg.mxu0
        %532 = vmatprep.subr.mxu0 %v396
        %533 = vmatpush1.msra.mxu0 %v395
        %534 = vmatprep.subr.mxu0 %v392
        %535 = vmatpush1.msra.mxu0 %v391
        %536 = vmatprep.subr.mxu0 %v388
        %537 = vmatpush1.msra.mxu0 %v387
        %538 = vmatprep.subr.mxu0 %v384
        %539 = vmatpush1.msra.mxu0 %v383
        %540 = vmatprep.subr.mxu0 %v380
        %541 = vmatpush1.msra.mxu0 %v379
        %542 = vmatprep.subr.mxu0 %v376
        %543 = vmatpush1.msra.mxu0 %v375
        %544 = vmatprep.subr.mxu0 %v372
        %545 = vmatpush1.msra.mxu0 %v371
        %546 = vmatprep.subr.mxu0 %v368
        %547 = vmatpush1.msra.mxu0 %v367
        %548 = vmatprep.subr.mxu0 %v364
        %549 = vmatpush1.msra.mxu0 %v363
        %550 = vmatprep.subr.mxu0 %v360
        %551 = vmatpush1.msra.mxu0 %v359
        %552 = vmatprep.subr.mxu0 %v356
        %553 = vmatpush1.msra.mxu0 %v355
        %554 = vmatprep.subr.mxu0 %v352
        %555 = vmatpush1.msra.mxu0 %v351
        %556 = vmatprep.subr.mxu0 %v348
        %557 = vmatpush1.msra.mxu0 %v347
        %558 = vmatprep.subr.mxu0 %v344
        %559 = vmatpush1.msra.mxu0 %v343
        %560 = vmatprep.subr.mxu0 %v340
        %561 = vmatpush1.msra.mxu0 %v339
        %562 = vmatprep.subr.mxu0 %v336
        %563 = vmatpush1.msra.mxu0 %v335
        %564 = vmatprep.subr.mxu0 0.0
        %565 = vmatpush2.msra.mxu0 0.0
        %566 = vmatprep.subr.mxu0 0.0
        %567 = vmatpush2.msra.mxu0 0.0
        %568 = vmatprep.subr.mxu0 0.0
        %569 = vmatpush2.msra.mxu0 0.0
        %570 = vmatprep.subr.mxu0 0.0
        %571 = vmatpush2.msra.mxu0 0.0
        %572 = vmatprep.subr.mxu0 0.0
        %573 = vmatpush2.msra.mxu0 0.0
        %574 = vmatprep.subr.mxu0 0.0
        %575 = vmatpush2.msra.mxu0 0.0
        %576 = vmatprep.subr.mxu0 0.0
        %577 = vmatpush2.msra.mxu0 0.0
        %578 = vmatprep.subr.mxu0 0.0
        %579 = vmatpush2.msra.mxu0 0.0
        %580 = vmatprep.subr.mxu0 0.0
        %581 = vmatpush2.msra.mxu0 0.0
        %582 = vmatprep.subr.mxu0 0.0
        %583 = vmatpush2.msra.mxu0 0.0
        %584 = vmatprep.subr.mxu0 0.0
        %585 = vmatpush2.msra.mxu0 0.0
        %586 = vmatprep.subr.mxu0 0.0
        %587 = vmatpush2.msra.mxu0 0.0
        %588 = vmatprep.subr.mxu0 0.0
        %589 = vmatpush2.msra.mxu0 0.0
        %590 = vmatprep.subr.mxu0 0.0
        %591 = vmatpush2.msra.mxu0 0.0
        %592 = vmatprep.subr.mxu0 0.0
        %593 = vmatpush2.msra.mxu0 0.0
        %594 = vmatprep.subr.mxu0 0.0
        %595 = vmatpush2.msra.mxu0 0.0
        %596 = vmatprep.mubr.f32.mxu0 0.0
        %597 = vmatmul.mubr.f32.gmra.mxu0 %v325
        %v598 = vpop.f32.mrf.mxu0
        %v599 = vadd.f32 %v410, %v598
        %v600 = vpop.f32.mrf.mxu0
        %v601 = vadd.f32 %v414, %v600
        %602 = vmatprep.mubr.f32.mxu0 0.0
        %603 = vmatmul.mubr.f32.gmra.mxu0 %v326
        %v604 = vpop.f32.mrf.mxu0
        %v605 = vadd.f32 %v410, %v604
        %v606 = vpop.f32.mrf.mxu0
        %v607 = vadd.f32 %v414, %v606
        %608 = vmatprep.mubr.f32.mxu0 0.0
        %609 = vmatmul.mubr.f32.gmra.mxu0 %v327
        %v610 = vpop.f32.mrf.mxu0
        %v611 = vadd.f32 %v410, %v610
        %v612 = vpop.f32.mrf.mxu0
        %v613 = vadd.f32 %v414, %v612
        %614 = vmatprep.mubr.f32.mxu0 0.0
        %615 = vmatmul.mubr.f32.gmra.mxu0 %v328
        %v616 = vpop.f32.mrf.mxu0
        %v617 = vadd.f32 %v410, %v616
        %v618 = vpop.f32.mrf.mxu0
        %v619 = vadd.f32 %v414, %v618
        %620 = vmatprep.mubr.f32.mxu0 0.0
        %621 = vmatmul.mubr.f32.gmra.mxu0 %v329
        %v622 = vpop.f32.mrf.mxu0
        %v623 = vadd.f32 %v410, %v622
        %v624 = vpop.f32.mrf.mxu0
        %v625 = vadd.f32 %v414, %v624
        %626 = vmatprep.mubr.f32.mxu0 0.0
        %627 = vmatmul.mubr.f32.gmra.mxu0 %v330
        %v628 = vpop.f32.mrf.mxu0
        %v629 = vadd.f32 %v410, %v628
        %v630 = vpop.f32.mrf.mxu0
        %v631 = vadd.f32 %v414, %v630
        %632 = vmatprep.mubr.f32.mxu0 0.0
        %633 = vmatmul.mubr.f32.gmra.mxu0 %v331
        %v634 = vpop.f32.mrf.mxu0
        %v635 = vadd.f32 %v410, %v634
        %v636 = vpop.f32.mrf.mxu0
        %v637 = vadd.f32 %v414, %v636
        %638 = vmatprep.mubr.f32.mxu0 0.0
        %639 = vmatmul.mubr.f32.gmra.mxu0 %v332
        %v640 = vpop.f32.mrf.mxu0
        %v641 = vadd.f32 %v410, %v640
        %v642 = vpop.f32.mrf.mxu0
        %v643 = vadd.f32 %v414, %v642
        %644 = vdwg.mxu0
        %645 = vst [vmem:[#allocation2] sm:$0xff] %v486
        %646 = vst [vmem:[#allocation2 + $0x8] sm:$0xff] %v488
        %647 = vst [vmem:[#allocation2 + $0x10] sm:$0xff] %v599
        %648 = vst [vmem:[#allocation2 + $0x18] sm:$0xff] %v601
        %649 = vst [vmem:[#allocation2 + $0x20] sm:$0xff] %v492
        %650 = vst [vmem:[#allocation2 + $0x28] sm:$0xff] %v494
        %651 = vst [vmem:[#allocation2 + $0x30] sm:$0xff] %v605
        %652 = vst [vmem:[#allocation2 + $0x38] sm:$0xff] %v607
        %653 = vst [vmem:[#allocation2 + $0x40] sm:$0xff] %v498
        %654 = vst [vmem:[#allocation2 + $0x48] sm:$0xff] %v500
        %655 = vst [vmem:[#allocation2 + $0x50] sm:$0xff] %v611
        %656 = vst [vmem:[#allocation2 + $0x58] sm:$0xff] %v613
        %657 = vst [vmem:[#allocation2 + $0x60] sm:$0xff] %v504
        %658 = vst [vmem:[#allocation2 + $0x68] sm:$0xff] %v506
        %659 = vst [vmem:[#allocation2 + $0x70] sm:$0xff] %v617
        %660 = vst [vmem:[#allocation2 + $0x78] sm:$0xff] %v619
        %661 = vst [vmem:[#allocation2 + $0x80] sm:$0xff] %v510
        %662 = vst [vmem:[#allocation2 + $0x88] sm:$0xff] %v512
        %663 = vst [vmem:[#allocation2 + $0x90] sm:$0xff] %v623
        %664 = vst [vmem:[#allocation2 + $0x98] sm:$0xff] %v625
        %665 = vst [vmem:[#allocation2 + $0xa0] sm:$0xff] %v516
        %666 = vst [vmem:[#allocation2 + $0xa8] sm:$0xff] %v518
        %667 = vst [vmem:[#allocation2 + $0xb0] sm:$0xff] %v629
        %668 = vst [vmem:[#allocation2 + $0xb8] sm:$0xff] %v631
        %669 = vst [vmem:[#allocation2 + $0xc0] sm:$0xff] %v522
        %670 = vst [vmem:[#allocation2 + $0xc8] sm:$0xff] %v524
        %671 = vst [vmem:[#allocation2 + $0xd0] sm:$0xff] %v635
        %672 = vst [vmem:[#allocation2 + $0xd8] sm:$0xff] %v637
        %673 = vst [vmem:[#allocation2 + $0xe0] sm:$0xff] %v528
        %674 = vst [vmem:[#allocation2 + $0xe8] sm:$0xff] %v530
        %675 = vst [vmem:[#allocation2 + $0xf0] sm:$0xff] %v641
        %676 = vst [vmem:[#allocation2 + $0xf8] sm:$0xff] %v643
        %v677 = vld [vmem:[%s275] sm:$0xff]
        %v678 = vld [vmem:[%s275 + $0x8] sm:$0xff]
        %v679 = vld [vmem:[%s275 + $0x10] sm:$0xff]
        %v680 = vld [vmem:[%s275 + $0x18] sm:$0xff]
        %v681 = vld [vmem:[%s275 + $0x20] sm:$0xff]
        %v682 = vld [vmem:[%s275 + $0x28] sm:$0xff]
        %v683 = vld [vmem:[%s275 + $0x30] sm:$0xff]
        %v684 = vld [vmem:[%s275 + $0x38] sm:$0xff]
        %v685 = vld [vmem:[%s275 + $0x40] sm:$0xff]
        %v686 = vld [vmem:[%s275 + $0x48] sm:$0xff]
        %v687 = vld [vmem:[%s275 + $0x50] sm:$0xff]
        %v688 = vld [vmem:[%s275 + $0x58] sm:$0xff]
        %v689 = vld [vmem:[%s275 + $0x60] sm:$0xff]
        %v690 = vld [vmem:[%s275 + $0x68] sm:$0xff]
        %v691 = vld [vmem:[%s275 + $0x70] sm:$0xff]
        %v692 = vld [vmem:[%s275 + $0x78] sm:$0xff]
        %v693 = vld [vmem:[%s275 + $0x80] sm:$0xff]
        %v694 = vld [vmem:[%s275 + $0x88] sm:$0xff]
        %v695 = vld [vmem:[%s275 + $0x90] sm:$0xff]
        %v696 = vld [vmem:[%s275 + $0x98] sm:$0xff]
        %v697 = vld [vmem:[%s275 + $0xa0] sm:$0xff]
        %v698 = vld [vmem:[%s275 + $0xa8] sm:$0xff]
        %v699 = vld [vmem:[%s275 + $0xb0] sm:$0xff]
        %v700 = vld [vmem:[%s275 + $0xb8] sm:$0xff]
        %v701 = vld [vmem:[%s275 + $0xc0] sm:$0xff]
        %v702 = vld [vmem:[%s275 + $0xc8] sm:$0xff]
        %v703 = vld [vmem:[%s275 + $0xd0] sm:$0xff]
        %v704 = vld [vmem:[%s275 + $0xd8] sm:$0xff]
        %v705 = vld [vmem:[%s275 + $0xe0] sm:$0xff]
        %v706 = vld [vmem:[%s275 + $0xe8] sm:$0xff]
        %v707 = vld [vmem:[%s275 + $0xf0] sm:$0xff]
        %v708 = vld [vmem:[%s275 + $0xf8] sm:$0xff]
        %v709 = vld [vmem:[%s275 + $0x100] sm:$0xff]
        %v710 = vld [vmem:[%s275 + $0x108] sm:$0xff]
        %v711 = vld [vmem:[%s275 + $0x110] sm:$0xff]
        %v712 = vld [vmem:[%s275 + $0x118] sm:$0xff]
        %v713 = vld [vmem:[%s275 + $0x120] sm:$0xff]
        %v714 = vld [vmem:[%s275 + $0x128] sm:$0xff]
        %v715 = vld [vmem:[%s275 + $0x130] sm:$0xff]
        %v716 = vld [vmem:[%s275 + $0x138] sm:$0xff]
        %v717 = vld [vmem:[%s275 + $0x140] sm:$0xff]
        %v718 = vld [vmem:[%s275 + $0x148] sm:$0xff]
        %v719 = vld [vmem:[%s275 + $0x150] sm:$0xff]
        %v720 = vld [vmem:[%s275 + $0x158] sm:$0xff]
        %v721 = vld [vmem:[%s275 + $0x160] sm:$0xff]
        %v722 = vld [vmem:[%s275 + $0x168] sm:$0xff]
        %v723 = vld [vmem:[%s275 + $0x170] sm:$0xff]
        %v724 = vld [vmem:[%s275 + $0x178] sm:$0xff]
        %v725 = vld [vmem:[%s275 + $0x180] sm:$0xff]
        %v726 = vld [vmem:[%s275 + $0x188] sm:$0xff]
        %v727 = vld [vmem:[%s275 + $0x190] sm:$0xff]
        %v728 = vld [vmem:[%s275 + $0x198] sm:$0xff]
        %v729 = vld [vmem:[%s275 + $0x1a0] sm:$0xff]
        %v730 = vld [vmem:[%s275 + $0x1a8] sm:$0xff]
        %v731 = vld [vmem:[%s275 + $0x1b0] sm:$0xff]
        %v732 = vld [vmem:[%s275 + $0x1b8] sm:$0xff]
        %v733 = vld [vmem:[%s275 + $0x1c0] sm:$0xff]
        %v734 = vld [vmem:[%s275 + $0x1c8] sm:$0xff]
        %v735 = vld [vmem:[%s275 + $0x1d0] sm:$0xff]
        %v736 = vld [vmem:[%s275 + $0x1d8] sm:$0xff]
        %v737 = vld [vmem:[%s275 + $0x1e0] sm:$0xff]
        %v738 = vld [vmem:[%s275 + $0x1e8] sm:$0xff]
        %v739 = vld [vmem:[%s275 + $0x1f0] sm:$0xff]
        %v740 = vld [vmem:[%s275 + $0x1f8] sm:$0xff]
        %p741 = scmp.eq.s32.totalorder %s26, 0
        %s742 = scalar_select %p741, 0, 7
        %s743 = smul.u32 %s742, 4
        %s744 = smul.addr %s743, 8
        %s745 = scalar_lea.vmem [#allocation2], %s744
        %v746 = vld [vmem:[%s745] sm:$0xff]
        %v747 = vld [vmem:[%s745 + $0x8] sm:$0xff]
        %v748 = vld [vmem:[%s745 + $0x10] sm:$0xff]
        %v749 = vld [vmem:[%s745 + $0x18] sm:$0xff]
        %750 = vmatprep.subr.mxu0 %v738
        %751 = vmatpush1.msra.mxu0 %v737
        %752 = vmatprep.subr.mxu0 %v734
        %753 = vmatpush1.msra.mxu0 %v733
        %754 = vmatprep.subr.mxu0 %v730
        %755 = vmatpush1.msra.mxu0 %v729
        %756 = vmatprep.subr.mxu0 %v726
        %757 = vmatpush1.msra.mxu0 %v725
        %758 = vmatprep.subr.mxu0 %v722
        %759 = vmatpush1.msra.mxu0 %v721
        %760 = vmatprep.subr.mxu0 %v718
        %761 = vmatpush1.msra.mxu0 %v717
        %762 = vmatprep.subr.mxu0 %v714
        %763 = vmatpush1.msra.mxu0 %v713
        %764 = vmatprep.subr.mxu0 %v710
        %765 = vmatpush1.msra.mxu0 %v709
        %766 = vmatprep.subr.mxu0 %v706
        %767 = vmatpush1.msra.mxu0 %v705
        %768 = vmatprep.subr.mxu0 %v702
        %769 = vmatpush1.msra.mxu0 %v701
        %770 = vmatprep.subr.mxu0 %v698
        %771 = vmatpush1.msra.mxu0 %v697
        %772 = vmatprep.subr.mxu0 %v694
        %773 = vmatpush1.msra.mxu0 %v693
        %774 = vmatprep.subr.mxu0 %v690
        %775 = vmatpush1.msra.mxu0 %v689
        %776 = vmatprep.subr.mxu0 %v686
        %777 = vmatpush1.msra.mxu0 %v685
        %778 = vmatprep.subr.mxu0 %v682
        %779 = vmatpush1.msra.mxu0 %v681
        %780 = vmatprep.subr.mxu0 %v678
        %781 = vmatpush1.msra.mxu0 %v677
        %782 = vmatprep.subr.mxu0 0.0
        %783 = vmatpush2.msra.mxu0 0.0
        %784 = vmatprep.subr.mxu0 0.0
        %785 = vmatpush2.msra.mxu0 0.0
        %786 = vmatprep.subr.mxu0 0.0
        %787 = vmatpush2.msra.mxu0 0.0
        %788 = vmatprep.subr.mxu0 0.0
        %789 = vmatpush2.msra.mxu0 0.0
        %790 = vmatprep.subr.mxu0 0.0
        %791 = vmatpush2.msra.mxu0 0.0
        %792 = vmatprep.subr.mxu0 0.0
        %793 = vmatpush2.msra.mxu0 0.0
        %794 = vmatprep.subr.mxu0 0.0
        %795 = vmatpush2.msra.mxu0 0.0
        %796 = vmatprep.subr.mxu0 0.0
        %797 = vmatpush2.msra.mxu0 0.0
        %798 = vmatprep.subr.mxu0 0.0
        %799 = vmatpush2.msra.mxu0 0.0
        %800 = vmatprep.subr.mxu0 0.0
        %801 = vmatpush2.msra.mxu0 0.0
        %802 = vmatprep.subr.mxu0 0.0
        %803 = vmatpush2.msra.mxu0 0.0
        %804 = vmatprep.subr.mxu0 0.0
        %805 = vmatpush2.msra.mxu0 0.0
        %806 = vmatprep.subr.mxu0 0.0
        %807 = vmatpush2.msra.mxu0 0.0
        %808 = vmatprep.subr.mxu0 0.0
        %809 = vmatpush2.msra.mxu0 0.0
        %810 = vmatprep.subr.mxu0 0.0
        %811 = vmatpush2.msra.mxu0 0.0
        %812 = vmatprep.subr.mxu0 0.0
        %813 = vmatpush2.msra.mxu0 0.0
        %814 = vmatprep.mubr.f32.mxu0 0.0
        %815 = vmatmul.mubr.f32.gmra.mxu0 0.0
        %v816 = vpop.f32.mrf.mxu0
        %v817 = vadd.f32 0.0, %v816
        %v818 = vpop.f32.mrf.mxu0
        %v819 = vadd.f32 0.0, %v818
        %820 = vdwg.mxu0
        %821 = vmatprep.subr.mxu0 %v740
        %822 = vmatpush1.msra.mxu0 %v739
        %823 = vmatprep.subr.mxu0 %v736
        %824 = vmatpush1.msra.mxu0 %v735
        %825 = vmatprep.subr.mxu0 %v732
        %826 = vmatpush1.msra.mxu0 %v731
        %827 = vmatprep.subr.mxu0 %v728
        %828 = vmatpush1.msra.mxu0 %v727
        %829 = vmatprep.subr.mxu0 %v724
        %830 = vmatpush1.msra.mxu0 %v723
        %831 = vmatprep.subr.mxu0 %v720
        %832 = vmatpush1.msra.mxu0 %v719
        %833 = vmatprep.subr.mxu0 %v716
        %834 = vmatpush1.msra.mxu0 %v715
        %835 = vmatprep.subr.mxu0 %v712
        %836 = vmatpush1.msra.mxu0 %v711
        %837 = vmatprep.subr.mxu0 %v708
        %838 = vmatpush1.msra.mxu0 %v707
        %839 = vmatprep.subr.mxu0 %v704
        %840 = vmatpush1.msra.mxu0 %v703
        %841 = vmatprep.subr.mxu0 %v700
        %842 = vmatpush1.msra.mxu0 %v699
        %843 = vmatprep.subr.mxu0 %v696
        %844 = vmatpush1.msra.mxu0 %v695
        %845 = vmatprep.subr.mxu0 %v692
        %846 = vmatpush1.msra.mxu0 %v691
        %847 = vmatprep.subr.mxu0 %v688
        %848 = vmatpush1.msra.mxu0 %v687
        %849 = vmatprep.subr.mxu0 %v684
        %850 = vmatpush1.msra.mxu0 %v683
        %851 = vmatprep.subr.mxu0 %v680
        %852 = vmatpush1.msra.mxu0 %v679
        %853 = vmatprep.subr.mxu0 0.0
        %854 = vmatpush2.msra.mxu0 0.0
        %855 = vmatprep.subr.mxu0 0.0
        %856 = vmatpush2.msra.mxu0 0.0
        %857 = vmatprep.subr.mxu0 0.0
        %858 = vmatpush2.msra.mxu0 0.0
        %859 = vmatprep.subr.mxu0 0.0
        %860 = vmatpush2.msra.mxu0 0.0
        %861 = vmatprep.subr.mxu0 0.0
        %862 = vmatpush2.msra.mxu0 0.0
        %863 = vmatprep.subr.mxu0 0.0
        %864 = vmatpush2.msra.mxu0 0.0
        %865 = vmatprep.subr.mxu0 0.0
        %866 = vmatpush2.msra.mxu0 0.0
        %867 = vmatprep.subr.mxu0 0.0
        %868 = vmatpush2.msra.mxu0 0.0
        %869 = vmatprep.subr.mxu0 0.0
        %870 = vmatpush2.msra.mxu0 0.0
        %871 = vmatprep.subr.mxu0 0.0
        %872 = vmatpush2.msra.mxu0 0.0
        %873 = vmatprep.subr.mxu0 0.0
        %874 = vmatpush2.msra.mxu0 0.0
        %875 = vmatprep.subr.mxu0 0.0
        %876 = vmatpush2.msra.mxu0 0.0
        %877 = vmatprep.subr.mxu0 0.0
        %878 = vmatpush2.msra.mxu0 0.0
        %879 = vmatprep.subr.mxu0 0.0
        %880 = vmatpush2.msra.mxu0 0.0
        %881 = vmatprep.subr.mxu0 0.0
        %882 = vmatpush2.msra.mxu0 0.0
        %883 = vmatprep.subr.mxu0 0.0
        %884 = vmatpush2.msra.mxu0 0.0
        %885 = vmatprep.mubr.f32.mxu0 0.0
        %886 = vmatmul.mubr.f32.gmra.mxu0 0.0
        %v887 = vpop.f32.mrf.mxu0
        %v888 = vadd.f32 0.0, %v887
        %v889 = vpop.f32.mrf.mxu0
        %v890 = vadd.f32 0.0, %v889
        %891 = vdwg.mxu0
        %v892 = vadd.f32 %v746, %v817
        %v893 = vadd.f32 %v747, %v819
        %v894 = vadd.f32 %v748, %v888
        %v895 = vadd.f32 %v749, %v890
        %v896 = vxor.u32 %v892, 2147483648
        %v897 = vmul.f32 %v896, 1.442695
        %v898 = vpow.pop %v897
        %v899 = vadd.f32 %v898, 1.0
        %v900 = vrcp.pop %v899
        %v901 = vmul.f32 1.0, %v900
        %v902 = vxor.u32 %v893, 2147483648
        %v903 = vmul.f32 %v902, 1.442695
        %v904 = vpow.pop %v903
        %v905 = vadd.f32 %v904, 1.0
        %v906 = vrcp.pop %v905
        %v907 = vmul.f32 1.0, %v906
        %v908 = vtanh.pop %v894
        %v909 = vxor.u32 %v895, 2147483648
        %v910 = vmul.f32 %v909, 1.442695
        %v911 = vpow.pop %v910
        %v912 = vadd.f32 %v911, 1.0
        %v913 = vrcp.pop %v912
        %v914 = vmul.f32 1.0, %v913
        %v915 = vmul.f32 %v907, 0.0
        %v916 = vmul.f32 %v901, %v908
        %v917 = vadd.f32 %v915, %v916
        %v918 = vtanh.pop %v917
        %v919 = vmul.f32 %v914, %v918
        %s920 = smul.u32 %s742, 8
        %s921 = scalar_lea.vmem %s317, %s920 [#allocation9]
        %922 = vst [vmem:[%s921] sm:$0xff] %v919
        %s923 = scalar_select %p741, 1, 6
        %s924 = smul.u32 %s923, 4
        %s925 = smul.addr %s924, 8
        %s926 = scalar_lea.vmem [#allocation2], %s925
        %v927 = vld [vmem:[%s926] sm:$0xff]
        %v928 = vld [vmem:[%s926 + $0x8] sm:$0xff]
        %v929 = vld [vmem:[%s926 + $0x10] sm:$0xff]
        %v930 = vld [vmem:[%s926 + $0x18] sm:$0xff]
        %931 = vmatprep.subr.mxu0 %v738
        %932 = vmatpush1.msra.mxu0 %v737
        %933 = vmatprep.subr.mxu0 %v734
        %934 = vmatpush1.msra.mxu0 %v733
        %935 = vmatprep.subr.mxu0 %v730
        %936 = vmatpush1.msra.mxu0 %v729
        %937 = vmatprep.subr.mxu0 %v726
        %938 = vmatpush1.msra.mxu0 %v725
        %939 = vmatprep.subr.mxu0 %v722
        %940 = vmatpush1.msra.mxu0 %v721
        %941 = vmatprep.subr.mxu0 %v718
        %942 = vmatpush1.msra.mxu0 %v717
        %943 = vmatprep.subr.mxu0 %v714
        %944 = vmatpush1.msra.mxu0 %v713
        %945 = vmatprep.subr.mxu0 %v710
        %946 = vmatpush1.msra.mxu0 %v709
        %947 = vmatprep.subr.mxu0 %v706
        %948 = vmatpush1.msra.mxu0 %v705
        %949 = vmatprep.subr.mxu0 %v702
        %950 = vmatpush1.msra.mxu0 %v701
        %951 = vmatprep.subr.mxu0 %v698
        %952 = vmatpush1.msra.mxu0 %v697
        %953 = vmatprep.subr.mxu0 %v694
        %954 = vmatpush1.msra.mxu0 %v693
        %955 = vmatprep.subr.mxu0 %v690
        %956 = vmatpush1.msra.mxu0 %v689
        %957 = vmatprep.subr.mxu0 %v686
        %958 = vmatpush1.msra.mxu0 %v685
        %959 = vmatprep.subr.mxu0 %v682
        %960 = vmatpush1.msra.mxu0 %v681
        %961 = vmatprep.subr.mxu0 %v678
        %962 = vmatpush1.msra.mxu0 %v677
        %963 = vmatprep.subr.mxu0 0.0
        %964 = vmatpush2.msra.mxu0 0.0
        %965 = vmatprep.subr.mxu0 0.0
        %966 = vmatpush2.msra.mxu0 0.0
        %967 = vmatprep.subr.mxu0 0.0
        %968 = vmatpush2.msra.mxu0 0.0
        %969 = vmatprep.subr.mxu0 0.0
        %970 = vmatpush2.msra.mxu0 0.0
        %971 = vmatprep.subr.mxu0 0.0
        %972 = vmatpush2.msra.mxu0 0.0
        %973 = vmatprep.subr.mxu0 0.0
        %974 = vmatpush2.msra.mxu0 0.0
        %975 = vmatprep.subr.mxu0 0.0
        %976 = vmatpush2.msra.mxu0 0.0
        %977 = vmatprep.subr.mxu0 0.0
        %978 = vmatpush2.msra.mxu0 0.0
        %979 = vmatprep.subr.mxu0 0.0
        %980 = vmatpush2.msra.mxu0 0.0
        %981 = vmatprep.subr.mxu0 0.0
        %982 = vmatpush2.msra.mxu0 0.0
        %983 = vmatprep.subr.mxu0 0.0
        %984 = vmatpush2.msra.mxu0 0.0
        %985 = vmatprep.subr.mxu0 0.0
        %986 = vmatpush2.msra.mxu0 0.0
        %987 = vmatprep.subr.mxu0 0.0
        %988 = vmatpush2.msra.mxu0 0.0
        %989 = vmatprep.subr.mxu0 0.0
        %990 = vmatpush2.msra.mxu0 0.0
        %991 = vmatprep.subr.mxu0 0.0
        %992 = vmatpush2.msra.mxu0 0.0
        %993 = vmatprep.subr.mxu0 0.0
        %994 = vmatpush2.msra.mxu0 0.0
        %995 = vmatprep.mubr.f32.mxu0 0.0
        %996 = vmatmul.mubr.f32.gmra.mxu0 %v919
        %v997 = vpop.f32.mrf.mxu0
        %v998 = vadd.f32 0.0, %v997
        %v999 = vpop.f32.mrf.mxu0
        %v1000 = vadd.f32 0.0, %v999
        %1001 = vdwg.mxu0
        %1002 = vmatprep.subr.mxu0 %v740
        %1003 = vmatpush1.msra.mxu0 %v739
        %1004 = vmatprep.subr.mxu0 %v736
        %1005 = vmatpush1.msra.mxu0 %v735
        %1006 = vmatprep.subr.mxu0 %v732
        %1007 = vmatpush1.msra.mxu0 %v731
        %1008 = vmatprep.subr.mxu0 %v728
        %1009 = vmatpush1.msra.mxu0 %v727
        %1010 = vmatprep.subr.mxu0 %v724
        %1011 = vmatpush1.msra.mxu0 %v723
        %1012 = vmatprep.subr.mxu0 %v720
        %1013 = vmatpush1.msra.mxu0 %v719
        %1014 = vmatprep.subr.mxu0 %v716
        %1015 = vmatpush1.msra.mxu0 %v715
        %1016 = vmatprep.subr.mxu0 %v712
        %1017 = vmatpush1.msra.mxu0 %v711
        %1018 = vmatprep.subr.mxu0 %v708
        %1019 = vmatpush1.msra.mxu0 %v707
        %1020 = vmatprep.subr.mxu0 %v704
        %1021 = vmatpush1.msra.mxu0 %v703
        %1022 = vmatprep.subr.mxu0 %v700
        %1023 = vmatpush1.msra.mxu0 %v699
        %1024 = vmatprep.subr.mxu0 %v696
        %1025 = vmatpush1.msra.mxu0 %v695
        %1026 = vmatprep.subr.mxu0 %v692
        %1027 = vmatpush1.msra.mxu0 %v691
        %1028 = vmatprep.subr.mxu0 %v688
        %1029 = vmatpush1.msra.mxu0 %v687
        %1030 = vmatprep.subr.mxu0 %v684
        %1031 = vmatpush1.msra.mxu0 %v683
        %1032 = vmatprep.subr.mxu0 %v680
        %1033 = vmatpush1.msra.mxu0 %v679
        %1034 = vmatprep.subr.mxu0 0.0
        %1035 = vmatpush2.msra.mxu0 0.0
        %1036 = vmatprep.subr.mxu0 0.0
        %1037 = vmatpush2.msra.mxu0 0.0
        %1038 = vmatprep.subr.mxu0 0.0
        %1039 = vmatpush2.msra.mxu0 0.0
        %1040 = vmatprep.subr.mxu0 0.0
        %1041 = vmatpush2.msra.mxu0 0.0
        %1042 = vmatprep.subr.mxu0 0.0
        %1043 = vmatpush2.msra.mxu0 0.0
        %1044 = vmatprep.subr.mxu0 0.0
        %1045 = vmatpush2.msra.mxu0 0.0
        %1046 = vmatprep.subr.mxu0 0.0
        %1047 = vmatpush2.msra.mxu0 0.0
        %1048 = vmatprep.subr.mxu0 0.0
        %1049 = vmatpush2.msra.mxu0 0.0
        %1050 = vmatprep.subr.mxu0 0.0
        %1051 = vmatpush2.msra.mxu0 0.0
        %1052 = vmatprep.subr.mxu0 0.0
        %1053 = vmatpush2.msra.mxu0 0.0
        %1054 = vmatprep.subr.mxu0 0.0
        %1055 = vmatpush2.msra.mxu0 0.0
        %1056 = vmatprep.subr.mxu0 0.0
        %1057 = vmatpush2.msra.mxu0 0.0
        %1058 = vmatprep.subr.mxu0 0.0
        %1059 = vmatpush2.msra.mxu0 0.0
        %1060 = vmatprep.subr.mxu0 0.0
        %1061 = vmatpush2.msra.mxu0 0.0
        %1062 = vmatprep.subr.mxu0 0.0
        %1063 = vmatpush2.msra.mxu0 0.0
        %1064 = vmatprep.subr.mxu0 0.0
        %1065 = vmatpush2.msra.mxu0 0.0
        %1066 = vmatprep.mubr.f32.mxu0 0.0
        %1067 = vmatmul.mubr.f32.gmra.mxu0 %v919
        %v1068 = vpop.f32.mrf.mxu0
        %v1069 = vadd.f32 0.0, %v1068
        %v1070 = vpop.f32.mrf.mxu0
        %v1071 = vadd.f32 0.0, %v1070
        %1072 = vdwg.mxu0
        %v1073 = vadd.f32 %v927, %v998
        %v1074 = vadd.f32 %v928, %v1000
        %v1075 = vadd.f32 %v929, %v1069
        %v1076 = vadd.f32 %v930, %v1071
        %v1077 = vxor.u32 %v1073, 2147483648
        %v1078 = vmul.f32 %v1077, 1.442695
        %v1079 = vpow.pop %v1078
        %v1080 = vadd.f32 %v1079, 1.0
        %v1081 = vrcp.pop %v1080
        %v1082 = vmul.f32 1.0, %v1081
        %v1083 = vxor.u32 %v1074, 2147483648
        %v1084 = vmul.f32 %v1083, 1.442695
        %v1085 = vpow.pop %v1084
        %v1086 = vadd.f32 %v1085, 1.0
        %v1087 = vrcp.pop %v1086
        %v1088 = vmul.f32 1.0, %v1087
        %v1089 = vtanh.pop %v1075
        %v1090 = vxor.u32 %v1076, 2147483648
        %v1091 = vmul.f32 %v1090, 1.442695
        %v1092 = vpow.pop %v1091
        %v1093 = vadd.f32 %v1092, 1.0
        %v1094 = vrcp.pop %v1093
        %v1095 = vmul.f32 1.0, %v1094
        %v1096 = vmul.f32 %v1088, %v917
        %v1097 = vmul.f32 %v1082, %v1089
        %v1098 = vadd.f32 %v1096, %v1097
        %v1099 = vtanh.pop %v1098
        %v1100 = vmul.f32 %v1095, %v1099
        %s1101 = smul.u32 %s923, 8
        %s1102 = scalar_lea.vmem %s317, %s1101 [#allocation9]
        %1103 = vst [vmem:[%s1102] sm:$0xff] %v1100
        %s1104 = scalar_select %p741, 2, 5
        %s1105 = smul.u32 %s1104, 4
        %s1106 = smul.addr %s1105, 8
        %s1107 = scalar_lea.vmem [#allocation2], %s1106
        %v1108 = vld [vmem:[%s1107] sm:$0xff]
        %v1109 = vld [vmem:[%s1107 + $0x8] sm:$0xff]
        %v1110 = vld [vmem:[%s1107 + $0x10] sm:$0xff]
        %v1111 = vld [vmem:[%s1107 + $0x18] sm:$0xff]
        %1112 = vmatprep.subr.mxu0 %v738
        %1113 = vmatpush1.msra.mxu0 %v737
        %1114 = vmatprep.subr.mxu0 %v734
        %1115 = vmatpush1.msra.mxu0 %v733
        %1116 = vmatprep.subr.mxu0 %v730
        %1117 = vmatpush1.msra.mxu0 %v729
        %1118 = vmatprep.subr.mxu0 %v726
        %1119 = vmatpush1.msra.mxu0 %v725
        %1120 = vmatprep.subr.mxu0 %v722
        %1121 = vmatpush1.msra.mxu0 %v721
        %1122 = vmatprep.subr.mxu0 %v718
        %1123 = vmatpush1.msra.mxu0 %v717
        %1124 = vmatprep.subr.mxu0 %v714
        %1125 = vmatpush1.msra.mxu0 %v713
        %1126 = vmatprep.subr.mxu0 %v710
        %1127 = vmatpush1.msra.mxu0 %v709
        %1128 = vmatprep.subr.mxu0 %v706
        %1129 = vmatpush1.msra.mxu0 %v705
        %1130 = vmatprep.subr.mxu0 %v702
        %1131 = vmatpush1.msra.mxu0 %v701
        %1132 = vmatprep.subr.mxu0 %v698
        %1133 = vmatpush1.msra.mxu0 %v697
        %1134 = vmatprep.subr.mxu0 %v694
        %1135 = vmatpush1.msra.mxu0 %v693
        %1136 = vmatprep.subr.mxu0 %v690
        %1137 = vmatpush1.msra.mxu0 %v689
        %1138 = vmatprep.subr.mxu0 %v686
        %1139 = vmatpush1.msra.mxu0 %v685
        %1140 = vmatprep.subr.mxu0 %v682
        %1141 = vmatpush1.msra.mxu0 %v681
        %1142 = vmatprep.subr.mxu0 %v678
        %1143 = vmatpush1.msra.mxu0 %v677
        %1144 = vmatprep.subr.mxu0 0.0
        %1145 = vmatpush2.msra.mxu0 0.0
        %1146 = vmatprep.subr.mxu0 0.0
        %1147 = vmatpush2.msra.mxu0 0.0
        %1148 = vmatprep.subr.mxu0 0.0
        %1149 = vmatpush2.msra.mxu0 0.0
        %1150 = vmatprep.subr.mxu0 0.0
        %1151 = vmatpush2.msra.mxu0 0.0
        %1152 = vmatprep.subr.mxu0 0.0
        %1153 = vmatpush2.msra.mxu0 0.0
        %1154 = vmatprep.subr.mxu0 0.0
        %1155 = vmatpush2.msra.mxu0 0.0
        %1156 = vmatprep.subr.mxu0 0.0
        %1157 = vmatpush2.msra.mxu0 0.0
        %1158 = vmatprep.subr.mxu0 0.0
        %1159 = vmatpush2.msra.mxu0 0.0
        %1160 = vmatprep.subr.mxu0 0.0
        %1161 = vmatpush2.msra.mxu0 0.0
        %1162 = vmatprep.subr.mxu0 0.0
        %1163 = vmatpush2.msra.mxu0 0.0
        %1164 = vmatprep.subr.mxu0 0.0
        %1165 = vmatpush2.msra.mxu0 0.0
        %1166 = vmatprep.subr.mxu0 0.0
        %1167 = vmatpush2.msra.mxu0 0.0
        %1168 = vmatprep.subr.mxu0 0.0
        %1169 = vmatpush2.msra.mxu0 0.0
        %1170 = vmatprep.subr.mxu0 0.0
        %1171 = vmatpush2.msra.mxu0 0.0
        %1172 = vmatprep.subr.mxu0 0.0
        %1173 = vmatpush2.msra.mxu0 0.0
        %1174 = vmatprep.subr.mxu0 0.0
        %1175 = vmatpush2.msra.mxu0 0.0
        %1176 = vmatprep.mubr.f32.mxu0 0.0
        %1177 = vmatmul.mubr.f32.gmra.mxu0 %v1100
        %v1178 = vpop.f32.mrf.mxu0
        %v1179 = vadd.f32 0.0, %v1178
        %v1180 = vpop.f32.mrf.mxu0
        %v1181 = vadd.f32 0.0, %v1180
        %1182 = vdwg.mxu0
        %1183 = vmatprep.subr.mxu0 %v740
        %1184 = vmatpush1.msra.mxu0 %v739
        %1185 = vmatprep.subr.mxu0 %v736
        %1186 = vmatpush1.msra.mxu0 %v735
        %1187 = vmatprep.subr.mxu0 %v732
        %1188 = vmatpush1.msra.mxu0 %v731
        %1189 = vmatprep.subr.mxu0 %v728
        %1190 = vmatpush1.msra.mxu0 %v727
        %1191 = vmatprep.subr.mxu0 %v724
        %1192 = vmatpush1.msra.mxu0 %v723
        %1193 = vmatprep.subr.mxu0 %v720
        %1194 = vmatpush1.msra.mxu0 %v719
        %1195 = vmatprep.subr.mxu0 %v716
        %1196 = vmatpush1.msra.mxu0 %v715
        %1197 = vmatprep.subr.mxu0 %v712
        %1198 = vmatpush1.msra.mxu0 %v711
        %1199 = vmatprep.subr.mxu0 %v708
        %1200 = vmatpush1.msra.mxu0 %v707
        %1201 = vmatprep.subr.mxu0 %v704
        %1202 = vmatpush1.msra.mxu0 %v703
        %1203 = vmatprep.subr.mxu0 %v700
        %1204 = vmatpush1.msra.mxu0 %v699
        %1205 = vmatprep.subr.mxu0 %v696
        %1206 = vmatpush1.msra.mxu0 %v695
        %1207 = vmatprep.subr.mxu0 %v692
        %1208 = vmatpush1.msra.mxu0 %v691
        %1209 = vmatprep.subr.mxu0 %v688
        %1210 = vmatpush1.msra.mxu0 %v687
        %1211 = vmatprep.subr.mxu0 %v684
        %1212 = vmatpush1.msra.mxu0 %v683
        %1213 = vmatprep.subr.mxu0 %v680
        %1214 = vmatpush1.msra.mxu0 %v679
        %1215 = vmatprep.subr.mxu0 0.0
        %1216 = vmatpush2.msra.mxu0 0.0
        %1217 = vmatprep.subr.mxu0 0.0
        %1218 = vmatpush2.msra.mxu0 0.0
        %1219 = vmatprep.subr.mxu0 0.0
        %1220 = vmatpush2.msra.mxu0 0.0
        %1221 = vmatprep.subr.mxu0 0.0
        %1222 = vmatpush2.msra.mxu0 0.0
        %1223 = vmatprep.subr.mxu0 0.0
        %1224 = vmatpush2.msra.mxu0 0.0
        %1225 = vmatprep.subr.mxu0 0.0
        %1226 = vmatpush2.msra.mxu0 0.0
        %1227 = vmatprep.subr.mxu0 0.0
        %1228 = vmatpush2.msra.mxu0 0.0
        %1229 = vmatprep.subr.mxu0 0.0
        %1230 = vmatpush2.msra.mxu0 0.0
        %1231 = vmatprep.subr.mxu0 0.0
        %1232 = vmatpush2.msra.mxu0 0.0
        %1233 = vmatprep.subr.mxu0 0.0
        %1234 = vmatpush2.msra.mxu0 0.0
        %1235 = vmatprep.subr.mxu0 0.0
        %1236 = vmatpush2.msra.mxu0 0.0
        %1237 = vmatprep.subr.mxu0 0.0
        %1238 = vmatpush2.msra.mxu0 0.0
        %1239 = vmatprep.subr.mxu0 0.0
        %1240 = vmatpush2.msra.mxu0 0.0
        %1241 = vmatprep.subr.mxu0 0.0
        %1242 = vmatpush2.msra.mxu0 0.0
        %1243 = vmatprep.subr.mxu0 0.0
        %1244 = vmatpush2.msra.mxu0 0.0
        %1245 = vmatprep.subr.mxu0 0.0
        %1246 = vmatpush2.msra.mxu0 0.0
        %1247 = vmatprep.mubr.f32.mxu0 0.0
        %1248 = vmatmul.mubr.f32.gmra.mxu0 %v1100
        %v1249 = vpop.f32.mrf.mxu0
        %v1250 = vadd.f32 0.0, %v1249
        %v1251 = vpop.f32.mrf.mxu0
        %v1252 = vadd.f32 0.0, %v1251
        %1253 = vdwg.mxu0
        %v1254 = vadd.f32 %v1108, %v1179
        %v1255 = vadd.f32 %v1109, %v1181
        %v1256 = vadd.f32 %v1110, %v1250
        %v1257 = vadd.f32 %v1111, %v1252
        %v1258 = vxor.u32 %v1254, 2147483648
        %v1259 = vmul.f32 %v1258, 1.442695
        %v1260 = vpow.pop %v1259
        %v1261 = vadd.f32 %v1260, 1.0
        %v1262 = vrcp.pop %v1261
        %v1263 = vmul.f32 1.0, %v1262
        %v1264 = vxor.u32 %v1255, 2147483648
        %v1265 = vmul.f32 %v1264, 1.442695
        %v1266 = vpow.pop %v1265
        %v1267 = vadd.f32 %v1266, 1.0
        %v1268 = vrcp.pop %v1267
        %v1269 = vmul.f32 1.0, %v1268
        %v1270 = vtanh.pop %v1256
        %v1271 = vxor.u32 %v1257, 2147483648
        %v1272 = vmul.f32 %v1271, 1.442695
        %v1273 = vpow.pop %v1272
        %v1274 = vadd.f32 %v1273, 1.0
        %v1275 = vrcp.pop %v1274
        %v1276 = vmul.f32 1.0, %v1275
        %v1277 = vmul.f32 %v1269, %v1098
        %v1278 = vmul.f32 %v1263, %v1270
        %v1279 = vadd.f32 %v1277, %v1278
        %v1280 = vtanh.pop %v1279
        %v1281 = vmul.f32 %v1276, %v1280
        %s1282 = smul.u32 %s1104, 8
        %s1283 = scalar_lea.vmem %s317, %s1282 [#allocation9]
        %1284 = vst [vmem:[%s1283] sm:$0xff] %v1281
        %s1285 = scalar_select %p741, 3, 4
        %s1286 = smul.u32 %s1285, 4
        %s1287 = smul.addr %s1286, 8
        %s1288 = scalar_lea.vmem [#allocation2], %s1287
        %v1289 = vld [vmem:[%s1288] sm:$0xff]
        %v1290 = vld [vmem:[%s1288 + $0x8] sm:$0xff]
        %v1291 = vld [vmem:[%s1288 + $0x10] sm:$0xff]
        %v1292 = vld [vmem:[%s1288 + $0x18] sm:$0xff]
        %1293 = vmatprep.subr.mxu0 %v738
        %1294 = vmatpush1.msra.mxu0 %v737
        %1295 = vmatprep.subr.mxu0 %v734
        %1296 = vmatpush1.msra.mxu0 %v733
        %1297 = vmatprep.subr.mxu0 %v730
        %1298 = vmatpush1.msra.mxu0 %v729
        %1299 = vmatprep.subr.mxu0 %v726
        %1300 = vmatpush1.msra.mxu0 %v725
        %1301 = vmatprep.subr.mxu0 %v722
        %1302 = vmatpush1.msra.mxu0 %v721
        %1303 = vmatprep.subr.mxu0 %v718
        %1304 = vmatpush1.msra.mxu0 %v717
        %1305 = vmatprep.subr.mxu0 %v714
        %1306 = vmatpush1.msra.mxu0 %v713
        %1307 = vmatprep.subr.mxu0 %v710
        %1308 = vmatpush1.msra.mxu0 %v709
        %1309 = vmatprep.subr.mxu0 %v706
        %1310 = vmatpush1.msra.mxu0 %v705
        %1311 = vmatprep.subr.mxu0 %v702
        %1312 = vmatpush1.msra.mxu0 %v701
        %1313 = vmatprep.subr.mxu0 %v698
        %1314 = vmatpush1.msra.mxu0 %v697
        %1315 = vmatprep.subr.mxu0 %v694
        %1316 = vmatpush1.msra.mxu0 %v693
        %1317 = vmatprep.subr.mxu0 %v690
        %1318 = vmatpush1.msra.mxu0 %v689
        %1319 = vmatprep.subr.mxu0 %v686
        %1320 = vmatpush1.msra.mxu0 %v685
        %1321 = vmatprep.subr.mxu0 %v682
        %1322 = vmatpush1.msra.mxu0 %v681
        %1323 = vmatprep.subr.mxu0 %v678
        %1324 = vmatpush1.msra.mxu0 %v677
        %1325 = vmatprep.subr.mxu0 0.0
        %1326 = vmatpush2.msra.mxu0 0.0
        %1327 = vmatprep.subr.mxu0 0.0
        %1328 = vmatpush2.msra.mxu0 0.0
        %1329 = vmatprep.subr.mxu0 0.0
        %1330 = vmatpush2.msra.mxu0 0.0
        %1331 = vmatprep.subr.mxu0 0.0
        %1332 = vmatpush2.msra.mxu0 0.0
        %1333 = vmatprep.subr.mxu0 0.0
        %1334 = vmatpush2.msra.mxu0 0.0
        %1335 = vmatprep.subr.mxu0 0.0
        %1336 = vmatpush2.msra.mxu0 0.0
        %1337 = vmatprep.subr.mxu0 0.0
        %1338 = vmatpush2.msra.mxu0 0.0
        %1339 = vmatprep.subr.mxu0 0.0
        %1340 = vmatpush2.msra.mxu0 0.0
        %1341 = vmatprep.subr.mxu0 0.0
        %1342 = vmatpush2.msra.mxu0 0.0
        %1343 = vmatprep.subr.mxu0 0.0
        %1344 = vmatpush2.msra.mxu0 0.0
        %1345 = vmatprep.subr.mxu0 0.0
        %1346 = vmatpush2.msra.mxu0 0.0
        %1347 = vmatprep.subr.mxu0 0.0
        %1348 = vmatpush2.msra.mxu0 0.0
        %1349 = vmatprep.subr.mxu0 0.0
        %1350 = vmatpush2.msra.mxu0 0.0
        %1351 = vmatprep.subr.mxu0 0.0
        %1352 = vmatpush2.msra.mxu0 0.0
        %1353 = vmatprep.subr.mxu0 0.0
        %1354 = vmatpush2.msra.mxu0 0.0
        %1355 = vmatprep.subr.mxu0 0.0
        %1356 = vmatpush2.msra.mxu0 0.0
        %1357 = vmatprep.mubr.f32.mxu0 0.0
        %1358 = vmatmul.mubr.f32.gmra.mxu0 %v1281
        %v1359 = vpop.f32.mrf.mxu0
        %v1360 = vadd.f32 0.0, %v1359
        %v1361 = vpop.f32.mrf.mxu0
        %v1362 = vadd.f32 0.0, %v1361
        %1363 = vdwg.mxu0
        %1364 = vmatprep.subr.mxu0 %v740
        %1365 = vmatpush1.msra.mxu0 %v739
        %1366 = vmatprep.subr.mxu0 %v736
        %1367 = vmatpush1.msra.mxu0 %v735
        %1368 = vmatprep.subr.mxu0 %v732
        %1369 = vmatpush1.msra.mxu0 %v731
        %1370 = vmatprep.subr.mxu0 %v728
        %1371 = vmatpush1.msra.mxu0 %v727
        %1372 = vmatprep.subr.mxu0 %v724
        %1373 = vmatpush1.msra.mxu0 %v723
        %1374 = vmatprep.subr.mxu0 %v720
        %1375 = vmatpush1.msra.mxu0 %v719
        %1376 = vmatprep.subr.mxu0 %v716
        %1377 = vmatpush1.msra.mxu0 %v715
        %1378 = vmatprep.subr.mxu0 %v712
        %1379 = vmatpush1.msra.mxu0 %v711
        %1380 = vmatprep.subr.mxu0 %v708
        %1381 = vmatpush1.msra.mxu0 %v707
        %1382 = vmatprep.subr.mxu0 %v704
        %1383 = vmatpush1.msra.mxu0 %v703
        %1384 = vmatprep.subr.mxu0 %v700
        %1385 = vmatpush1.msra.mxu0 %v699
        %1386 = vmatprep.subr.mxu0 %v696
        %1387 = vmatpush1.msra.mxu0 %v695
        %1388 = vmatprep.subr.mxu0 %v692
        %1389 = vmatpush1.msra.mxu0 %v691
        %1390 = vmatprep.subr.mxu0 %v688
        %1391 = vmatpush1.msra.mxu0 %v687
        %1392 = vmatprep.subr.mxu0 %v684
        %1393 = vmatpush1.msra.mxu0 %v683
        %1394 = vmatprep.subr.mxu0 %v680
        %1395 = vmatpush1.msra.mxu0 %v679
        %1396 = vmatprep.subr.mxu0 0.0
        %1397 = vmatpush2.msra.mxu0 0.0
        %1398 = vmatprep.subr.mxu0 0.0
        %1399 = vmatpush2.msra.mxu0 0.0
        %1400 = vmatprep.subr.mxu0 0.0
        %1401 = vmatpush2.msra.mxu0 0.0
        %1402 = vmatprep.subr.mxu0 0.0
        %1403 = vmatpush2.msra.mxu0 0.0
        %1404 = vmatprep.subr.mxu0 0.0
        %1405 = vmatpush2.msra.mxu0 0.0
        %1406 = vmatprep.subr.mxu0 0.0
        %1407 = vmatpush2.msra.mxu0 0.0
        %1408 = vmatprep.subr.mxu0 0.0
        %1409 = vmatpush2.msra.mxu0 0.0
        %1410 = vmatprep.subr.mxu0 0.0
        %1411 = vmatpush2.msra.mxu0 0.0
        %1412 = vmatprep.subr.mxu0 0.0
        %1413 = vmatpush2.msra.mxu0 0.0
        %1414 = vmatprep.subr.mxu0 0.0
        %1415 = vmatpush2.msra.mxu0 0.0
        %1416 = vmatprep.subr.mxu0 0.0
        %1417 = vmatpush2.msra.mxu0 0.0
        %1418 = vmatprep.subr.mxu0 0.0
        %1419 = vmatpush2.msra.mxu0 0.0
        %1420 = vmatprep.subr.mxu0 0.0
        %1421 = vmatpush2.msra.mxu0 0.0
        %1422 = vmatprep.subr.mxu0 0.0
        %1423 = vmatpush2.msra.mxu0 0.0
        %1424 = vmatprep.subr.mxu0 0.0
        %1425 = vmatpush2.msra.mxu0 0.0
        %1426 = vmatprep.subr.mxu0 0.0
        %1427 = vmatpush2.msra.mxu0 0.0
        %1428 = vmatprep.mubr.f32.mxu0 0.0
        %1429 = vmatmul.mubr.f32.gmra.mxu0 %v1281
        %v1430 = vpop.f32.mrf.mxu0
        %v1431 = vadd.f32 0.0, %v1430
        %v1432 = vpop.f32.mrf.mxu0
        %v1433 = vadd.f32 0.0, %v1432
        %1434 = vdwg.mxu0
        %v1435 = vadd.f32 %v1289, %v1360
        %v1436 = vadd.f32 %v1290, %v1362
        %v1437 = vadd.f32 %v1291, %v1431
        %v1438 = vadd.f32 %v1292, %v1433
        %v1439 = vxor.u32 %v1435, 2147483648
        %v1440 = vmul.f32 %v1439, 1.442695
        %v1441 = vpow.pop %v1440
        %v1442 = vadd.f32 %v1441, 1.0
        %v1443 = vrcp.pop %v1442
        %v1444 = vmul.f32 1.0, %v1443
        %v1445 = vxor.u32 %v1436, 2147483648
        %v1446 = vmul.f32 %v1445, 1.442695
        %v1447 = vpow.pop %v1446
        %v1448 = vadd.f32 %v1447, 1.0
        %v1449 = vrcp.pop %v1448
        %v1450 = vmul.f32 1.0, %v1449
        %v1451 = vtanh.pop %v1437
        %v1452 = vxor.u32 %v1438, 2147483648
        %v1453 = vmul.f32 %v1452, 1.442695
        %v1454 = vpow.pop %v1453
        %v1455 = vadd.f32 %v1454, 1.0
        %v1456 = vrcp.pop %v1455
        %v1457 = vmul.f32 1.0, %v1456
        %v1458 = vmul.f32 %v1450, %v1279
        %v1459 = vmul.f32 %v1444, %v1451
        %v1460 = vadd.f32 %v1458, %v1459
        %v1461 = vtanh.pop %v1460
        %v1462 = vmul.f32 %v1457, %v1461
        %s1463 = smul.u32 %s1285, 8
        %s1464 = scalar_lea.vmem %s317, %s1463 [#allocation9]
        %1465 = vst [vmem:[%s1464] sm:$0xff] %v1462
        %s1466 = scalar_select %p741, 4, 3
        %s1467 = smul.u32 %s1466, 4
        %s1468 = smul.addr %s1467, 8
        %s1469 = scalar_lea.vmem [#allocation2], %s1468
        %v1470 = vld [vmem:[%s1469] sm:$0xff]
        %v1471 = vld [vmem:[%s1469 + $0x8] sm:$0xff]
        %v1472 = vld [vmem:[%s1469 + $0x10] sm:$0xff]
        %v1473 = vld [vmem:[%s1469 + $0x18] sm:$0xff]
        %1474 = vmatprep.subr.mxu0 %v738
        %1475 = vmatpush1.msra.mxu0 %v737
        %1476 = vmatprep.subr.mxu0 %v734
        %1477 = vmatpush1.msra.mxu0 %v733
        %1478 = vmatprep.subr.mxu0 %v730
        %1479 = vmatpush1.msra.mxu0 %v729
        %1480 = vmatprep.subr.mxu0 %v726
        %1481 = vmatpush1.msra.mxu0 %v725
        %1482 = vmatprep.subr.mxu0 %v722
        %1483 = vmatpush1.msra.mxu0 %v721
        %1484 = vmatprep.subr.mxu0 %v718
        %1485 = vmatpush1.msra.mxu0 %v717
        %1486 = vmatprep.subr.mxu0 %v714
        %1487 = vmatpush1.msra.mxu0 %v713
        %1488 = vmatprep.subr.mxu0 %v710
        %1489 = vmatpush1.msra.mxu0 %v709
        %1490 = vmatprep.subr.mxu0 %v706
        %1491 = vmatpush1.msra.mxu0 %v705
        %1492 = vmatprep.subr.mxu0 %v702
        %1493 = vmatpush1.msra.mxu0 %v701
        %1494 = vmatprep.subr.mxu0 %v698
        %1495 = vmatpush1.msra.mxu0 %v697
        %1496 = vmatprep.subr.mxu0 %v694
        %1497 = vmatpush1.msra.mxu0 %v693
        %1498 = vmatprep.subr.mxu0 %v690
        %1499 = vmatpush1.msra.mxu0 %v689
        %1500 = vmatprep.subr.mxu0 %v686
        %1501 = vmatpush1.msra.mxu0 %v685
        %1502 = vmatprep.subr.mxu0 %v682
        %1503 = vmatpush1.msra.mxu0 %v681
        %1504 = vmatprep.subr.mxu0 %v678
        %1505 = vmatpush1.msra.mxu0 %v677
        %1506 = vmatprep.subr.mxu0 0.0
        %1507 = vmatpush2.msra.mxu0 0.0
        %1508 = vmatprep.subr.mxu0 0.0
        %1509 = vmatpush2.msra.mxu0 0.0
        %1510 = vmatprep.subr.mxu0 0.0
        %1511 = vmatpush2.msra.mxu0 0.0
        %1512 = vmatprep.subr.mxu0 0.0
        %1513 = vmatpush2.msra.mxu0 0.0
        %1514 = vmatprep.subr.mxu0 0.0
        %1515 = vmatpush2.msra.mxu0 0.0
        %1516 = vmatprep.subr.mxu0 0.0
        %1517 = vmatpush2.msra.mxu0 0.0
        %1518 = vmatprep.subr.mxu0 0.0
        %1519 = vmatpush2.msra.mxu0 0.0
        %1520 = vmatprep.subr.mxu0 0.0
        %1521 = vmatpush2.msra.mxu0 0.0
        %1522 = vmatprep.subr.mxu0 0.0
        %1523 = vmatpush2.msra.mxu0 0.0
        %1524 = vmatprep.subr.mxu0 0.0
        %1525 = vmatpush2.msra.mxu0 0.0
        %1526 = vmatprep.subr.mxu0 0.0
        %1527 = vmatpush2.msra.mxu0 0.0
        %1528 = vmatprep.subr.mxu0 0.0
        %1529 = vmatpush2.msra.mxu0 0.0
        %1530 = vmatprep.subr.mxu0 0.0
        %1531 = vmatpush2.msra.mxu0 0.0
        %1532 = vmatprep.subr.mxu0 0.0
        %1533 = vmatpush2.msra.mxu0 0.0
        %1534 = vmatprep.subr.mxu0 0.0
        %1535 = vmatpush2.msra.mxu0 0.0
        %1536 = vmatprep.subr.mxu0 0.0
        %1537 = vmatpush2.msra.mxu0 0.0
        %1538 = vmatprep.mubr.f32.mxu0 0.0
        %1539 = vmatmul.mubr.f32.gmra.mxu0 %v1462
        %v1540 = vpop.f32.mrf.mxu0
        %v1541 = vadd.f32 0.0, %v1540
        %v1542 = vpop.f32.mrf.mxu0
        %v1543 = vadd.f32 0.0, %v1542
        %1544 = vdwg.mxu0
        %1545 = vmatprep.subr.mxu0 %v740
        %1546 = vmatpush1.msra.mxu0 %v739
        %1547 = vmatprep.subr.mxu0 %v736
        %1548 = vmatpush1.msra.mxu0 %v735
        %1549 = vmatprep.subr.mxu0 %v732
        %1550 = vmatpush1.msra.mxu0 %v731
        %1551 = vmatprep.subr.mxu0 %v728
        %1552 = vmatpush1.msra.mxu0 %v727
        %1553 = vmatprep.subr.mxu0 %v724
        %1554 = vmatpush1.msra.mxu0 %v723
        %1555 = vmatprep.subr.mxu0 %v720
        %1556 = vmatpush1.msra.mxu0 %v719
        %1557 = vmatprep.subr.mxu0 %v716
        %1558 = vmatpush1.msra.mxu0 %v715
        %1559 = vmatprep.subr.mxu0 %v712
        %1560 = vmatpush1.msra.mxu0 %v711
        %1561 = vmatprep.subr.mxu0 %v708
        %1562 = vmatpush1.msra.mxu0 %v707
        %1563 = vmatprep.subr.mxu0 %v704
        %1564 = vmatpush1.msra.mxu0 %v703
        %1565 = vmatprep.subr.mxu0 %v700
        %1566 = vmatpush1.msra.mxu0 %v699
        %1567 = vmatprep.subr.mxu0 %v696
        %1568 = vmatpush1.msra.mxu0 %v695
        %1569 = vmatprep.subr.mxu0 %v692
        %1570 = vmatpush1.msra.mxu0 %v691
        %1571 = vmatprep.subr.mxu0 %v688
        %1572 = vmatpush1.msra.mxu0 %v687
        %1573 = vmatprep.subr.mxu0 %v684
        %1574 = vmatpush1.msra.mxu0 %v683
        %1575 = vmatprep.subr.mxu0 %v680
        %1576 = vmatpush1.msra.mxu0 %v679
        %1577 = vmatprep.subr.mxu0 0.0
        %1578 = vmatpush2.msra.mxu0 0.0
        %1579 = vmatprep.subr.mxu0 0.0
        %1580 = vmatpush2.msra.mxu0 0.0
        %1581 = vmatprep.subr.mxu0 0.0
        %1582 = vmatpush2.msra.mxu0 0.0
        %1583 = vmatprep.subr.mxu0 0.0
        %1584 = vmatpush2.msra.mxu0 0.0
        %1585 = vmatprep.subr.mxu0 0.0
        %1586 = vmatpush2.msra.mxu0 0.0
        %1587 = vmatprep.subr.mxu0 0.0
        %1588 = vmatpush2.msra.mxu0 0.0
        %1589 = vmatprep.subr.mxu0 0.0
        %1590 = vmatpush2.msra.mxu0 0.0
        %1591 = vmatprep.subr.mxu0 0.0
        %1592 = vmatpush2.msra.mxu0 0.0
        %1593 = vmatprep.subr.mxu0 0.0
        %1594 = vmatpush2.msra.mxu0 0.0
        %1595 = vmatprep.subr.mxu0 0.0
        %1596 = vmatpush2.msra.mxu0 0.0
        %1597 = vmatprep.subr.mxu0 0.0
        %1598 = vmatpush2.msra.mxu0 0.0
        %1599 = vmatprep.subr.mxu0 0.0
        %1600 = vmatpush2.msra.mxu0 0.0
        %1601 = vmatprep.subr.mxu0 0.0
        %1602 = vmatpush2.msra.mxu0 0.0
        %1603 = vmatprep.subr.mxu0 0.0
        %1604 = vmatpush2.msra.mxu0 0.0
        %1605 = vmatprep.subr.mxu0 0.0
        %1606 = vmatpush2.msra.mxu0 0.0
        %1607 = vmatprep.subr.mxu0 0.0
        %1608 = vmatpush2.msra.mxu0 0.0
        %1609 = vmatprep.mubr.f32.mxu0 0.0
        %1610 = vmatmul.mubr.f32.gmra.mxu0 %v1462
        %v1611 = vpop.f32.mrf.mxu0
        %v1612 = vadd.f32 0.0, %v1611
        %v1613 = vpop.f32.mrf.mxu0
        %v1614 = vadd.f32 0.0, %v1613
        %1615 = vdwg.mxu0
        %v1616 = vadd.f32 %v1470, %v1541
        %v1617 = vadd.f32 %v1471, %v1543
        %v1618 = vadd.f32 %v1472, %v1612
        %v1619 = vadd.f32 %v1473, %v1614
        %v1620 = vxor.u32 %v1616, 2147483648
        %v1621 = vmul.f32 %v1620, 1.442695
        %v1622 = vpow.pop %v1621
        %v1623 = vadd.f32 %v1622, 1.0
        %v1624 = vrcp.pop %v1623
        %v1625 = vmul.f32 1.0, %v1624
        %v1626 = vxor.u32 %v1617, 2147483648
        %v1627 = vmul.f32 %v1626, 1.442695
        %v1628 = vpow.pop %v1627
        %v1629 = vadd.f32 %v1628, 1.0
        %v1630 = vrcp.pop %v1629
        %v1631 = vmul.f32 1.0, %v1630
        %v1632 = vtanh.pop %v1618
        %v1633 = vxor.u32 %v1619, 2147483648
        %v1634 = vmul.f32 %v1633, 1.442695
        %v1635 = vpow.pop %v1634
        %v1636 = vadd.f32 %v1635, 1.0
        %v1637 = vrcp.pop %v1636
        %v1638 = vmul.f32 1.0, %v1637
        %v1639 = vmul.f32 %v1631, %v1460
        %v1640 = vmul.f32 %v1625, %v1632
        %v1641 = vadd.f32 %v1639, %v1640
        %v1642 = vtanh.pop %v1641
        %v1643 = vmul.f32 %v1638, %v1642
        %s1644 = smul.u32 %s1466, 8
        %s1645 = scalar_lea.vmem %s317, %s1644 [#allocation9]
        %1646 = vst [vmem:[%s1645] sm:$0xff] %v1643
        %s1647 = scalar_select %p741, 5, 2
        %s1648 = smul.u32 %s1647, 4
        %s1649 = smul.addr %s1648, 8
        %s1650 = scalar_lea.vmem [#allocation2], %s1649
        %v1651 = vld [vmem:[%s1650] sm:$0xff]
        %v1652 = vld [vmem:[%s1650 + $0x8] sm:$0xff]
        %v1653 = vld [vmem:[%s1650 + $0x10] sm:$0xff]
        %v1654 = vld [vmem:[%s1650 + $0x18] sm:$0xff]
        %1655 = vmatprep.subr.mxu0 %v738
        %1656 = vmatpush1.msra.mxu0 %v737
        %1657 = vmatprep.subr.mxu0 %v734
        %1658 = vmatpush1.msra.mxu0 %v733
        %1659 = vmatprep.subr.mxu0 %v730
        %1660 = vmatpush1.msra.mxu0 %v729
        %1661 = vmatprep.subr.mxu0 %v726
        %1662 = vmatpush1.msra.mxu0 %v725
        %1663 = vmatprep.subr.mxu0 %v722
        %1664 = vmatpush1.msra.mxu0 %v721
        %1665 = vmatprep.subr.mxu0 %v718
        %1666 = vmatpush1.msra.mxu0 %v717
        %1667 = vmatprep.subr.mxu0 %v714
        %1668 = vmatpush1.msra.mxu0 %v713
        %1669 = vmatprep.subr.mxu0 %v710
        %1670 = vmatpush1.msra.mxu0 %v709
        %1671 = vmatprep.subr.mxu0 %v706
        %1672 = vmatpush1.msra.mxu0 %v705
        %1673 = vmatprep.subr.mxu0 %v702
        %1674 = vmatpush1.msra.mxu0 %v701
        %1675 = vmatprep.subr.mxu0 %v698
        %1676 = vmatpush1.msra.mxu0 %v697
        %1677 = vmatprep.subr.mxu0 %v694
        %1678 = vmatpush1.msra.mxu0 %v693
        %1679 = vmatprep.subr.mxu0 %v690
        %1680 = vmatpush1.msra.mxu0 %v689
        %1681 = vmatprep.subr.mxu0 %v686
        %1682 = vmatpush1.msra.mxu0 %v685
        %1683 = vmatprep.subr.mxu0 %v682
        %1684 = vmatpush1.msra.mxu0 %v681
        %1685 = vmatprep.subr.mxu0 %v678
        %1686 = vmatpush1.msra.mxu0 %v677
        %1687 = vmatprep.subr.mxu0 0.0
        %1688 = vmatpush2.msra.mxu0 0.0
        %1689 = vmatprep.subr.mxu0 0.0
        %1690 = vmatpush2.msra.mxu0 0.0
        %1691 = vmatprep.subr.mxu0 0.0
        %1692 = vmatpush2.msra.mxu0 0.0
        %1693 = vmatprep.subr.mxu0 0.0
        %1694 = vmatpush2.msra.mxu0 0.0
        %1695 = vmatprep.subr.mxu0 0.0
        %1696 = vmatpush2.msra.mxu0 0.0
        %1697 = vmatprep.subr.mxu0 0.0
        %1698 = vmatpush2.msra.mxu0 0.0
        %1699 = vmatprep.subr.mxu0 0.0
        %1700 = vmatpush2.msra.mxu0 0.0
        %1701 = vmatprep.subr.mxu0 0.0
        %1702 = vmatpush2.msra.mxu0 0.0
        %1703 = vmatprep.subr.mxu0 0.0
        %1704 = vmatpush2.msra.mxu0 0.0
        %1705 = vmatprep.subr.mxu0 0.0
        %1706 = vmatpush2.msra.mxu0 0.0
        %1707 = vmatprep.subr.mxu0 0.0
        %1708 = vmatpush2.msra.mxu0 0.0
        %1709 = vmatprep.subr.mxu0 0.0
        %1710 = vmatpush2.msra.mxu0 0.0
        %1711 = vmatprep.subr.mxu0 0.0
        %1712 = vmatpush2.msra.mxu0 0.0
        %1713 = vmatprep.subr.mxu0 0.0
        %1714 = vmatpush2.msra.mxu0 0.0
        %1715 = vmatprep.subr.mxu0 0.0
        %1716 = vmatpush2.msra.mxu0 0.0
        %1717 = vmatprep.subr.mxu0 0.0
        %1718 = vmatpush2.msra.mxu0 0.0
        %1719 = vmatprep.mubr.f32.mxu0 0.0
        %1720 = vmatmul.mubr.f32.gmra.mxu0 %v1643
        %v1721 = vpop.f32.mrf.mxu0
        %v1722 = vadd.f32 0.0, %v1721
        %v1723 = vpop.f32.mrf.mxu0
        %v1724 = vadd.f32 0.0, %v1723
        %1725 = vdwg.mxu0
        %1726 = vmatprep.subr.mxu0 %v740
        %1727 = vmatpush1.msra.mxu0 %v739
        %1728 = vmatprep.subr.mxu0 %v736
        %1729 = vmatpush1.msra.mxu0 %v735
        %1730 = vmatprep.subr.mxu0 %v732
        %1731 = vmatpush1.msra.mxu0 %v731
        %1732 = vmatprep.subr.mxu0 %v728
        %1733 = vmatpush1.msra.mxu0 %v727
        %1734 = vmatprep.subr.mxu0 %v724
        %1735 = vmatpush1.msra.mxu0 %v723
        %1736 = vmatprep.subr.mxu0 %v720
        %1737 = vmatpush1.msra.mxu0 %v719
        %1738 = vmatprep.subr.mxu0 %v716
        %1739 = vmatpush1.msra.mxu0 %v715
        %1740 = vmatprep.subr.mxu0 %v712
        %1741 = vmatpush1.msra.mxu0 %v711
        %1742 = vmatprep.subr.mxu0 %v708
        %1743 = vmatpush1.msra.mxu0 %v707
        %1744 = vmatprep.subr.mxu0 %v704
        %1745 = vmatpush1.msra.mxu0 %v703
        %1746 = vmatprep.subr.mxu0 %v700
        %1747 = vmatpush1.msra.mxu0 %v699
        %1748 = vmatprep.subr.mxu0 %v696
        %1749 = vmatpush1.msra.mxu0 %v695
        %1750 = vmatprep.subr.mxu0 %v692
        %1751 = vmatpush1.msra.mxu0 %v691
        %1752 = vmatprep.subr.mxu0 %v688
        %1753 = vmatpush1.msra.mxu0 %v687
        %1754 = vmatprep.subr.mxu0 %v684
        %1755 = vmatpush1.msra.mxu0 %v683
        %1756 = vmatprep.subr.mxu0 %v680
        %1757 = vmatpush1.msra.mxu0 %v679
        %1758 = vmatprep.subr.mxu0 0.0
        %1759 = vmatpush2.msra.mxu0 0.0
        %1760 = vmatprep.subr.mxu0 0.0
        %1761 = vmatpush2.msra.mxu0 0.0
        %1762 = vmatprep.subr.mxu0 0.0
        %1763 = vmatpush2.msra.mxu0 0.0
        %1764 = vmatprep.subr.mxu0 0.0
        %1765 = vmatpush2.msra.mxu0 0.0
        %1766 = vmatprep.subr.mxu0 0.0
        %1767 = vmatpush2.msra.mxu0 0.0
        %1768 = vmatprep.subr.mxu0 0.0
        %1769 = vmatpush2.msra.mxu0 0.0
        %1770 = vmatprep.subr.mxu0 0.0
        %1771 = vmatpush2.msra.mxu0 0.0
        %1772 = vmatprep.subr.mxu0 0.0
        %1773 = vmatpush2.msra.mxu0 0.0
        %1774 = vmatprep.subr.mxu0 0.0
        %1775 = vmatpush2.msra.mxu0 0.0
        %1776 = vmatprep.subr.mxu0 0.0
        %1777 = vmatpush2.msra.mxu0 0.0
        %1778 = vmatprep.subr.mxu0 0.0
        %1779 = vmatpush2.msra.mxu0 0.0
        %1780 = vmatprep.subr.mxu0 0.0
        %1781 = vmatpush2.msra.mxu0 0.0
        %1782 = vmatprep.subr.mxu0 0.0
        %1783 = vmatpush2.msra.mxu0 0.0
        %1784 = vmatprep.subr.mxu0 0.0
        %1785 = vmatpush2.msra.mxu0 0.0
        %1786 = vmatprep.subr.mxu0 0.0
        %1787 = vmatpush2.msra.mxu0 0.0
        %1788 = vmatprep.subr.mxu0 0.0
        %1789 = vmatpush2.msra.mxu0 0.0
        %1790 = vmatprep.mubr.f32.mxu0 0.0
        %1791 = vmatmul.mubr.f32.gmra.mxu0 %v1643
        %v1792 = vpop.f32.mrf.mxu0
        %v1793 = vadd.f32 0.0, %v1792
        %v1794 = vpop.f32.mrf.mxu0
        %v1795 = vadd.f32 0.0, %v1794
        %1796 = vdwg.mxu0
        %v1797 = vadd.f32 %v1651, %v1722
        %v1798 = vadd.f32 %v1652, %v1724
        %v1799 = vadd.f32 %v1653, %v1793
        %v1800 = vadd.f32 %v1654, %v1795
        %v1801 = vxor.u32 %v1797, 2147483648
        %v1802 = vmul.f32 %v1801, 1.442695
        %v1803 = vpow.pop %v1802
        %v1804 = vadd.f32 %v1803, 1.0
        %v1805 = vrcp.pop %v1804
        %v1806 = vmul.f32 1.0, %v1805
        %v1807 = vxor.u32 %v1798, 2147483648
        %v1808 = vmul.f32 %v1807, 1.442695
        %v1809 = vpow.pop %v1808
        %v1810 = vadd.f32 %v1809, 1.0
        %v1811 = vrcp.pop %v1810
        %v1812 = vmul.f32 1.0, %v1811
        %v1813 = vtanh.pop %v1799
        %v1814 = vxor.u32 %v1800, 2147483648
        %v1815 = vmul.f32 %v1814, 1.442695
        %v1816 = vpow.pop %v1815
        %v1817 = vadd.f32 %v1816, 1.0
        %v1818 = vrcp.pop %v1817
        %v1819 = vmul.f32 1.0, %v1818
        %v1820 = vmul.f32 %v1812, %v1641
        %v1821 = vmul.f32 %v1806, %v1813
        %v1822 = vadd.f32 %v1820, %v1821
        %v1823 = vtanh.pop %v1822
        %v1824 = vmul.f32 %v1819, %v1823
        %s1825 = smul.u32 %s1647, 8
        %s1826 = scalar_lea.vmem %s317, %s1825 [#allocation9]
        %1827 = vst [vmem:[%s1826] sm:$0xff] %v1824
        %s1828 = scalar_select %p741, 6, 1
        %s1829 = smul.u32 %s1828, 4
        %s1830 = smul.addr %s1829, 8
        %s1831 = scalar_lea.vmem [#allocation2], %s1830
        %v1832 = vld [vmem:[%s1831] sm:$0xff]
        %v1833 = vld [vmem:[%s1831 + $0x8] sm:$0xff]
        %v1834 = vld [vmem:[%s1831 + $0x10] sm:$0xff]
        %v1835 = vld [vmem:[%s1831 + $0x18] sm:$0xff]
        %1836 = vmatprep.subr.mxu0 %v738
        %1837 = vmatpush1.msra.mxu0 %v737
        %1838 = vmatprep.subr.mxu0 %v734
        %1839 = vmatpush1.msra.mxu0 %v733
        %1840 = vmatprep.subr.mxu0 %v730
        %1841 = vmatpush1.msra.mxu0 %v729
        %1842 = vmatprep.subr.mxu0 %v726
        %1843 = vmatpush1.msra.mxu0 %v725
        %1844 = vmatprep.subr.mxu0 %v722
        %1845 = vmatpush1.msra.mxu0 %v721
        %1846 = vmatprep.subr.mxu0 %v718
        %1847 = vmatpush1.msra.mxu0 %v717
        %1848 = vmatprep.subr.mxu0 %v714
        %1849 = vmatpush1.msra.mxu0 %v713
        %1850 = vmatprep.subr.mxu0 %v710
        %1851 = vmatpush1.msra.mxu0 %v709
        %1852 = vmatprep.subr.mxu0 %v706
        %1853 = vmatpush1.msra.mxu0 %v705
        %1854 = vmatprep.subr.mxu0 %v702
        %1855 = vmatpush1.msra.mxu0 %v701
        %1856 = vmatprep.subr.mxu0 %v698
        %1857 = vmatpush1.msra.mxu0 %v697
        %1858 = vmatprep.subr.mxu0 %v694
        %1859 = vmatpush1.msra.mxu0 %v693
        %1860 = vmatprep.subr.mxu0 %v690
        %1861 = vmatpush1.msra.mxu0 %v689
        %1862 = vmatprep.subr.mxu0 %v686
        %1863 = vmatpush1.msra.mxu0 %v685
        %1864 = vmatprep.subr.mxu0 %v682
        %1865 = vmatpush1.msra.mxu0 %v681
        %1866 = vmatprep.subr.mxu0 %v678
        %1867 = vmatpush1.msra.mxu0 %v677
        %1868 = vmatprep.subr.mxu0 0.0
        %1869 = vmatpush2.msra.mxu0 0.0
        %1870 = vmatprep.subr.mxu0 0.0
        %1871 = vmatpush2.msra.mxu0 0.0
        %1872 = vmatprep.subr.mxu0 0.0
        %1873 = vmatpush2.msra.mxu0 0.0
        %1874 = vmatprep.subr.mxu0 0.0
        %1875 = vmatpush2.msra.mxu0 0.0
        %1876 = vmatprep.subr.mxu0 0.0
        %1877 = vmatpush2.msra.mxu0 0.0
        %1878 = vmatprep.subr.mxu0 0.0
        %1879 = vmatpush2.msra.mxu0 0.0
        %1880 = vmatprep.subr.mxu0 0.0
        %1881 = vmatpush2.msra.mxu0 0.0
        %1882 = vmatprep.subr.mxu0 0.0
        %1883 = vmatpush2.msra.mxu0 0.0
        %1884 = vmatprep.subr.mxu0 0.0
        %1885 = vmatpush2.msra.mxu0 0.0
        %1886 = vmatprep.subr.mxu0 0.0
        %1887 = vmatpush2.msra.mxu0 0.0
        %1888 = vmatprep.subr.mxu0 0.0
        %1889 = vmatpush2.msra.mxu0 0.0
        %1890 = vmatprep.subr.mxu0 0.0
        %1891 = vmatpush2.msra.mxu0 0.0
        %1892 = vmatprep.subr.mxu0 0.0
        %1893 = vmatpush2.msra.mxu0 0.0
        %1894 = vmatprep.subr.mxu0 0.0
        %1895 = vmatpush2.msra.mxu0 0.0
        %1896 = vmatprep.subr.mxu0 0.0
        %1897 = vmatpush2.msra.mxu0 0.0
        %1898 = vmatprep.subr.mxu0 0.0
        %1899 = vmatpush2.msra.mxu0 0.0
        %1900 = vmatprep.mubr.f32.mxu0 0.0
        %1901 = vmatmul.mubr.f32.gmra.mxu0 %v1824
        %v1902 = vpop.f32.mrf.mxu0
        %v1903 = vadd.f32 0.0, %v1902
        %v1904 = vpop.f32.mrf.mxu0
        %v1905 = vadd.f32 0.0, %v1904
        %1906 = vdwg.mxu0
        %1907 = vmatprep.subr.mxu0 %v740
        %1908 = vmatpush1.msra.mxu0 %v739
        %1909 = vmatprep.subr.mxu0 %v736
        %1910 = vmatpush1.msra.mxu0 %v735
        %1911 = vmatprep.subr.mxu0 %v732
        %1912 = vmatpush1.msra.mxu0 %v731
        %1913 = vmatprep.subr.mxu0 %v728
        %1914 = vmatpush1.msra.mxu0 %v727
        %1915 = vmatprep.subr.mxu0 %v724
        %1916 = vmatpush1.msra.mxu0 %v723
        %1917 = vmatprep.subr.mxu0 %v720
        %1918 = vmatpush1.msra.mxu0 %v719
        %1919 = vmatprep.subr.mxu0 %v716
        %1920 = vmatpush1.msra.mxu0 %v715
        %1921 = vmatprep.subr.mxu0 %v712
        %1922 = vmatpush1.msra.mxu0 %v711
        %1923 = vmatprep.subr.mxu0 %v708
        %1924 = vmatpush1.msra.mxu0 %v707
        %1925 = vmatprep.subr.mxu0 %v704
        %1926 = vmatpush1.msra.mxu0 %v703
        %1927 = vmatprep.subr.mxu0 %v700
        %1928 = vmatpush1.msra.mxu0 %v699
        %1929 = vmatprep.subr.mxu0 %v696
        %1930 = vmatpush1.msra.mxu0 %v695
        %1931 = vmatprep.subr.mxu0 %v692
        %1932 = vmatpush1.msra.mxu0 %v691
        %1933 = vmatprep.subr.mxu0 %v688
        %1934 = vmatpush1.msra.mxu0 %v687
        %1935 = vmatprep.subr.mxu0 %v684
        %1936 = vmatpush1.msra.mxu0 %v683
        %1937 = vmatprep.subr.mxu0 %v680
        %1938 = vmatpush1.msra.mxu0 %v679
        %1939 = vmatprep.subr.mxu0 0.0
        %1940 = vmatpush2.msra.mxu0 0.0
        %1941 = vmatprep.subr.mxu0 0.0
        %1942 = vmatpush2.msra.mxu0 0.0
        %1943 = vmatprep.subr.mxu0 0.0
        %1944 = vmatpush2.msra.mxu0 0.0
        %1945 = vmatprep.subr.mxu0 0.0
        %1946 = vmatpush2.msra.mxu0 0.0
        %1947 = vmatprep.subr.mxu0 0.0
        %1948 = vmatpush2.msra.mxu0 0.0
        %1949 = vmatprep.subr.mxu0 0.0
        %1950 = vmatpush2.msra.mxu0 0.0
        %1951 = vmatprep.subr.mxu0 0.0
        %1952 = vmatpush2.msra.mxu0 0.0
        %1953 = vmatprep.subr.mxu0 0.0
        %1954 = vmatpush2.msra.mxu0 0.0
        %1955 = vmatprep.subr.mxu0 0.0
        %1956 = vmatpush2.msra.mxu0 0.0
        %1957 = vmatprep.subr.mxu0 0.0
        %1958 = vmatpush2.msra.mxu0 0.0
        %1959 = vmatprep.subr.mxu0 0.0
        %1960 = vmatpush2.msra.mxu0 0.0
        %1961 = vmatprep.subr.mxu0 0.0
        %1962 = vmatpush2.msra.mxu0 0.0
        %1963 = vmatprep.subr.mxu0 0.0
        %1964 = vmatpush2.msra.mxu0 0.0
        %1965 = vmatprep.subr.mxu0 0.0
        %1966 = vmatpush2.msra.mxu0 0.0
        %1967 = vmatprep.subr.mxu0 0.0
        %1968 = vmatpush2.msra.mxu0 0.0
        %1969 = vmatprep.subr.mxu0 0.0
        %1970 = vmatpush2.msra.mxu0 0.0
        %1971 = vmatprep.mubr.f32.mxu0 0.0
        %1972 = vmatmul.mubr.f32.gmra.mxu0 %v1824
        %v1973 = vpop.f32.mrf.mxu0
        %v1974 = vadd.f32 0.0, %v1973
        %v1975 = vpop.f32.mrf.mxu0
        %v1976 = vadd.f32 0.0, %v1975
        %1977 = vdwg.mxu0
        %v1978 = vadd.f32 %v1832, %v1903
        %v1979 = vadd.f32 %v1833, %v1905
        %v1980 = vadd.f32 %v1834, %v1974
        %v1981 = vadd.f32 %v1835, %v1976
        %v1982 = vxor.u32 %v1978, 2147483648
        %v1983 = vmul.f32 %v1982, 1.442695
        %v1984 = vpow.pop %v1983
        %v1985 = vadd.f32 %v1984, 1.0
        %v1986 = vrcp.pop %v1985
        %v1987 = vmul.f32 1.0, %v1986
        %v1988 = vxor.u32 %v1979, 2147483648
        %v1989 = vmul.f32 %v1988, 1.442695
        %v1990 = vpow.pop %v1989
        %v1991 = vadd.f32 %v1990, 1.0
        %v1992 = vrcp.pop %v1991
        %v1993 = vmul.f32 1.0, %v1992
        %v1994 = vtanh.pop %v1980
        %v1995 = vxor.u32 %v1981, 2147483648
        %v1996 = vmul.f32 %v1995, 1.442695
        %v1997 = vpow.pop %v1996
        %v1998 = vadd.f32 %v1997, 1.0
        %v1999 = vrcp.pop %v1998
        %v2000 = vmul.f32 1.0, %v1999
        %v2001 = vmul.f32 %v1993, %v1822
        %v2002 = vmul.f32 %v1987, %v1994
        %v2003 = vadd.f32 %v2001, %v2002
        %v2004 = vtanh.pop %v2003
        %v2005 = vmul.f32 %v2000, %v2004
        %s2006 = smul.u32 %s1828, 8
        %s2007 = scalar_lea.vmem %s317, %s2006 [#allocation9]
        %2008 = vst [vmem:[%s2007] sm:$0xff] %v2005
        %s2009 = scalar_select %p741, 7, 0
        %s2010 = smul.u32 %s2009, 4
        %s2011 = smul.addr %s2010, 8
        %s2012 = scalar_lea.vmem [#allocation2], %s2011
        %v2013 = vld [vmem:[%s2012] sm:$0xff]
        %v2014 = vld [vmem:[%s2012 + $0x8] sm:$0xff]
        %v2015 = vld [vmem:[%s2012 + $0x10] sm:$0xff]
        %v2016 = vld [vmem:[%s2012 + $0x18] sm:$0xff]
        %2017 = vmatprep.subr.mxu0 %v738
        %2018 = vmatpush1.msra.mxu0 %v737
        %2019 = vmatprep.subr.mxu0 %v734
        %2020 = vmatpush1.msra.mxu0 %v733
        %2021 = vmatprep.subr.mxu0 %v730
        %2022 = vmatpush1.msra.mxu0 %v729
        %2023 = vmatprep.subr.mxu0 %v726
        %2024 = vmatpush1.msra.mxu0 %v725
        %2025 = vmatprep.subr.mxu0 %v722
        %2026 = vmatpush1.msra.mxu0 %v721
        %2027 = vmatprep.subr.mxu0 %v718
        %2028 = vmatpush1.msra.mxu0 %v717
        %2029 = vmatprep.subr.mxu0 %v714
        %2030 = vmatpush1.msra.mxu0 %v713
        %2031 = vmatprep.subr.mxu0 %v710
        %2032 = vmatpush1.msra.mxu0 %v709
        %2033 = vmatprep.subr.mxu0 %v706
        %2034 = vmatpush1.msra.mxu0 %v705
        %2035 = vmatprep.subr.mxu0 %v702
        %2036 = vmatpush1.msra.mxu0 %v701
        %2037 = vmatprep.subr.mxu0 %v698
        %2038 = vmatpush1.msra.mxu0 %v697
        %2039 = vmatprep.subr.mxu0 %v694
        %2040 = vmatpush1.msra.mxu0 %v693
        %2041 = vmatprep.subr.mxu0 %v690
        %2042 = vmatpush1.msra.mxu0 %v689
        %2043 = vmatprep.subr.mxu0 %v686
        %2044 = vmatpush1.msra.mxu0 %v685
        %2045 = vmatprep.subr.mxu0 %v682
        %2046 = vmatpush1.msra.mxu0 %v681
        %2047 = vmatprep.subr.mxu0 %v678
        %2048 = vmatpush1.msra.mxu0 %v677
        %2049 = vmatprep.subr.mxu0 0.0
        %2050 = vmatpush2.msra.mxu0 0.0
        %2051 = vmatprep.subr.mxu0 0.0
        %2052 = vmatpush2.msra.mxu0 0.0
        %2053 = vmatprep.subr.mxu0 0.0
        %2054 = vmatpush2.msra.mxu0 0.0
        %2055 = vmatprep.subr.mxu0 0.0
        %2056 = vmatpush2.msra.mxu0 0.0
        %2057 = vmatprep.subr.mxu0 0.0
        %2058 = vmatpush2.msra.mxu0 0.0
        %2059 = vmatprep.subr.mxu0 0.0
        %2060 = vmatpush2.msra.mxu0 0.0
        %2061 = vmatprep.subr.mxu0 0.0
        %2062 = vmatpush2.msra.mxu0 0.0
        %2063 = vmatprep.subr.mxu0 0.0
        %2064 = vmatpush2.msra.mxu0 0.0
        %2065 = vmatprep.subr.mxu0 0.0
        %2066 = vmatpush2.msra.mxu0 0.0
        %2067 = vmatprep.subr.mxu0 0.0
        %2068 = vmatpush2.msra.mxu0 0.0
        %2069 = vmatprep.subr.mxu0 0.0
        %2070 = vmatpush2.msra.mxu0 0.0
        %2071 = vmatprep.subr.mxu0 0.0
        %2072 = vmatpush2.msra.mxu0 0.0
        %2073 = vmatprep.subr.mxu0 0.0
        %2074 = vmatpush2.msra.mxu0 0.0
        %2075 = vmatprep.subr.mxu0 0.0
        %2076 = vmatpush2.msra.mxu0 0.0
        %2077 = vmatprep.subr.mxu0 0.0
        %2078 = vmatpush2.msra.mxu0 0.0
        %2079 = vmatprep.subr.mxu0 0.0
        %2080 = vmatpush2.msra.mxu0 0.0
        %2081 = vmatprep.mubr.f32.mxu0 0.0
        %2082 = vmatmul.mubr.f32.gmra.mxu0 %v2005
        %v2083 = vpop.f32.mrf.mxu0
        %v2084 = vadd.f32 0.0, %v2083
        %v2085 = vpop.f32.mrf.mxu0
        %v2086 = vadd.f32 0.0, %v2085
        %2087 = vdwg.mxu0
        %2088 = vmatprep.subr.mxu0 %v740
        %2089 = vmatpush1.msra.mxu0 %v739
        %2090 = vmatprep.subr.mxu0 %v736
        %2091 = vmatpush1.msra.mxu0 %v735
        %2092 = vmatprep.subr.mxu0 %v732
        %2093 = vmatpush1.msra.mxu0 %v731
        %2094 = vmatprep.subr.mxu0 %v728
        %2095 = vmatpush1.msra.mxu0 %v727
        %2096 = vmatprep.subr.mxu0 %v724
        %2097 = vmatpush1.msra.mxu0 %v723
        %2098 = vmatprep.subr.mxu0 %v720
        %2099 = vmatpush1.msra.mxu0 %v719
        %2100 = vmatprep.subr.mxu0 %v716
        %2101 = vmatpush1.msra.mxu0 %v715
        %2102 = vmatprep.subr.mxu0 %v712
        %2103 = vmatpush1.msra.mxu0 %v711
        %2104 = vmatprep.subr.mxu0 %v708
        %2105 = vmatpush1.msra.mxu0 %v707
        %2106 = vmatprep.subr.mxu0 %v704
        %2107 = vmatpush1.msra.mxu0 %v703
        %2108 = vmatprep.subr.mxu0 %v700
        %2109 = vmatpush1.msra.mxu0 %v699
        %2110 = vmatprep.subr.mxu0 %v696
        %2111 = vmatpush1.msra.mxu0 %v695
        %2112 = vmatprep.subr.mxu0 %v692
        %2113 = vmatpush1.msra.mxu0 %v691
        %2114 = vmatprep.subr.mxu0 %v688
        %2115 = vmatpush1.msra.mxu0 %v687
        %2116 = vmatprep.subr.mxu0 %v684
        %2117 = vmatpush1.msra.mxu0 %v683
        %2118 = vmatprep.subr.mxu0 %v680
        %2119 = vmatpush1.msra.mxu0 %v679
        %2120 = vmatprep.subr.mxu0 0.0
        %2121 = vmatpush2.msra.mxu0 0.0
        %2122 = vmatprep.subr.mxu0 0.0
        %2123 = vmatpush2.msra.mxu0 0.0
        %2124 = vmatprep.subr.mxu0 0.0
        %2125 = vmatpush2.msra.mxu0 0.0
        %2126 = vmatprep.subr.mxu0 0.0
        %2127 = vmatpush2.msra.mxu0 0.0
        %2128 = vmatprep.subr.mxu0 0.0
        %2129 = vmatpush2.msra.mxu0 0.0
        %2130 = vmatprep.subr.mxu0 0.0
        %2131 = vmatpush2.msra.mxu0 0.0
        %2132 = vmatprep.subr.mxu0 0.0
        %2133 = vmatpush2.msra.mxu0 0.0
        %2134 = vmatprep.subr.mxu0 0.0
        %2135 = vmatpush2.msra.mxu0 0.0
        %2136 = vmatprep.subr.mxu0 0.0
        %2137 = vmatpush2.msra.mxu0 0.0
        %2138 = vmatprep.subr.mxu0 0.0
        %2139 = vmatpush2.msra.mxu0 0.0
        %2140 = vmatprep.subr.mxu0 0.0
        %2141 = vmatpush2.msra.mxu0 0.0
        %2142 = vmatprep.subr.mxu0 0.0
        %2143 = vmatpush2.msra.mxu0 0.0
        %2144 = vmatprep.subr.mxu0 0.0
        %2145 = vmatpush2.msra.mxu0 0.0
        %2146 = vmatprep.subr.mxu0 0.0
        %2147 = vmatpush2.msra.mxu0 0.0
        %2148 = vmatprep.subr.mxu0 0.0
        %2149 = vmatpush2.msra.mxu0 0.0
        %2150 = vmatprep.subr.mxu0 0.0
        %2151 = vmatpush2.msra.mxu0 0.0
        %2152 = vmatprep.mubr.f32.mxu0 0.0
        %2153 = vmatmul.mubr.f32.gmra.mxu0 %v2005
        %v2154 = vpop.f32.mrf.mxu0
        %v2155 = vadd.f32 0.0, %v2154
        %v2156 = vpop.f32.mrf.mxu0
        %v2157 = vadd.f32 0.0, %v2156
        %2158 = vdwg.mxu0
        %v2159 = vadd.f32 %v2013, %v2084
        %v2160 = vadd.f32 %v2014, %v2086
        %v2161 = vadd.f32 %v2015, %v2155
        %v2162 = vadd.f32 %v2016, %v2157
        %v2163 = vxor.u32 %v2159, 2147483648
        %v2164 = vmul.f32 %v2163, 1.442695
        %v2165 = vpow.pop %v2164
        %v2166 = vadd.f32 %v2165, 1.0
        %v2167 = vrcp.pop %v2166
        %v2168 = vmul.f32 1.0, %v2167
        %v2169 = vxor.u32 %v2160, 2147483648
        %v2170 = vmul.f32 %v2169, 1.442695
        %v2171 = vpow.pop %v2170
        %v2172 = vadd.f32 %v2171, 1.0
        %v2173 = vrcp.pop %v2172
        %v2174 = vmul.f32 1.0, %v2173
        %v2175 = vtanh.pop %v2161
        %v2176 = vxor.u32 %v2162, 2147483648
        %v2177 = vmul.f32 %v2176, 1.442695
        %v2178 = vpow.pop %v2177
        %v2179 = vadd.f32 %v2178, 1.0
        %v2180 = vrcp.pop %v2179
        %v2181 = vmul.f32 1.0, %v2180
        %v2182 = vmul.f32 %v2174, %v2003
        %v2183 = vmul.f32 %v2168, %v2175
        %v2184 = vadd.f32 %v2182, %v2183
        %v2185 = vtanh.pop %v2184
        %v2186 = vmul.f32 %v2181, %v2185
        %s2187 = smul.u32 %s2009, 8
        %s2188 = scalar_lea.vmem %s317, %s2187 [#allocation9]
        %2189 = vst [vmem:[%s2188] sm:$0xff] %v2186
        %2190 = vst [vmem:[%s324] sm:$0xff] %v2186
        %s2191 = sand.u32 %s133, 1
        %s2192 = sand.u32 %s133, 1
        %s2193 = smul.addr %s2192, 64
        %s2194 = scalar_lea.vmem [#allocation9], %s2193
        %s2195 = sand.u32 %s159, 1
        %s2196 = scalar_lea.sflag [#allocation5], %s2195
        %s2197 = sand.u32 %s159, 1
        %s2198 = smul.addr %s2197, 8
        %s2199 = scalar_lea.vmem [#allocation10], %s2198
        // Predicated region
        $region49: #{base_network_forward.2} parent=35 // pred_check
          %p2200 = pneg %p143
        $region50: #{base_network_forward.2} parent=35 // pred_check_branch
          %2202 = sbr.rel (%p2200) target = $region52
        $region51: #{base_network_forward.2} parent=35 // pred_region
          %s2203 = smul.addr %s26, 8
          %s2204 = scalar_lea.vmem %s4, %s2203
          // Predicated region
          $region53: #{base_network_forward.2} parent=51 // pred_check
            _
          $region54: #{base_network_forward.2} parent=51 // pred_check_branch
            %2206 = sbr.rel (0) target = $region56
          $region55: #{base_network_forward.2} parent=51 // pred_region
            // Predicated region
            $region57: #{base_network_forward.2} parent=55 // pred_check
              _
            $region58: #{base_network_forward.2} parent=55 // pred_check_branch
              %2208 = sbr.rel (0) target = $region60
            $region59: #{base_network_forward.2} parent=55 // pred_region
              // Predicated region
              $region72: #{base_network_forward.2} parent=59 // pred_check
                _
              $region73: #{base_network_forward.2} parent=59 // pred_check_branch
                %2238 = sbr.rel (0) target = $region75
              $region74: #{base_network_forward.2} parent=59 // pred_region
                loop: start=0, step=1, limit=1
                $region76: #{base_network_forward.2} parent=74 // loop_pre_header
                  _
                $region77: #{base_network_forward.2} parent=74 // loop_header
                  %s2240 = sphi 0, %s2244
                  %p2241 = scmp.ge.s32.totalorder %s2240, 1
                  %s2245 = sphi %s2194, %s2194
                  %s2246 = sphi %s2204, %s2204
                $region78: #{base_network_forward.2} parent=74 // loop_header_branch
                  %2243 = sbr.rel (%p2241) target = $region82
                $region79: #{base_network_forward.2} parent=74 // loop_body
                  %v2247 = vld [vmem:[%s2245] sm:$0xff]
                  %2248 = vst [vmem:[%s2246] sm:$0xff] %v2247
                  %v2249 = vld [vmem:[%s2245 + $0x8] sm:$0xff]
                  %2250 = vst [vmem:[%s2246 + $0x10] sm:$0xff] %v2249
                  %v2251 = vld [vmem:[%s2245 + $0x10] sm:$0xff]
                  %2252 = vst [vmem:[%s2246 + $0x20] sm:$0xff] %v2251
                  %v2253 = vld [vmem:[%s2245 + $0x18] sm:$0xff]
                  %2254 = vst [vmem:[%s2246 + $0x30] sm:$0xff] %v2253
                  %v2255 = vld [vmem:[%s2245 + $0x20] sm:$0xff]
                  %2256 = vst [vmem:[%s2246 + $0x40] sm:$0xff] %v2255
                  %v2257 = vld [vmem:[%s2245 + $0x28] sm:$0xff]
                  %2258 = vst [vmem:[%s2246 + $0x50] sm:$0xff] %v2257
                  %v2259 = vld [vmem:[%s2245 + $0x30] sm:$0xff]
                  %2260 = vst [vmem:[%s2246 + $0x60] sm:$0xff] %v2259
                  %v2261 = vld [vmem:[%s2245 + $0x38] sm:$0xff]
                  %2262 = vst [vmem:[%s2246 + $0x70] sm:$0xff] %v2261
                $region80: #{base_network_forward.2} parent=74 // loop_footer
                  %s2244 = sadd.s32 1, %s2240
                $region81: #{base_network_forward.2} parent=74 // loop_footer_branch
                  %2239 = sbr.rel target = $region77
                $region82: #{base_network_forward.2} parent=74 // loop_exit
                  _
              $region75: #{base_network_forward.2} parent=59 // pred_fallthru
                _
              // Predicated region
              $region83: #{base_network_forward.2} parent=59 // pred_check
                _
              $region84: #{base_network_forward.2} parent=59 // pred_check_branch
                %2264 = sbr.rel target = $region86
              $region85: #{base_network_forward.2} parent=59 // pred_region
                _
              $region86: #{base_network_forward.2} parent=59 // pred_fallthru
                _
            $region60: #{base_network_forward.2} parent=55 // pred_fallthru
              _
            // Predicated region
            $region61: #{base_network_forward.2} parent=55 // pred_check
              _
            $region62: #{base_network_forward.2} parent=55 // pred_check_branch
              %2210 = sbr.rel target = $region64
            $region63: #{base_network_forward.2} parent=55 // pred_region
              %s2212 = ssub.s32 256, 1
              loop: start=0, step=1, limit=1
              $region65: #{base_network_forward.2} parent=63 // loop_pre_header
                _
              $region66: #{base_network_forward.2} parent=63 // loop_header
                %s2214 = sphi 0, %s2218
                %p2215 = scmp.ge.s32.totalorder %s2214, 1
                %s2219 = sphi %s2194, %s2194
                %s2220 = sphi %s2204, %s2204
              $region67: #{base_network_forward.2} parent=63 // loop_header_branch
                %2217 = sbr.rel (%p2215) target = $region71
              $region68: #{base_network_forward.2} parent=63 // loop_body
                %v2221 = vld [vmem:[%s2219] sm:%s2212]
                %2222 = vst [vmem:[%s2220] sm:%s2212] %v2221
                %v2223 = vld [vmem:[%s2219 + $0x8] sm:%s2212]
                %2224 = vst [vmem:[%s2220 + $0x10] sm:%s2212] %v2223
                %v2225 = vld [vmem:[%s2219 + $0x10] sm:%s2212]
                %2226 = vst [vmem:[%s2220 + $0x20] sm:%s2212] %v2225
                %v2227 = vld [vmem:[%s2219 + $0x18] sm:%s2212]
                %2228 = vst [vmem:[%s2220 + $0x30] sm:%s2212] %v2227
                %v2229 = vld [vmem:[%s2219 + $0x20] sm:%s2212]
                %2230 = vst [vmem:[%s2220 + $0x40] sm:%s2212] %v2229
                %v2231 = vld [vmem:[%s2219 + $0x28] sm:%s2212]
                %2232 = vst [vmem:[%s2220 + $0x50] sm:%s2212] %v2231
                %v2233 = vld [vmem:[%s2219 + $0x30] sm:%s2212]
                %2234 = vst [vmem:[%s2220 + $0x60] sm:%s2212] %v2233
                %v2235 = vld [vmem:[%s2219 + $0x38] sm:%s2212]
                %2236 = vst [vmem:[%s2220 + $0x70] sm:%s2212] %v2235
              $region69: #{base_network_forward.2} parent=63 // loop_footer
                %s2218 = sadd.s32 1, %s2214
              $region70: #{base_network_forward.2} parent=63 // loop_footer_branch
                %2213 = sbr.rel target = $region66
              $region71: #{base_network_forward.2} parent=63 // loop_exit
                _
            $region64: #{base_network_forward.2} parent=55 // pred_fallthru
              _
          $region56: #{base_network_forward.2} parent=51 // pred_fallthru
            _
          %2265 = vnop
        $region52: #{base_network_forward.2} parent=35 // pred_fallthru
          _
        // Predicated region
        $region87: #{base_network_forward.2} parent=35 // pred_check
          %p2266 = pneg %p169
        $region88: #{base_network_forward.2} parent=35 // pred_check_branch
          %2268 = sbr.rel (%p2266) target = $region90
        $region89: #{base_network_forward.2} parent=35 // pred_region
          %s2270 = ssub.s32 128, 128
          %2271 = vsyncadd %s2196, %s2270
          %s2272 = smul.addr %s26, 128
          %s2273 = scalar_lea.hbm %s5, %s2272
          %s2275 = sshll.u32 %s2199, 4
          %s2276 = int_to_ptr.vmem [resolvable:$true] %s2275
          %2278 = dma.vmem_to_hbm [thread:$0]  %s2276, 128, %s2273, %s2196
        $region90: #{base_network_forward.2} parent=35 // pred_fallthru
          _
      $region36: #{base_network_forward.2} parent=5 // pred_fallthru
        _
      %p2279 = scmp.le.s32.totalorder 2, %s21
      // Predicated region
      $region91: #{base_network_forward.2} parent=5 // pred_check
        %p2280 = pneg %p2279
      $region92: #{base_network_forward.2} parent=5 // pred_check_branch
        %2282 = sbr.rel (%p2280) target = $region94
      $region93: #{base_network_forward.2} parent=5 // pred_region
        %s2283 = ssub.s32 %s21, 2
        // Predicated region
        $region95: #{base_network_forward.2} parent=93 // pred_check
          %p2284 = pneg %p149
        $region96: #{base_network_forward.2} parent=93 // pred_check_branch
          %2286 = sbr.rel (%p2284) target = $region98
        $region97: #{base_network_forward.2} parent=93 // pred_region
          %s2287 = sand.u32 %s134, 1
          %s2288 = sand.u32 %s134, 1
          %s2289 = smul.addr %s2288, 64
          %s2290 = scalar_lea.vmem [#allocation9], %s2289
        $region98: #{base_network_forward.2} parent=93 // pred_fallthru
          _
        // Predicated region
        $region99: #{base_network_forward.2} parent=93 // pred_check
          %p2291 = pneg %p175
        $region100: #{base_network_forward.2} parent=93 // pred_check_branch
          %2293 = sbr.rel (%p2291) target = $region102
        $region101: #{base_network_forward.2} parent=93 // pred_region
          %s2294 = sand.u32 %s160, 1
          %s2295 = scalar_lea.sflag [#allocation5], %s2294
          %s2296 = sand.u32 %s160, 1
          %s2297 = smul.addr %s2296, 8
          %s2298 = scalar_lea.vmem [#allocation10], %s2297
          %2299 = dma.done %s2295, 128
        $region102: #{base_network_forward.2} parent=93 // pred_fallthru
          _
      $region94: #{base_network_forward.2} parent=5 // pred_fallthru
        _
    $region6: #{base_network_forward.2} parent=1 // loop_footer
      %s25 = sadd.s32 1, %s21
    $region7: #{base_network_forward.2} parent=1 // loop_footer_branch
      %20 = sbr.rel target = $region3
    $region8: #{base_network_forward.2} parent=1 // loop_exit
      _
    %2300 = vsyncpa [#allocation4], 1
    %s2301 = scalar_lea.sflag [#allocation4], 1
    %2302 = vsyncpa %s2301, 1
    %2303 = vsyncpa [#allocation7], 1
    %s2304 = scalar_lea.sflag [#allocation7], 1
    %2305 = vsyncpa %s2304, 1
    %2306 = vsyncpa [#allocation5], 1
    %s2307 = scalar_lea.sflag [#allocation5], 1
    %2308 = vsyncpa %s2307, 1

// kernel: base_network_forward.3
$region0: #{base_network_forward.3}
  #allocation0 [shape = 'u32[]', space=smem, size = 0x4, offset = 0x4, fixed_abs, tag = 'smem constant byte address 0x4 - core index']
  #allocation1 [shape = 'u32[144,128]{1,0:T(1,128)}', space=vmem, size = 0x12000, scoped, tag = 'internal scratch']
  #allocation2 [shape = 'f32[8,8,512]{2,1,0:T(8,128)}', space=vmem, size = 0x20000, scoped, tag = 'scratch operand']
  %s0 = inlined_call_operand.vmem [shape: f32[8,8,256], index: 0, kind: input, shape index: {}]
  %s1 = inlined_call_operand.vmem [shape: f32[2,256,512], index: 1, kind: input, shape index: {}]
  %s2 = inlined_call_operand.hbm [shape: f32[2,128,512], index: 2, kind: input, shape index: {}]
  %s3 = inlined_call_operand.vmem [shape: f32[2,1,512], index: 3, kind: input, shape index: {}]
  %s4 = inlined_call_operand.hbm [shape: f32[8,8,256], index: 4, kind: output, shape index: {0}]
  %s5 = inlined_call_operand.vmem [shape: f32[2,8,128], index: 5, kind: output, shape index: {1}]
  %6 = xla_tuple %s4, %s5
  %s7 = sld [smem:[#allocation0]]
  $region61: #{base_network_forward.3} parent=0
    _
  %s9 = ssub.s32 1, %s7
  %s10 = scalar_select 0, %s9, %s7
  $region1: #{base_network_forward.3} parent=0
    #allocation3 [shape = 'u8[524288]{0}', space=vmem, size = 0x80000, scoped, tag = 'input window, operand 2']
    #allocation4 [shape = 's32[2]{0}', space=sflag, size = 0x8, scoped, tag = 'scoped memory for base_network_forward.3']
    #allocation5 [shape = 's32[2]{0}', space=sflag, size = 0x8, scoped, tag = 'scoped memory for base_network_forward.3']
    #allocation6 [shape = 'u8[65536]{0}', space=vmem, size = 0x10000, scoped, tag = 'output window, operand 0']
    %11 = vsyncpa [#allocation4], 0
    %s12 = scalar_lea.sflag [#allocation4], 1
    %13 = vsyncpa %s12, 0
    %14 = vsyncpa [#allocation5], 0
    %s15 = scalar_lea.sflag [#allocation5], 1
    %16 = vsyncpa %s15, 0
    loop: start=0, step=1, limit=4
    $region2: #{base_network_forward.3} parent=1 // loop_pre_header
      _
    $region3: #{base_network_forward.3} parent=1 // loop_header
      %s18 = sphi 0, %s22
      %p19 = scmp.ge.s32.totalorder %s18, 4
      %s26 = sphi 0, %s26
      %s28 = sphi 0, %s26
      %s29 = sphi 0, %s28
      %s43 = sphi 0, %s29
      %s49 = sphi 0, %s51
      %s52 = sphi 0, %s49
      %s53 = sphi 0, %s52
      %s69 = sphi 0, %s53
      %s75 = sphi 0, %s77
      %s78 = sphi 0, %s75
      %s79 = sphi 0, %s78
      %s95 = sphi 0, %s79
      %s101 = sphi 0, %s103
      %s104 = sphi 0, %s101
      %s105 = sphi 0, %s104
      %s121 = sphi 0, %s105
      %s127 = sphi 0, %s129
      %s130 = sphi 0, %s127
      %s131 = sphi 0, %s130
      %s147 = sphi 0, %s131
      %s153 = sphi 0, %s155
      %s156 = sphi 0, %s153
      %s157 = sphi 0, %s156
      %s173 = sphi 0, %s157
    $region4: #{base_network_forward.3} parent=1 // loop_header_branch
      %21 = sbr.rel (%p19) target = $region8
    $region5: #{base_network_forward.3} parent=1 // loop_body
      %s23 = ssub.s32 %s18, 1
      %s24 = ssub.s32 %s18, 2
      %s25 = sadd.s32 %s18, 1
      %s27 = sadd.s32 %s26, 1
      %p30 = scmp.eq.s32.totalorder %s18, 1
      %p31 = scmp.ne.s32.totalorder %s26, %s28
      %p32 = scmp.eq.s32.totalorder %s18, 0
      %p33 = por %p31, %p32
      %p34 = scmp.ne.s32.totalorder %s26, %s28
      %p35 = scmp.eq.s32.totalorder %s23, 1
      %p36 = por %p34, %p35
      %p37 = scmp.ne.s32.totalorder %s28, %s29
      %p38 = scmp.eq.s32.totalorder %s23, 0
      %p39 = por %p37, %p38
      %p40 = scmp.ne.s32.totalorder %s28, %s29
      %p41 = scmp.eq.s32.totalorder %s24, 1
      %p42 = por %p40, %p41
      %p44 = scmp.ne.s32.totalorder %s29, %s43
      %p45 = scmp.eq.s32.totalorder %s24, 0
      %p46 = por %p44, %p45
      %s47 = ssub.s32 %s18, %s25
      %p48 = scmp.eq.s32.totalorder %s47, 0
      %s50 = sadd.s32 %s49, 1
      %s51 = scalar_select %p48, %s49, %s50
      %p54 = pneg %p48
      %p55 = scmp.eq.s32.totalorder %s18, 1
      %p56 = por %p54, %p55
      %p57 = scmp.ne.s32.totalorder %s49, %s52
      %p58 = scmp.eq.s32.totalorder %s18, 0
      %p59 = por %p57, %p58
      %p60 = scmp.ne.s32.totalorder %s49, %s52
      %p61 = scmp.eq.s32.totalorder %s23, 1
      %p62 = por %p60, %p61
      %p63 = scmp.ne.s32.totalorder %s52, %s53
      %p64 = scmp.eq.s32.totalorder %s23, 0
      %p65 = por %p63, %p64
      %p66 = scmp.ne.s32.totalorder %s52, %s53
      %p67 = scmp.eq.s32.totalorder %s24, 1
      %p68 = por %p66, %p67
      %p70 = scmp.ne.s32.totalorder %s53, %s69
      %p71 = scmp.eq.s32.totalorder %s24, 0
      %p72 = por %p70, %p71
      %s73 = ssub.s32 %s18, %s25
      %p74 = scmp.eq.s32.totalorder %s73, 0
      %s76 = sadd.s32 %s75, 1
      %s77 = scalar_select %p74, %s75, %s76
      %p80 = pneg %p74
      %p81 = scmp.eq.s32.totalorder %s18, 1
      %p82 = por %p80, %p81
      %p83 = scmp.ne.s32.totalorder %s75, %s78
      %p84 = scmp.eq.s32.totalorder %s18, 0
      %p85 = por %p83, %p84
      %p86 = scmp.ne.s32.totalorder %s75, %s78
      %p87 = scmp.eq.s32.totalorder %s23, 1
      %p88 = por %p86, %p87
      %p89 = scmp.ne.s32.totalorder %s78, %s79
      %p90 = scmp.eq.s32.totalorder %s23, 0
      %p91 = por %p89, %p90
      %p92 = scmp.ne.s32.totalorder %s78, %s79
      %p93 = scmp.eq.s32.totalorder %s24, 1
      %p94 = por %p92, %p93
      %p96 = scmp.ne.s32.totalorder %s79, %s95
      %p97 = scmp.eq.s32.totalorder %s24, 0
      %p98 = por %p96, %p97
      %s99 = ssub.s32 %s18, %s25
      %p100 = scmp.eq.s32.totalorder %s99, 0
      %s102 = sadd.s32 %s101, 1
      %s103 = scalar_select %p100, %s101, %s102
      %p106 = pneg %p100
      %p107 = scmp.eq.s32.totalorder %s18, 1
      %p108 = por %p106, %p107
      %p109 = scmp.ne.s32.totalorder %s101, %s104
      %p110 = scmp.eq.s32.totalorder %s18, 0
      %p111 = por %p109, %p110
      %p112 = scmp.ne.s32.totalorder %s101, %s104
      %p113 = scmp.eq.s32.totalorder %s23, 1
      %p114 = por %p112, %p113
      %p115 = scmp.ne.s32.totalorder %s104, %s105
      %p116 = scmp.eq.s32.totalorder %s23, 0
      %p117 = por %p115, %p116
      %p118 = scmp.ne.s32.totalorder %s104, %s105
      %p119 = scmp.eq.s32.totalorder %s24, 1
      %p120 = por %p118, %p119
      %p122 = scmp.ne.s32.totalorder %s105, %s121
      %p123 = scmp.eq.s32.totalorder %s24, 0
      %p124 = por %p122, %p123
      %s125 = ssub.s32 %s18, %s25
      %p126 = scmp.eq.s32.totalorder %s125, 0
      %s128 = sadd.s32 %s127, 1
      %s129 = scalar_select %p126, %s127, %s128
      %p132 = pneg %p126
      %p133 = scmp.eq.s32.totalorder %s18, 1
      %p134 = por %p132, %p133
      %p135 = scmp.ne.s32.totalorder %s127, %s130
      %p136 = scmp.eq.s32.totalorder %s18, 0
      %p137 = por %p135, %p136
      %p138 = scmp.ne.s32.totalorder %s127, %s130
      %p139 = scmp.eq.s32.totalorder %s23, 1
      %p140 = por %p138, %p139
      %p141 = scmp.ne.s32.totalorder %s130, %s131
      %p142 = scmp.eq.s32.totalorder %s23, 0
      %p143 = por %p141, %p142
      %p144 = scmp.ne.s32.totalorder %s130, %s131
      %p145 = scmp.eq.s32.totalorder %s24, 1
      %p146 = por %p144, %p145
      %p148 = scmp.ne.s32.totalorder %s131, %s147
      %p149 = scmp.eq.s32.totalorder %s24, 0
      %p150 = por %p148, %p149
      %s151 = ssub.s32 %s18, %s25
      %p152 = scmp.eq.s32.totalorder %s151, 0
      %s154 = sadd.s32 %s153, 1
      %s155 = scalar_select %p152, %s153, %s154
      %p158 = pneg %p152
      %p159 = scmp.eq.s32.totalorder %s18, 1
      %p160 = por %p158, %p159
      %p161 = scmp.ne.s32.totalorder %s153, %s156
      %p162 = scmp.eq.s32.totalorder %s18, 0
      %p163 = por %p161, %p162
      %p164 = scmp.ne.s32.totalorder %s153, %s156
      %p165 = scmp.eq.s32.totalorder %s23, 1
      %p166 = por %p164, %p165
      %p167 = scmp.ne.s32.totalorder %s156, %s157
      %p168 = scmp.eq.s32.totalorder %s23, 0
      %p169 = por %p167, %p168
      %p170 = scmp.ne.s32.totalorder %s156, %s157
      %p171 = scmp.eq.s32.totalorder %s24, 1
      %p172 = por %p170, %p171
      %p174 = scmp.ne.s32.totalorder %s157, %s173
      %p175 = scmp.eq.s32.totalorder %s24, 0
      %p176 = por %p174, %p175
      %p177 = scmp.le.s32.totalorder 1, %s18
      %p178 = scmp.lt.s32.totalorder %s18, 3
      %p179 = pnand %p177, %p178
      %p180 = pneg %p179
      // Predicated region
      $region9: #{base_network_forward.3} parent=5 // pred_check
        _
      $region10: #{base_network_forward.3} parent=5 // pred_check_branch
        %182 = sbr.rel (%p179) target = $region12
      $region11: #{base_network_forward.3} parent=5 // pred_region
        %s183 = ssub.s32 %s18, 1
        // Predicated region
        $region13: #{base_network_forward.3} parent=11 // pred_check
          %p184 = pneg %p39
        $region14: #{base_network_forward.3} parent=11 // pred_check_branch
          %186 = sbr.rel (%p184) target = $region16
        $region15: #{base_network_forward.3} parent=11 // pred_region
          _
        $region16: #{base_network_forward.3} parent=11 // pred_fallthru
          _
      $region12: #{base_network_forward.3} parent=5 // pred_fallthru
        _
      %p187 = scmp.lt.s32.totalorder %s18, 2
      // Predicated region
      $region17: #{base_network_forward.3} parent=5 // pred_check
        %p188 = pneg %p187
      $region18: #{base_network_forward.3} parent=5 // pred_check_branch
        %190 = sbr.rel (%p188) target = $region20
      $region19: #{base_network_forward.3} parent=5 // pred_region
        // Predicated region
        $region21: #{base_network_forward.3} parent=19 // pred_check
          %p191 = pneg %p59
        $region22: #{base_network_forward.3} parent=19 // pred_check_branch
          %193 = sbr.rel (%p191) target = $region24
        $region23: #{base_network_forward.3} parent=19 // pred_region
          %p194 = scmp.lt.s32.totalorder %s18, 1
          %s195 = scalar_select %p194, %s18, 1
          %s196 = smul.addr %s195, 128
          %s197 = smul.addr %s196, 8
          %s198 = scalar_lea.vmem %s1, %s197
        $region24: #{base_network_forward.3} parent=19 // pred_fallthru
          _
        // Predicated region
        $region25: #{base_network_forward.3} parent=19 // pred_check
          %p199 = pneg %p85
        $region26: #{base_network_forward.3} parent=19 // pred_check_branch
          %201 = sbr.rel (%p199) target = $region28
        $region27: #{base_network_forward.3} parent=19 // pred_region
          %s202 = sand.u32 %s75, 1
          %s203 = scalar_lea.sflag [#allocation4], %s202
          %s204 = sand.u32 %s75, 1
          %s205 = smul.addr %s204, 512
          %s206 = scalar_lea.vmem [#allocation3], %s205
          %s208 = ssub.s32 8192, 8192
          %209 = vsyncadd %s203, %s208
          %s210 = smul.addr %s18, 64
          %s211 = smul.addr %s210, 128
          %s212 = scalar_lea.hbm %s2, %s211
          %s213 = sshll.u32 %s206, 4
          %s214 = int_to_ptr.vmem [resolvable:$true] %s213
          %219 = dma.hbm_to_vmem [thread:$0]  %s212, 8192, %s214, %s203, 512, 512, 32
        $region28: #{base_network_forward.3} parent=19 // pred_fallthru
          _
        // Predicated region
        $region29: #{base_network_forward.3} parent=19 // pred_check
          %p220 = pneg %p111
        $region30: #{base_network_forward.3} parent=19 // pred_check_branch
          %222 = sbr.rel (%p220) target = $region32
        $region31: #{base_network_forward.3} parent=19 // pred_region
          %p223 = scmp.lt.s32.totalorder %s18, 1
          %s224 = scalar_select %p223, %s18, 1
          %s225 = smul.addr %s224, 4
          %s226 = scalar_lea.vmem %s3, %s225
        $region32: #{base_network_forward.3} parent=19 // pred_fallthru
          _
      $region20: #{base_network_forward.3} parent=5 // pred_fallthru
        _
      %p227 = scmp.le.s32.totalorder 1, %s18
      %p228 = scmp.lt.s32.totalorder %s18, 3
      %p229 = pnand %p227, %p228
      %p230 = pneg %p229
      // Predicated region
      $region33: #{base_network_forward.3} parent=5 // pred_check
        _
      $region34: #{base_network_forward.3} parent=5 // pred_check_branch
        %232 = sbr.rel (%p229) target = $region36
      $region35: #{base_network_forward.3} parent=5 // pred_region
        %s233 = ssub.s32 %s18, 1
        %s234 = sand.u32 %s78, 1
        %s235 = scalar_lea.sflag [#allocation4], %s234
        %s236 = sand.u32 %s78, 1
        %s237 = smul.addr %s236, 512
        %s238 = scalar_lea.vmem [#allocation3], %s237
        // Predicated region
        $region37: #{base_network_forward.3} parent=35 // pred_check
          %p239 = pneg %p91
        $region38: #{base_network_forward.3} parent=35 // pred_check_branch
          %241 = sbr.rel (%p239) target = $region40
        $region39: #{base_network_forward.3} parent=35 // pred_region
          %242 = dma.done %s235, 8192
        $region40: #{base_network_forward.3} parent=35 // pred_fallthru
          _
        %p243 = pneg %p39
        %p244 = pneg %p36
        %p245 = scmp.lt.s32.totalorder %s23, 1
        %s246 = scalar_select %p245, %s23, 1
        %s247 = smul.addr %s246, 128
        %s248 = smul.addr %s247, 8
        %s249 = scalar_lea.vmem %s1, %s248
        %p250 = pneg %p65
        %p251 = pneg %p62
        %s252 = sand.u32 %s78, 1
        %s253 = scalar_lea.sflag [#allocation4], %s252
        %s254 = sand.u32 %s78, 1
        %s255 = smul.addr %s254, 512
        %s256 = scalar_lea.vmem [#allocation3], %s255
        %p257 = pneg %p91
        %p258 = pneg %p88
        %p259 = scmp.lt.s32.totalorder %s23, 1
        %s260 = scalar_select %p259, %s23, 1
        %s261 = smul.addr %s260, 4
        %s262 = scalar_lea.vmem %s3, %s261
        %p263 = pneg %p117
        %p264 = pneg %p114
        %p265 = pneg %p143
        %p266 = pneg %p140
        %s267 = sand.u32 %s130, 1
        %s268 = scalar_lea.sflag [#allocation5], %s267
        %s269 = sand.u32 %s130, 1
        %s270 = smul.addr %s269, 64
        %s271 = scalar_lea.vmem [#allocation6], %s270
        %p272 = pneg %p169
        %p273 = pneg %p166
        %p274 = scmp.lt.s32.totalorder %s23, 1
        %s275 = scalar_select %p274, %s23, 1
        %s276 = smul.addr %s275, 8
        %s277 = scalar_lea.vmem %s5, %s276
        %p278 = scmp.lt.s32.totalorder %s23, 1
        %s279 = scalar_select %p278, %s23, 1
        %s280 = smul.addr %s279, 128
        %s281 = smul.addr %s280, 8
        %s282 = scalar_lea.vmem %s1, %s281
        %p283 = scmp.lt.s32.totalorder %s23, 1
        %s284 = scalar_select %p283, %s23, 1
        %s285 = smul.addr %s284, 4
        %s286 = scalar_lea.vmem %s3, %s285
        %p287 = scmp.lt.s32.totalorder %s23, 1
        %s288 = scalar_select %p287, %s23, 1
        %s289 = smul.addr %s288, 8
        %s290 = scalar_lea.vmem %s5, %s289
        %v291 = vld [vmem:[%s0] sm:$0xff]
        %v292 = vld [vmem:[%s0 + $0x8] sm:$0xff]
        %v293 = vld [vmem:[%s0 + $0x10] sm:$0xff]
        %v294 = vld [vmem:[%s0 + $0x18] sm:$0xff]
        %v295 = vld [vmem:[%s0 + $0x20] sm:$0xff]
        %v296 = vld [vmem:[%s0 + $0x28] sm:$0xff]
        %v297 = vld [vmem:[%s0 + $0x30] sm:$0xff]
        %v298 = vld [vmem:[%s0 + $0x38] sm:$0xff]
        %v299 = vld [vmem:[%s0 + $0x40] sm:$0xff]
        %v300 = vld [vmem:[%s0 + $0x48] sm:$0xff]
        %v301 = vld [vmem:[%s0 + $0x50] sm:$0xff]
        %v302 = vld [vmem:[%s0 + $0x58] sm:$0xff]
        %v303 = vld [vmem:[%s0 + $0x60] sm:$0xff]
        %v304 = vld [vmem:[%s0 + $0x68] sm:$0xff]
        %v305 = vld [vmem:[%s0 + $0x70] sm:$0xff]
        %v306 = vld [vmem:[%s0 + $0x78] sm:$0xff]
        %v307 = vld [vmem:[%s282] sm:$0xff]
        %v308 = vld [vmem:[%s282 + $0x8] sm:$0xff]
        %v309 = vld [vmem:[%s282 + $0x10] sm:$0xff]
        %v310 = vld [vmem:[%s282 + $0x18] sm:$0xff]
        %v311 = vld [vmem:[%s282 + $0x20] sm:$0xff]
        %v312 = vld [vmem:[%s282 + $0x28] sm:$0xff]
        %v313 = vld [vmem:[%s282 + $0x30] sm:$0xff]
        %v314 = vld [vmem:[%s282 + $0x38] sm:$0xff]
        %v315 = vld [vmem:[%s282 + $0x40] sm:$0xff]
        %v316 = vld [vmem:[%s282 + $0x48] sm:$0xff]
        %v317 = vld [vmem:[%s282 + $0x50] sm:$0xff]
        %v318 = vld [vmem:[%s282 + $0x58] sm:$0xff]
        %v319 = vld [vmem:[%s282 + $0x60] sm:$0xff]
        %v320 = vld [vmem:[%s282 + $0x68] sm:$0xff]
        %v321 = vld [vmem:[%s282 + $0x70] sm:$0xff]
        %v322 = vld [vmem:[%s282 + $0x78] sm:$0xff]
        %v323 = vld [vmem:[%s282 + $0x80] sm:$0xff]
        %v324 = vld [vmem:[%s282 + $0x88] sm:$0xff]
        %v325 = vld [vmem:[%s282 + $0x90] sm:$0xff]
        %v326 = vld [vmem:[%s282 + $0x98] sm:$0xff]
        %v327 = vld [vmem:[%s282 + $0xa0] sm:$0xff]
        %v328 = vld [vmem:[%s282 + $0xa8] sm:$0xff]
        %v329 = vld [vmem:[%s282 + $0xb0] sm:$0xff]
        %v330 = vld [vmem:[%s282 + $0xb8] sm:$0xff]
        %v331 = vld [vmem:[%s282 + $0xc0] sm:$0xff]
        %v332 = vld [vmem:[%s282 + $0xc8] sm:$0xff]
        %v333 = vld [vmem:[%s282 + $0xd0] sm:$0xff]
        %v334 = vld [vmem:[%s282 + $0xd8] sm:$0xff]
        %v335 = vld [vmem:[%s282 + $0xe0] sm:$0xff]
        %v336 = vld [vmem:[%s282 + $0xe8] sm:$0xff]
        %v337 = vld [vmem:[%s282 + $0xf0] sm:$0xff]
        %v338 = vld [vmem:[%s282 + $0xf8] sm:$0xff]
        %v339 = vld [vmem:[%s282 + $0x100] sm:$0xff]
        %v340 = vld [vmem:[%s282 + $0x108] sm:$0xff]
        %v341 = vld [vmem:[%s282 + $0x110] sm:$0xff]
        %v342 = vld [vmem:[%s282 + $0x118] sm:$0xff]
        %v343 = vld [vmem:[%s282 + $0x120] sm:$0xff]
        %v344 = vld [vmem:[%s282 + $0x128] sm:$0xff]
        %v345 = vld [vmem:[%s282 + $0x130] sm:$0xff]
        %v346 = vld [vmem:[%s282 + $0x138] sm:$0xff]
        %v347 = vld [vmem:[%s282 + $0x140] sm:$0xff]
        %v348 = vld [vmem:[%s282 + $0x148] sm:$0xff]
        %v349 = vld [vmem:[%s282 + $0x150] sm:$0xff]
        %v350 = vld [vmem:[%s282 + $0x158] sm:$0xff]
        %v351 = vld [vmem:[%s282 + $0x160] sm:$0xff]
        %v352 = vld [vmem:[%s282 + $0x168] sm:$0xff]
        %v353 = vld [vmem:[%s282 + $0x170] sm:$0xff]
        %v354 = vld [vmem:[%s282 + $0x178] sm:$0xff]
        %v355 = vld [vmem:[%s282 + $0x180] sm:$0xff]
        %v356 = vld [vmem:[%s282 + $0x188] sm:$0xff]
        %v357 = vld [vmem:[%s282 + $0x190] sm:$0xff]
        %v358 = vld [vmem:[%s282 + $0x198] sm:$0xff]
        %v359 = vld [vmem:[%s282 + $0x1a0] sm:$0xff]
        %v360 = vld [vmem:[%s282 + $0x1a8] sm:$0xff]
        %v361 = vld [vmem:[%s282 + $0x1b0] sm:$0xff]
        %v362 = vld [vmem:[%s282 + $0x1b8] sm:$0xff]
        %v363 = vld [vmem:[%s282 + $0x1c0] sm:$0xff]
        %v364 = vld [vmem:[%s282 + $0x1c8] sm:$0xff]
        %v365 = vld [vmem:[%s282 + $0x1d0] sm:$0xff]
        %v366 = vld [vmem:[%s282 + $0x1d8] sm:$0xff]
        %v367 = vld [vmem:[%s282 + $0x1e0] sm:$0xff]
        %v368 = vld [vmem:[%s282 + $0x1e8] sm:$0xff]
        %v369 = vld [vmem:[%s282 + $0x1f0] sm:$0xff]
        %v370 = vld [vmem:[%s282 + $0x1f8] sm:$0xff]
        %v371 = vld [vmem:[%s282 + $0x200] sm:$0xff]
        %v372 = vld [vmem:[%s282 + $0x208] sm:$0xff]
        %v373 = vld [vmem:[%s282 + $0x210] sm:$0xff]
        %v374 = vld [vmem:[%s282 + $0x218] sm:$0xff]
        %v375 = vld [vmem:[%s282 + $0x220] sm:$0xff]
        %v376 = vld [vmem:[%s282 + $0x228] sm:$0xff]
        %v377 = vld [vmem:[%s282 + $0x230] sm:$0xff]
        %v378 = vld [vmem:[%s282 + $0x238] sm:$0xff]
        %v379 = vld [vmem:[%s282 + $0x240] sm:$0xff]
        %v380 = vld [vmem:[%s282 + $0x248] sm:$0xff]
        %v381 = vld [vmem:[%s282 + $0x250] sm:$0xff]
        %v382 = vld [vmem:[%s282 + $0x258] sm:$0xff]
        %v383 = vld [vmem:[%s282 + $0x260] sm:$0xff]
        %v384 = vld [vmem:[%s282 + $0x268] sm:$0xff]
        %v385 = vld [vmem:[%s282 + $0x270] sm:$0xff]
        %v386 = vld [vmem:[%s282 + $0x278] sm:$0xff]
        %v387 = vld [vmem:[%s282 + $0x280] sm:$0xff]
        %v388 = vld [vmem:[%s282 + $0x288] sm:$0xff]
        %v389 = vld [vmem:[%s282 + $0x290] sm:$0xff]
        %v390 = vld [vmem:[%s282 + $0x298] sm:$0xff]
        %v391 = vld [vmem:[%s282 + $0x2a0] sm:$0xff]
        %v392 = vld [vmem:[%s282 + $0x2a8] sm:$0xff]
        %v393 = vld [vmem:[%s282 + $0x2b0] sm:$0xff]
        %v394 = vld [vmem:[%s282 + $0x2b8] sm:$0xff]
        %v395 = vld [vmem:[%s282 + $0x2c0] sm:$0xff]
        %v396 = vld [vmem:[%s282 + $0x2c8] sm:$0xff]
        %v397 = vld [vmem:[%s282 + $0x2d0] sm:$0xff]
        %v398 = vld [vmem:[%s282 + $0x2d8] sm:$0xff]
        %v399 = vld [vmem:[%s282 + $0x2e0] sm:$0xff]
        %v400 = vld [vmem:[%s282 + $0x2e8] sm:$0xff]
        %v401 = vld [vmem:[%s282 + $0x2f0] sm:$0xff]
        %v402 = vld [vmem:[%s282 + $0x2f8] sm:$0xff]
        %v403 = vld [vmem:[%s282 + $0x300] sm:$0xff]
        %v404 = vld [vmem:[%s282 + $0x308] sm:$0xff]
        %v405 = vld [vmem:[%s282 + $0x310] sm:$0xff]
        %v406 = vld [vmem:[%s282 + $0x318] sm:$0xff]
        %v407 = vld [vmem:[%s282 + $0x320] sm:$0xff]
        %v408 = vld [vmem:[%s282 + $0x328] sm:$0xff]
        %v409 = vld [vmem:[%s282 + $0x330] sm:$0xff]
        %v410 = vld [vmem:[%s282 + $0x338] sm:$0xff]
        %v411 = vld [vmem:[%s282 + $0x340] sm:$0xff]
        %v412 = vld [vmem:[%s282 + $0x348] sm:$0xff]
        %v413 = vld [vmem:[%s282 + $0x350] sm:$0xff]
        %v414 = vld [vmem:[%s282 + $0x358] sm:$0xff]
        %v415 = vld [vmem:[%s282 + $0x360] sm:$0xff]
        %v416 = vld [vmem:[%s282 + $0x368] sm:$0xff]
        %v417 = vld [vmem:[%s282 + $0x370] sm:$0xff]
        %v418 = vld [vmem:[%s282 + $0x378] sm:$0xff]
        %v419 = vld [vmem:[%s282 + $0x380] sm:$0xff]
        %v420 = vld [vmem:[%s282 + $0x388] sm:$0xff]
        %v421 = vld [vmem:[%s282 + $0x390] sm:$0xff]
        %v422 = vld [vmem:[%s282 + $0x398] sm:$0xff]
        %v423 = vld [vmem:[%s282 + $0x3a0] sm:$0xff]
        %v424 = vld [vmem:[%s282 + $0x3a8] sm:$0xff]
        %v425 = vld [vmem:[%s282 + $0x3b0] sm:$0xff]
        %v426 = vld [vmem:[%s282 + $0x3b8] sm:$0xff]
        %v427 = vld [vmem:[%s282 + $0x3c0] sm:$0xff]
        %v428 = vld [vmem:[%s282 + $0x3c8] sm:$0xff]
        %v429 = vld [vmem:[%s282 + $0x3d0] sm:$0xff]
        %v430 = vld [vmem:[%s282 + $0x3d8] sm:$0xff]
        %v431 = vld [vmem:[%s282 + $0x3e0] sm:$0xff]
        %v432 = vld [vmem:[%s282 + $0x3e8] sm:$0xff]
        %v433 = vld [vmem:[%s282 + $0x3f0] sm:$0xff]
        %v434 = vld [vmem:[%s282 + $0x3f8] sm:$0xff]
        %v435 = vld [vmem:[%s286] sm:$0xf]
        %v437 = vlaneseq
        %v438 = vshrl.u32 %v437, 7
        %v439 = vsub.s32 0, %v438
        %v440 = vrot.slane %v435, %v439
        %v441 = vlaneseq
        %v442 = vshrl.u32 %v441, 7
        %v443 = vsub.s32 1, %v442
        %v444 = vrot.slane %v435, %v443
        %v445 = vlaneseq
        %v446 = vshrl.u32 %v445, 7
        %v447 = vsub.s32 2, %v446
        %v448 = vrot.slane %v435, %v447
        %v449 = vlaneseq
        %v450 = vshrl.u32 %v449, 7
        %v451 = vsub.s32 3, %v450
        %v452 = vrot.slane %v435, %v451
        %457 = vmatprep.subr.mxu0 %v368
        %458 = vmatpush1.msra.mxu0 %v367
        %459 = vmatprep.subr.mxu0 %v364
        %460 = vmatpush1.msra.mxu0 %v363
        %461 = vmatprep.subr.mxu0 %v360
        %462 = vmatpush1.msra.mxu0 %v359
        %463 = vmatprep.subr.mxu0 %v356
        %464 = vmatpush1.msra.mxu0 %v355
        %465 = vmatprep.subr.mxu0 %v352
        %466 = vmatpush1.msra.mxu0 %v351
        %467 = vmatprep.subr.mxu0 %v348
        %468 = vmatpush1.msra.mxu0 %v347
        %469 = vmatprep.subr.mxu0 %v344
        %470 = vmatpush1.msra.mxu0 %v343
        %471 = vmatprep.subr.mxu0 %v340
        %472 = vmatpush1.msra.mxu0 %v339
        %473 = vmatprep.subr.mxu0 %v336
        %474 = vmatpush1.msra.mxu0 %v335
        %475 = vmatprep.subr.mxu0 %v332
        %476 = vmatpush1.msra.mxu0 %v331
        %477 = vmatprep.subr.mxu0 %v328
        %478 = vmatpush1.msra.mxu0 %v327
        %479 = vmatprep.subr.mxu0 %v324
        %480 = vmatpush1.msra.mxu0 %v323
        %481 = vmatprep.subr.mxu0 %v320
        %482 = vmatpush1.msra.mxu0 %v319
        %483 = vmatprep.subr.mxu0 %v316
        %484 = vmatpush1.msra.mxu0 %v315
        %485 = vmatprep.subr.mxu0 %v312
        %486 = vmatpush1.msra.mxu0 %v311
        %487 = vmatprep.subr.mxu0 %v308
        %488 = vmatpush1.msra.mxu0 %v307
        %489 = vmatprep.subr.mxu0 %v432
        %490 = vmatpush2.msra.mxu0 %v431
        %491 = vmatprep.subr.mxu0 %v428
        %492 = vmatpush2.msra.mxu0 %v427
        %493 = vmatprep.subr.mxu0 %v424
        %494 = vmatpush2.msra.mxu0 %v423
        %495 = vmatprep.subr.mxu0 %v420
        %496 = vmatpush2.msra.mxu0 %v419
        %497 = vmatprep.subr.mxu0 %v416
        %498 = vmatpush2.msra.mxu0 %v415
        %499 = vmatprep.subr.mxu0 %v412
        %500 = vmatpush2.msra.mxu0 %v411
        %501 = vmatprep.subr.mxu0 %v408
        %502 = vmatpush2.msra.mxu0 %v407
        %503 = vmatprep.subr.mxu0 %v404
        %504 = vmatpush2.msra.mxu0 %v403
        %505 = vmatprep.subr.mxu0 %v400
        %506 = vmatpush2.msra.mxu0 %v399
        %507 = vmatprep.subr.mxu0 %v396
        %508 = vmatpush2.msra.mxu0 %v395
        %509 = vmatprep.subr.mxu0 %v392
        %510 = vmatpush2.msra.mxu0 %v391
        %511 = vmatprep.subr.mxu0 %v388
        %512 = vmatpush2.msra.mxu0 %v387
        %513 = vmatprep.subr.mxu0 %v384
        %514 = vmatpush2.msra.mxu0 %v383
        %515 = vmatprep.subr.mxu0 %v380
        %516 = vmatpush2.msra.mxu0 %v379
        %517 = vmatprep.subr.mxu0 %v376
        %518 = vmatpush2.msra.mxu0 %v375
        %519 = vmatprep.subr.mxu0 %v372
        %520 = vmatpush2.msra.mxu0 %v371
        %521 = vmatprep.mubr.f32.mxu0 %v292
        %522 = vmatmul.mubr.f32.gmra.mxu0 %v291
        %v523 = vpop.f32.mrf.mxu0
        %v524 = vadd.f32 %v440, %v523
        %v525 = vpop.f32.mrf.mxu0
        %v526 = vadd.f32 %v444, %v525
        %527 = vmatprep.mubr.f32.mxu0 %v294
        %528 = vmatmul.mubr.f32.gmra.mxu0 %v293
        %v529 = vpop.f32.mrf.mxu0
        %v530 = vadd.f32 %v440, %v529
        %v531 = vpop.f32.mrf.mxu0
        %v532 = vadd.f32 %v444, %v531
        %533 = vmatprep.mubr.f32.mxu0 %v296
        %534 = vmatmul.mubr.f32.gmra.mxu0 %v295
        %v535 = vpop.f32.mrf.mxu0
        %v536 = vadd.f32 %v440, %v535
        %v537 = vpop.f32.mrf.mxu0
        %v538 = vadd.f32 %v444, %v537
        %539 = vmatprep.mubr.f32.mxu0 %v298
        %540 = vmatmul.mubr.f32.gmra.mxu0 %v297
        %v541 = vpop.f32.mrf.mxu0
        %v542 = vadd.f32 %v440, %v541
        %v543 = vpop.f32.mrf.mxu0
        %v544 = vadd.f32 %v444, %v543
        %545 = vmatprep.mubr.f32.mxu0 %v300
        %546 = vmatmul.mubr.f32.gmra.mxu0 %v299
        %v547 = vpop.f32.mrf.mxu0
        %v548 = vadd.f32 %v440, %v547
        %v549 = vpop.f32.mrf.mxu0
        %v550 = vadd.f32 %v444, %v549
        %551 = vmatprep.mubr.f32.mxu0 %v302
        %552 = vmatmul.mubr.f32.gmra.mxu0 %v301
        %v553 = vpop.f32.mrf.mxu0
        %v554 = vadd.f32 %v440, %v553
        %v555 = vpop.f32.mrf.mxu0
        %v556 = vadd.f32 %v444, %v555
        %557 = vmatprep.mubr.f32.mxu0 %v304
        %558 = vmatmul.mubr.f32.gmra.mxu0 %v303
        %v559 = vpop.f32.mrf.mxu0
        %v560 = vadd.f32 %v440, %v559
        %v561 = vpop.f32.mrf.mxu0
        %v562 = vadd.f32 %v444, %v561
        %563 = vmatprep.mubr.f32.mxu0 %v306
        %564 = vmatmul.mubr.f32.gmra.mxu0 %v305
        %v565 = vpop.f32.mrf.mxu0
        %v566 = vadd.f32 %v440, %v565
        %v567 = vpop.f32.mrf.mxu0
        %v568 = vadd.f32 %v444, %v567
        %569 = vdwg.mxu0
        %570 = vmatprep.subr.mxu0 %v370
        %571 = vmatpush1.msra.mxu0 %v369
        %572 = vmatprep.subr.mxu0 %v366
        %573 = vmatpush1.msra.mxu0 %v365
        %574 = vmatprep.subr.mxu0 %v362
        %575 = vmatpush1.msra.mxu0 %v361
        %576 = vmatprep.subr.mxu0 %v358
        %577 = vmatpush1.msra.mxu0 %v357
        %578 = vmatprep.subr.mxu0 %v354
        %579 = vmatpush1.msra.mxu0 %v353
        %580 = vmatprep.subr.mxu0 %v350
        %581 = vmatpush1.msra.mxu0 %v349
        %582 = vmatprep.subr.mxu0 %v346
        %583 = vmatpush1.msra.mxu0 %v345
        %584 = vmatprep.subr.mxu0 %v342
        %585 = vmatpush1.msra.mxu0 %v341
        %586 = vmatprep.subr.mxu0 %v338
        %587 = vmatpush1.msra.mxu0 %v337
        %588 = vmatprep.subr.mxu0 %v334
        %589 = vmatpush1.msra.mxu0 %v333
        %590 = vmatprep.subr.mxu0 %v330
        %591 = vmatpush1.msra.mxu0 %v329
        %592 = vmatprep.subr.mxu0 %v326
        %593 = vmatpush1.msra.mxu0 %v325
        %594 = vmatprep.subr.mxu0 %v322
        %595 = vmatpush1.msra.mxu0 %v321
        %596 = vmatprep.subr.mxu0 %v318
        %597 = vmatpush1.msra.mxu0 %v317
        %598 = vmatprep.subr.mxu0 %v314
        %599 = vmatpush1.msra.mxu0 %v313
        %600 = vmatprep.subr.mxu0 %v310
        %601 = vmatpush1.msra.mxu0 %v309
        %602 = vmatprep.subr.mxu0 %v434
        %603 = vmatpush2.msra.mxu0 %v433
        %604 = vmatprep.subr.mxu0 %v430
        %605 = vmatpush2.msra.mxu0 %v429
        %606 = vmatprep.subr.mxu0 %v426
        %607 = vmatpush2.msra.mxu0 %v425
        %608 = vmatprep.subr.mxu0 %v422
        %609 = vmatpush2.msra.mxu0 %v421
        %610 = vmatprep.subr.mxu0 %v418
        %611 = vmatpush2.msra.mxu0 %v417
        %612 = vmatprep.subr.mxu0 %v414
        %613 = vmatpush2.msra.mxu0 %v413
        %614 = vmatprep.subr.mxu0 %v410
        %615 = vmatpush2.msra.mxu0 %v409
        %616 = vmatprep.subr.mxu0 %v406
        %617 = vmatpush2.msra.mxu0 %v405
        %618 = vmatprep.subr.mxu0 %v402
        %619 = vmatpush2.msra.mxu0 %v401
        %620 = vmatprep.subr.mxu0 %v398
        %621 = vmatpush2.msra.mxu0 %v397
        %622 = vmatprep.subr.mxu0 %v394
        %623 = vmatpush2.msra.mxu0 %v393
        %624 = vmatprep.subr.mxu0 %v390
        %625 = vmatpush2.msra.mxu0 %v389
        %626 = vmatprep.subr.mxu0 %v386
        %627 = vmatpush2.msra.mxu0 %v385
        %628 = vmatprep.subr.mxu0 %v382
        %629 = vmatpush2.msra.mxu0 %v381
        %630 = vmatprep.subr.mxu0 %v378
        %631 = vmatpush2.msra.mxu0 %v377
        %632 = vmatprep.subr.mxu0 %v374
        %633 = vmatpush2.msra.mxu0 %v373
        %634 = vmatprep.mubr.f32.mxu0 %v292
        %635 = vmatmul.mubr.f32.gmra.mxu0 %v291
        %v636 = vpop.f32.mrf.mxu0
        %v637 = vadd.f32 %v448, %v636
        %v638 = vpop.f32.mrf.mxu0
        %v639 = vadd.f32 %v452, %v638
        %640 = vmatprep.mubr.f32.mxu0 %v294
        %641 = vmatmul.mubr.f32.gmra.mxu0 %v293
        %v642 = vpop.f32.mrf.mxu0
        %v643 = vadd.f32 %v448, %v642
        %v644 = vpop.f32.mrf.mxu0
        %v645 = vadd.f32 %v452, %v644
        %646 = vmatprep.mubr.f32.mxu0 %v296
        %647 = vmatmul.mubr.f32.gmra.mxu0 %v295
        %v648 = vpop.f32.mrf.mxu0
        %v649 = vadd.f32 %v448, %v648
        %v650 = vpop.f32.mrf.mxu0
        %v651 = vadd.f32 %v452, %v650
        %652 = vmatprep.mubr.f32.mxu0 %v298
        %653 = vmatmul.mubr.f32.gmra.mxu0 %v297
        %v654 = vpop.f32.mrf.mxu0
        %v655 = vadd.f32 %v448, %v654
        %v656 = vpop.f32.mrf.mxu0
        %v657 = vadd.f32 %v452, %v656
        %658 = vmatprep.mubr.f32.mxu0 %v300
        %659 = vmatmul.mubr.f32.gmra.mxu0 %v299
        %v660 = vpop.f32.mrf.mxu0
        %v661 = vadd.f32 %v448, %v660
        %v662 = vpop.f32.mrf.mxu0
        %v663 = vadd.f32 %v452, %v662
        %664 = vmatprep.mubr.f32.mxu0 %v302
        %665 = vmatmul.mubr.f32.gmra.mxu0 %v301
        %v666 = vpop.f32.mrf.mxu0
        %v667 = vadd.f32 %v448, %v666
        %v668 = vpop.f32.mrf.mxu0
        %v669 = vadd.f32 %v452, %v668
        %670 = vmatprep.mubr.f32.mxu0 %v304
        %671 = vmatmul.mubr.f32.gmra.mxu0 %v303
        %v672 = vpop.f32.mrf.mxu0
        %v673 = vadd.f32 %v448, %v672
        %v674 = vpop.f32.mrf.mxu0
        %v675 = vadd.f32 %v452, %v674
        %676 = vmatprep.mubr.f32.mxu0 %v306
        %677 = vmatmul.mubr.f32.gmra.mxu0 %v305
        %v678 = vpop.f32.mrf.mxu0
        %v679 = vadd.f32 %v448, %v678
        %v680 = vpop.f32.mrf.mxu0
        %v681 = vadd.f32 %v452, %v680
        %682 = vdwg.mxu0
        %683 = vst [vmem:[#allocation2] sm:$0xff] %v524
        %684 = vst [vmem:[#allocation2 + $0x8] sm:$0xff] %v526
        %685 = vst [vmem:[#allocation2 + $0x10] sm:$0xff] %v637
        %686 = vst [vmem:[#allocation2 + $0x18] sm:$0xff] %v639
        %687 = vst [vmem:[#allocation2 + $0x20] sm:$0xff] %v530
        %688 = vst [vmem:[#allocation2 + $0x28] sm:$0xff] %v532
        %689 = vst [vmem:[#allocation2 + $0x30] sm:$0xff] %v643
        %690 = vst [vmem:[#allocation2 + $0x38] sm:$0xff] %v645
        %691 = vst [vmem:[#allocation2 + $0x40] sm:$0xff] %v536
        %692 = vst [vmem:[#allocation2 + $0x48] sm:$0xff] %v538
        %693 = vst [vmem:[#allocation2 + $0x50] sm:$0xff] %v649
        %694 = vst [vmem:[#allocation2 + $0x58] sm:$0xff] %v651
        %695 = vst [vmem:[#allocation2 + $0x60] sm:$0xff] %v542
        %696 = vst [vmem:[#allocation2 + $0x68] sm:$0xff] %v544
        %697 = vst [vmem:[#allocation2 + $0x70] sm:$0xff] %v655
        %698 = vst [vmem:[#allocation2 + $0x78] sm:$0xff] %v657
        %699 = vst [vmem:[#allocation2 + $0x80] sm:$0xff] %v548
        %700 = vst [vmem:[#allocation2 + $0x88] sm:$0xff] %v550
        %701 = vst [vmem:[#allocation2 + $0x90] sm:$0xff] %v661
        %702 = vst [vmem:[#allocation2 + $0x98] sm:$0xff] %v663
        %703 = vst [vmem:[#allocation2 + $0xa0] sm:$0xff] %v554
        %704 = vst [vmem:[#allocation2 + $0xa8] sm:$0xff] %v556
        %705 = vst [vmem:[#allocation2 + $0xb0] sm:$0xff] %v667
        %706 = vst [vmem:[#allocation2 + $0xb8] sm:$0xff] %v669
        %707 = vst [vmem:[#allocation2 + $0xc0] sm:$0xff] %v560
        %708 = vst [vmem:[#allocation2 + $0xc8] sm:$0xff] %v562
        %709 = vst [vmem:[#allocation2 + $0xd0] sm:$0xff] %v673
        %710 = vst [vmem:[#allocation2 + $0xd8] sm:$0xff] %v675
        %711 = vst [vmem:[#allocation2 + $0xe0] sm:$0xff] %v566
        %712 = vst [vmem:[#allocation2 + $0xe8] sm:$0xff] %v568
        %713 = vst [vmem:[#allocation2 + $0xf0] sm:$0xff] %v679
        %714 = vst [vmem:[#allocation2 + $0xf8] sm:$0xff] %v681
        %v715 = vld [vmem:[%s238] sm:$0xff]
        %v716 = vld [vmem:[%s238 + $0x8] sm:$0xff]
        %v717 = vld [vmem:[%s238 + $0x10] sm:$0xff]
        %v718 = vld [vmem:[%s238 + $0x18] sm:$0xff]
        %v719 = vld [vmem:[%s238 + $0x20] sm:$0xff]
        %v720 = vld [vmem:[%s238 + $0x28] sm:$0xff]
        %v721 = vld [vmem:[%s238 + $0x30] sm:$0xff]
        %v722 = vld [vmem:[%s238 + $0x38] sm:$0xff]
        %v723 = vld [vmem:[%s238 + $0x40] sm:$0xff]
        %v724 = vld [vmem:[%s238 + $0x48] sm:$0xff]
        %v725 = vld [vmem:[%s238 + $0x50] sm:$0xff]
        %v726 = vld [vmem:[%s238 + $0x58] sm:$0xff]
        %v727 = vld [vmem:[%s238 + $0x60] sm:$0xff]
        %v728 = vld [vmem:[%s238 + $0x68] sm:$0xff]
        %v729 = vld [vmem:[%s238 + $0x70] sm:$0xff]
        %v730 = vld [vmem:[%s238 + $0x78] sm:$0xff]
        %v731 = vld [vmem:[%s238 + $0x80] sm:$0xff]
        %v732 = vld [vmem:[%s238 + $0x88] sm:$0xff]
        %v733 = vld [vmem:[%s238 + $0x90] sm:$0xff]
        %v734 = vld [vmem:[%s238 + $0x98] sm:$0xff]
        %v735 = vld [vmem:[%s238 + $0xa0] sm:$0xff]
        %v736 = vld [vmem:[%s238 + $0xa8] sm:$0xff]
        %v737 = vld [vmem:[%s238 + $0xb0] sm:$0xff]
        %v738 = vld [vmem:[%s238 + $0xb8] sm:$0xff]
        %v739 = vld [vmem:[%s238 + $0xc0] sm:$0xff]
        %v740 = vld [vmem:[%s238 + $0xc8] sm:$0xff]
        %v741 = vld [vmem:[%s238 + $0xd0] sm:$0xff]
        %v742 = vld [vmem:[%s238 + $0xd8] sm:$0xff]
        %v743 = vld [vmem:[%s238 + $0xe0] sm:$0xff]
        %v744 = vld [vmem:[%s238 + $0xe8] sm:$0xff]
        %v745 = vld [vmem:[%s238 + $0xf0] sm:$0xff]
        %v746 = vld [vmem:[%s238 + $0xf8] sm:$0xff]
        %v747 = vld [vmem:[%s238 + $0x100] sm:$0xff]
        %v748 = vld [vmem:[%s238 + $0x108] sm:$0xff]
        %v749 = vld [vmem:[%s238 + $0x110] sm:$0xff]
        %v750 = vld [vmem:[%s238 + $0x118] sm:$0xff]
        %v751 = vld [vmem:[%s238 + $0x120] sm:$0xff]
        %v752 = vld [vmem:[%s238 + $0x128] sm:$0xff]
        %v753 = vld [vmem:[%s238 + $0x130] sm:$0xff]
        %v754 = vld [vmem:[%s238 + $0x138] sm:$0xff]
        %v755 = vld [vmem:[%s238 + $0x140] sm:$0xff]
        %v756 = vld [vmem:[%s238 + $0x148] sm:$0xff]
        %v757 = vld [vmem:[%s238 + $0x150] sm:$0xff]
        %v758 = vld [vmem:[%s238 + $0x158] sm:$0xff]
        %v759 = vld [vmem:[%s238 + $0x160] sm:$0xff]
        %v760 = vld [vmem:[%s238 + $0x168] sm:$0xff]
        %v761 = vld [vmem:[%s238 + $0x170] sm:$0xff]
        %v762 = vld [vmem:[%s238 + $0x178] sm:$0xff]
        %v763 = vld [vmem:[%s238 + $0x180] sm:$0xff]
        %v764 = vld [vmem:[%s238 + $0x188] sm:$0xff]
        %v765 = vld [vmem:[%s238 + $0x190] sm:$0xff]
        %v766 = vld [vmem:[%s238 + $0x198] sm:$0xff]
        %v767 = vld [vmem:[%s238 + $0x1a0] sm:$0xff]
        %v768 = vld [vmem:[%s238 + $0x1a8] sm:$0xff]
        %v769 = vld [vmem:[%s238 + $0x1b0] sm:$0xff]
        %v770 = vld [vmem:[%s238 + $0x1b8] sm:$0xff]
        %v771 = vld [vmem:[%s238 + $0x1c0] sm:$0xff]
        %v772 = vld [vmem:[%s238 + $0x1c8] sm:$0xff]
        %v773 = vld [vmem:[%s238 + $0x1d0] sm:$0xff]
        %v774 = vld [vmem:[%s238 + $0x1d8] sm:$0xff]
        %v775 = vld [vmem:[%s238 + $0x1e0] sm:$0xff]
        %v776 = vld [vmem:[%s238 + $0x1e8] sm:$0xff]
        %v777 = vld [vmem:[%s238 + $0x1f0] sm:$0xff]
        %v778 = vld [vmem:[%s238 + $0x1f8] sm:$0xff]
        %p779 = scmp.eq.s32.totalorder %s23, 0
        %s780 = scalar_select %p779, 0, 7
        %s781 = smul.u32 %s780, 4
        %s782 = smul.addr %s781, 8
        %s783 = scalar_lea.vmem [#allocation2], %s782
        %v784 = vld [vmem:[%s783] sm:$0xff]
        %v785 = vld [vmem:[%s783 + $0x8] sm:$0xff]
        %v786 = vld [vmem:[%s783 + $0x10] sm:$0xff]
        %v787 = vld [vmem:[%s783 + $0x18] sm:$0xff]
        %788 = vmatprep.subr.mxu0 %v776
        %789 = vmatpush1.msra.mxu0 %v775
        %790 = vmatprep.subr.mxu0 %v772
        %791 = vmatpush1.msra.mxu0 %v771
        %792 = vmatprep.subr.mxu0 %v768
        %793 = vmatpush1.msra.mxu0 %v767
        %794 = vmatprep.subr.mxu0 %v764
        %795 = vmatpush1.msra.mxu0 %v763
        %796 = vmatprep.subr.mxu0 %v760
        %797 = vmatpush1.msra.mxu0 %v759
        %798 = vmatprep.subr.mxu0 %v756
        %799 = vmatpush1.msra.mxu0 %v755
        %800 = vmatprep.subr.mxu0 %v752
        %801 = vmatpush1.msra.mxu0 %v751
        %802 = vmatprep.subr.mxu0 %v748
        %803 = vmatpush1.msra.mxu0 %v747
        %804 = vmatprep.subr.mxu0 %v744
        %805 = vmatpush1.msra.mxu0 %v743
        %806 = vmatprep.subr.mxu0 %v740
        %807 = vmatpush1.msra.mxu0 %v739
        %808 = vmatprep.subr.mxu0 %v736
        %809 = vmatpush1.msra.mxu0 %v735
        %810 = vmatprep.subr.mxu0 %v732
        %811 = vmatpush1.msra.mxu0 %v731
        %812 = vmatprep.subr.mxu0 %v728
        %813 = vmatpush1.msra.mxu0 %v727
        %814 = vmatprep.subr.mxu0 %v724
        %815 = vmatpush1.msra.mxu0 %v723
        %816 = vmatprep.subr.mxu0 %v720
        %817 = vmatpush1.msra.mxu0 %v719
        %818 = vmatprep.subr.mxu0 %v716
        %819 = vmatpush1.msra.mxu0 %v715
        %820 = vmatprep.subr.mxu0 0.0
        %821 = vmatpush2.msra.mxu0 0.0
        %822 = vmatprep.subr.mxu0 0.0
        %823 = vmatpush2.msra.mxu0 0.0
        %824 = vmatprep.subr.mxu0 0.0
        %825 = vmatpush2.msra.mxu0 0.0
        %826 = vmatprep.subr.mxu0 0.0
        %827 = vmatpush2.msra.mxu0 0.0
        %828 = vmatprep.subr.mxu0 0.0
        %829 = vmatpush2.msra.mxu0 0.0
        %830 = vmatprep.subr.mxu0 0.0
        %831 = vmatpush2.msra.mxu0 0.0
        %832 = vmatprep.subr.mxu0 0.0
        %833 = vmatpush2.msra.mxu0 0.0
        %834 = vmatprep.subr.mxu0 0.0
        %835 = vmatpush2.msra.mxu0 0.0
        %836 = vmatprep.subr.mxu0 0.0
        %837 = vmatpush2.msra.mxu0 0.0
        %838 = vmatprep.subr.mxu0 0.0
        %839 = vmatpush2.msra.mxu0 0.0
        %840 = vmatprep.subr.mxu0 0.0
        %841 = vmatpush2.msra.mxu0 0.0
        %842 = vmatprep.subr.mxu0 0.0
        %843 = vmatpush2.msra.mxu0 0.0
        %844 = vmatprep.subr.mxu0 0.0
        %845 = vmatpush2.msra.mxu0 0.0
        %846 = vmatprep.subr.mxu0 0.0
        %847 = vmatpush2.msra.mxu0 0.0
        %848 = vmatprep.subr.mxu0 0.0
        %849 = vmatpush2.msra.mxu0 0.0
        %850 = vmatprep.subr.mxu0 0.0
        %851 = vmatpush2.msra.mxu0 0.0
        %852 = vmatprep.mubr.f32.mxu0 0.0
        %853 = vmatmul.mubr.f32.gmra.mxu0 0.0
        %v854 = vpop.f32.mrf.mxu0
        %v855 = vadd.f32 0.0, %v854
        %v856 = vpop.f32.mrf.mxu0
        %v857 = vadd.f32 0.0, %v856
        %858 = vdwg.mxu0
        %859 = vmatprep.subr.mxu0 %v778
        %860 = vmatpush1.msra.mxu0 %v777
        %861 = vmatprep.subr.mxu0 %v774
        %862 = vmatpush1.msra.mxu0 %v773
        %863 = vmatprep.subr.mxu0 %v770
        %864 = vmatpush1.msra.mxu0 %v769
        %865 = vmatprep.subr.mxu0 %v766
        %866 = vmatpush1.msra.mxu0 %v765
        %867 = vmatprep.subr.mxu0 %v762
        %868 = vmatpush1.msra.mxu0 %v761
        %869 = vmatprep.subr.mxu0 %v758
        %870 = vmatpush1.msra.mxu0 %v757
        %871 = vmatprep.subr.mxu0 %v754
        %872 = vmatpush1.msra.mxu0 %v753
        %873 = vmatprep.subr.mxu0 %v750
        %874 = vmatpush1.msra.mxu0 %v749
        %875 = vmatprep.subr.mxu0 %v746
        %876 = vmatpush1.msra.mxu0 %v745
        %877 = vmatprep.subr.mxu0 %v742
        %878 = vmatpush1.msra.mxu0 %v741
        %879 = vmatprep.subr.mxu0 %v738
        %880 = vmatpush1.msra.mxu0 %v737
        %881 = vmatprep.subr.mxu0 %v734
        %882 = vmatpush1.msra.mxu0 %v733
        %883 = vmatprep.subr.mxu0 %v730
        %884 = vmatpush1.msra.mxu0 %v729
        %885 = vmatprep.subr.mxu0 %v726
        %886 = vmatpush1.msra.mxu0 %v725
        %887 = vmatprep.subr.mxu0 %v722
        %888 = vmatpush1.msra.mxu0 %v721
        %889 = vmatprep.subr.mxu0 %v718
        %890 = vmatpush1.msra.mxu0 %v717
        %891 = vmatprep.subr.mxu0 0.0
        %892 = vmatpush2.msra.mxu0 0.0
        %893 = vmatprep.subr.mxu0 0.0
        %894 = vmatpush2.msra.mxu0 0.0
        %895 = vmatprep.subr.mxu0 0.0
        %896 = vmatpush2.msra.mxu0 0.0
        %897 = vmatprep.subr.mxu0 0.0
        %898 = vmatpush2.msra.mxu0 0.0
        %899 = vmatprep.subr.mxu0 0.0
        %900 = vmatpush2.msra.mxu0 0.0
        %901 = vmatprep.subr.mxu0 0.0
        %902 = vmatpush2.msra.mxu0 0.0
        %903 = vmatprep.subr.mxu0 0.0
        %904 = vmatpush2.msra.mxu0 0.0
        %905 = vmatprep.subr.mxu0 0.0
        %906 = vmatpush2.msra.mxu0 0.0
        %907 = vmatprep.subr.mxu0 0.0
        %908 = vmatpush2.msra.mxu0 0.0
        %909 = vmatprep.subr.mxu0 0.0
        %910 = vmatpush2.msra.mxu0 0.0
        %911 = vmatprep.subr.mxu0 0.0
        %912 = vmatpush2.msra.mxu0 0.0
        %913 = vmatprep.subr.mxu0 0.0
        %914 = vmatpush2.msra.mxu0 0.0
        %915 = vmatprep.subr.mxu0 0.0
        %916 = vmatpush2.msra.mxu0 0.0
        %917 = vmatprep.subr.mxu0 0.0
        %918 = vmatpush2.msra.mxu0 0.0
        %919 = vmatprep.subr.mxu0 0.0
        %920 = vmatpush2.msra.mxu0 0.0
        %921 = vmatprep.subr.mxu0 0.0
        %922 = vmatpush2.msra.mxu0 0.0
        %923 = vmatprep.mubr.f32.mxu0 0.0
        %924 = vmatmul.mubr.f32.gmra.mxu0 0.0
        %v925 = vpop.f32.mrf.mxu0
        %v926 = vadd.f32 0.0, %v925
        %v927 = vpop.f32.mrf.mxu0
        %v928 = vadd.f32 0.0, %v927
        %929 = vdwg.mxu0
        %v930 = vadd.f32 %v784, %v855
        %v931 = vadd.f32 %v785, %v857
        %v932 = vadd.f32 %v786, %v926
        %v933 = vadd.f32 %v787, %v928
        %v934 = vxor.u32 %v930, 2147483648
        %v935 = vmul.f32 %v934, 1.442695
        %v936 = vpow.pop %v935
        %v937 = vadd.f32 %v936, 1.0
        %v938 = vrcp.pop %v937
        %v939 = vmul.f32 1.0, %v938
        %v940 = vxor.u32 %v931, 2147483648
        %v941 = vmul.f32 %v940, 1.442695
        %v942 = vpow.pop %v941
        %v943 = vadd.f32 %v942, 1.0
        %v944 = vrcp.pop %v943
        %v945 = vmul.f32 1.0, %v944
        %v946 = vtanh.pop %v932
        %v947 = vxor.u32 %v933, 2147483648
        %v948 = vmul.f32 %v947, 1.442695
        %v949 = vpow.pop %v948
        %v950 = vadd.f32 %v949, 1.0
        %v951 = vrcp.pop %v950
        %v952 = vmul.f32 1.0, %v951
        %v953 = vmul.f32 %v945, 0.0
        %v954 = vmul.f32 %v939, %v946
        %v955 = vadd.f32 %v953, %v954
        %v956 = vtanh.pop %v955
        %v957 = vmul.f32 %v952, %v956
        %s958 = smul.u32 %s780, 8
        %s959 = scalar_lea.vmem %s271, %s958 [#allocation6]
        %960 = vst [vmem:[%s959] sm:$0xff] %v957
        %s961 = scalar_select %p779, 1, 6
        %s962 = smul.u32 %s961, 4
        %s963 = smul.addr %s962, 8
        %s964 = scalar_lea.vmem [#allocation2], %s963
        %v965 = vld [vmem:[%s964] sm:$0xff]
        %v966 = vld [vmem:[%s964 + $0x8] sm:$0xff]
        %v967 = vld [vmem:[%s964 + $0x10] sm:$0xff]
        %v968 = vld [vmem:[%s964 + $0x18] sm:$0xff]
        %969 = vmatprep.subr.mxu0 %v776
        %970 = vmatpush1.msra.mxu0 %v775
        %971 = vmatprep.subr.mxu0 %v772
        %972 = vmatpush1.msra.mxu0 %v771
        %973 = vmatprep.subr.mxu0 %v768
        %974 = vmatpush1.msra.mxu0 %v767
        %975 = vmatprep.subr.mxu0 %v764
        %976 = vmatpush1.msra.mxu0 %v763
        %977 = vmatprep.subr.mxu0 %v760
        %978 = vmatpush1.msra.mxu0 %v759
        %979 = vmatprep.subr.mxu0 %v756
        %980 = vmatpush1.msra.mxu0 %v755
        %981 = vmatprep.subr.mxu0 %v752
        %982 = vmatpush1.msra.mxu0 %v751
        %983 = vmatprep.subr.mxu0 %v748
        %984 = vmatpush1.msra.mxu0 %v747
        %985 = vmatprep.subr.mxu0 %v744
        %986 = vmatpush1.msra.mxu0 %v743
        %987 = vmatprep.subr.mxu0 %v740
        %988 = vmatpush1.msra.mxu0 %v739
        %989 = vmatprep.subr.mxu0 %v736
        %990 = vmatpush1.msra.mxu0 %v735
        %991 = vmatprep.subr.mxu0 %v732
        %992 = vmatpush1.msra.mxu0 %v731
        %993 = vmatprep.subr.mxu0 %v728
        %994 = vmatpush1.msra.mxu0 %v727
        %995 = vmatprep.subr.mxu0 %v724
        %996 = vmatpush1.msra.mxu0 %v723
        %997 = vmatprep.subr.mxu0 %v720
        %998 = vmatpush1.msra.mxu0 %v719
        %999 = vmatprep.subr.mxu0 %v716
        %1000 = vmatpush1.msra.mxu0 %v715
        %1001 = vmatprep.subr.mxu0 0.0
        %1002 = vmatpush2.msra.mxu0 0.0
        %1003 = vmatprep.subr.mxu0 0.0
        %1004 = vmatpush2.msra.mxu0 0.0
        %1005 = vmatprep.subr.mxu0 0.0
        %1006 = vmatpush2.msra.mxu0 0.0
        %1007 = vmatprep.subr.mxu0 0.0
        %1008 = vmatpush2.msra.mxu0 0.0
        %1009 = vmatprep.subr.mxu0 0.0
        %1010 = vmatpush2.msra.mxu0 0.0
        %1011 = vmatprep.subr.mxu0 0.0
        %1012 = vmatpush2.msra.mxu0 0.0
        %1013 = vmatprep.subr.mxu0 0.0
        %1014 = vmatpush2.msra.mxu0 0.0
        %1015 = vmatprep.subr.mxu0 0.0
        %1016 = vmatpush2.msra.mxu0 0.0
        %1017 = vmatprep.subr.mxu0 0.0
        %1018 = vmatpush2.msra.mxu0 0.0
        %1019 = vmatprep.subr.mxu0 0.0
        %1020 = vmatpush2.msra.mxu0 0.0
        %1021 = vmatprep.subr.mxu0 0.0
        %1022 = vmatpush2.msra.mxu0 0.0
        %1023 = vmatprep.subr.mxu0 0.0
        %1024 = vmatpush2.msra.mxu0 0.0
        %1025 = vmatprep.subr.mxu0 0.0
        %1026 = vmatpush2.msra.mxu0 0.0
        %1027 = vmatprep.subr.mxu0 0.0
        %1028 = vmatpush2.msra.mxu0 0.0
        %1029 = vmatprep.subr.mxu0 0.0
        %1030 = vmatpush2.msra.mxu0 0.0
        %1031 = vmatprep.subr.mxu0 0.0
        %1032 = vmatpush2.msra.mxu0 0.0
        %1033 = vmatprep.mubr.f32.mxu0 0.0
        %1034 = vmatmul.mubr.f32.gmra.mxu0 %v957
        %v1035 = vpop.f32.mrf.mxu0
        %v1036 = vadd.f32 0.0, %v1035
        %v1037 = vpop.f32.mrf.mxu0
        %v1038 = vadd.f32 0.0, %v1037
        %1039 = vdwg.mxu0
        %1040 = vmatprep.subr.mxu0 %v778
        %1041 = vmatpush1.msra.mxu0 %v777
        %1042 = vmatprep.subr.mxu0 %v774
        %1043 = vmatpush1.msra.mxu0 %v773
        %1044 = vmatprep.subr.mxu0 %v770
        %1045 = vmatpush1.msra.mxu0 %v769
        %1046 = vmatprep.subr.mxu0 %v766
        %1047 = vmatpush1.msra.mxu0 %v765
        %1048 = vmatprep.subr.mxu0 %v762
        %1049 = vmatpush1.msra.mxu0 %v761
        %1050 = vmatprep.subr.mxu0 %v758
        %1051 = vmatpush1.msra.mxu0 %v757
        %1052 = vmatprep.subr.mxu0 %v754
        %1053 = vmatpush1.msra.mxu0 %v753
        %1054 = vmatprep.subr.mxu0 %v750
        %1055 = vmatpush1.msra.mxu0 %v749
        %1056 = vmatprep.subr.mxu0 %v746
        %1057 = vmatpush1.msra.mxu0 %v745
        %1058 = vmatprep.subr.mxu0 %v742
        %1059 = vmatpush1.msra.mxu0 %v741
        %1060 = vmatprep.subr.mxu0 %v738
        %1061 = vmatpush1.msra.mxu0 %v737
        %1062 = vmatprep.subr.mxu0 %v734
        %1063 = vmatpush1.msra.mxu0 %v733
        %1064 = vmatprep.subr.mxu0 %v730
        %1065 = vmatpush1.msra.mxu0 %v729
        %1066 = vmatprep.subr.mxu0 %v726
        %1067 = vmatpush1.msra.mxu0 %v725
        %1068 = vmatprep.subr.mxu0 %v722
        %1069 = vmatpush1.msra.mxu0 %v721
        %1070 = vmatprep.subr.mxu0 %v718
        %1071 = vmatpush1.msra.mxu0 %v717
        %1072 = vmatprep.subr.mxu0 0.0
        %1073 = vmatpush2.msra.mxu0 0.0
        %1074 = vmatprep.subr.mxu0 0.0
        %1075 = vmatpush2.msra.mxu0 0.0
        %1076 = vmatprep.subr.mxu0 0.0
        %1077 = vmatpush2.msra.mxu0 0.0
        %1078 = vmatprep.subr.mxu0 0.0
        %1079 = vmatpush2.msra.mxu0 0.0
        %1080 = vmatprep.subr.mxu0 0.0
        %1081 = vmatpush2.msra.mxu0 0.0
        %1082 = vmatprep.subr.mxu0 0.0
        %1083 = vmatpush2.msra.mxu0 0.0
        %1084 = vmatprep.subr.mxu0 0.0
        %1085 = vmatpush2.msra.mxu0 0.0
        %1086 = vmatprep.subr.mxu0 0.0
        %1087 = vmatpush2.msra.mxu0 0.0
        %1088 = vmatprep.subr.mxu0 0.0
        %1089 = vmatpush2.msra.mxu0 0.0
        %1090 = vmatprep.subr.mxu0 0.0
        %1091 = vmatpush2.msra.mxu0 0.0
        %1092 = vmatprep.subr.mxu0 0.0
        %1093 = vmatpush2.msra.mxu0 0.0
        %1094 = vmatprep.subr.mxu0 0.0
        %1095 = vmatpush2.msra.mxu0 0.0
        %1096 = vmatprep.subr.mxu0 0.0
        %1097 = vmatpush2.msra.mxu0 0.0
        %1098 = vmatprep.subr.mxu0 0.0
        %1099 = vmatpush2.msra.mxu0 0.0
        %1100 = vmatprep.subr.mxu0 0.0
        %1101 = vmatpush2.msra.mxu0 0.0
        %1102 = vmatprep.subr.mxu0 0.0
        %1103 = vmatpush2.msra.mxu0 0.0
        %1104 = vmatprep.mubr.f32.mxu0 0.0
        %1105 = vmatmul.mubr.f32.gmra.mxu0 %v957
        %v1106 = vpop.f32.mrf.mxu0
        %v1107 = vadd.f32 0.0, %v1106
        %v1108 = vpop.f32.mrf.mxu0
        %v1109 = vadd.f32 0.0, %v1108
        %1110 = vdwg.mxu0
        %v1111 = vadd.f32 %v965, %v1036
        %v1112 = vadd.f32 %v966, %v1038
        %v1113 = vadd.f32 %v967, %v1107
        %v1114 = vadd.f32 %v968, %v1109
        %v1115 = vxor.u32 %v1111, 2147483648
        %v1116 = vmul.f32 %v1115, 1.442695
        %v1117 = vpow.pop %v1116
        %v1118 = vadd.f32 %v1117, 1.0
        %v1119 = vrcp.pop %v1118
        %v1120 = vmul.f32 1.0, %v1119
        %v1121 = vxor.u32 %v1112, 2147483648
        %v1122 = vmul.f32 %v1121, 1.442695
        %v1123 = vpow.pop %v1122
        %v1124 = vadd.f32 %v1123, 1.0
        %v1125 = vrcp.pop %v1124
        %v1126 = vmul.f32 1.0, %v1125
        %v1127 = vtanh.pop %v1113
        %v1128 = vxor.u32 %v1114, 2147483648
        %v1129 = vmul.f32 %v1128, 1.442695
        %v1130 = vpow.pop %v1129
        %v1131 = vadd.f32 %v1130, 1.0
        %v1132 = vrcp.pop %v1131
        %v1133 = vmul.f32 1.0, %v1132
        %v1134 = vmul.f32 %v1126, %v955
        %v1135 = vmul.f32 %v1120, %v1127
        %v1136 = vadd.f32 %v1134, %v1135
        %v1137 = vtanh.pop %v1136
        %v1138 = vmul.f32 %v1133, %v1137
        %s1139 = smul.u32 %s961, 8
        %s1140 = scalar_lea.vmem %s271, %s1139 [#allocation6]
        %1141 = vst [vmem:[%s1140] sm:$0xff] %v1138
        %s1142 = scalar_select %p779, 2, 5
        %s1143 = smul.u32 %s1142, 4
        %s1144 = smul.addr %s1143, 8
        %s1145 = scalar_lea.vmem [#allocation2], %s1144
        %v1146 = vld [vmem:[%s1145] sm:$0xff]
        %v1147 = vld [vmem:[%s1145 + $0x8] sm:$0xff]
        %v1148 = vld [vmem:[%s1145 + $0x10] sm:$0xff]
        %v1149 = vld [vmem:[%s1145 + $0x18] sm:$0xff]
        %1150 = vmatprep.subr.mxu0 %v776
        %1151 = vmatpush1.msra.mxu0 %v775
        %1152 = vmatprep.subr.mxu0 %v772
        %1153 = vmatpush1.msra.mxu0 %v771
        %1154 = vmatprep.subr.mxu0 %v768
        %1155 = vmatpush1.msra.mxu0 %v767
        %1156 = vmatprep.subr.mxu0 %v764
        %1157 = vmatpush1.msra.mxu0 %v763
        %1158 = vmatprep.subr.mxu0 %v760
        %1159 = vmatpush1.msra.mxu0 %v759
        %1160 = vmatprep.subr.mxu0 %v756
        %1161 = vmatpush1.msra.mxu0 %v755
        %1162 = vmatprep.subr.mxu0 %v752
        %1163 = vmatpush1.msra.mxu0 %v751
        %1164 = vmatprep.subr.mxu0 %v748
        %1165 = vmatpush1.msra.mxu0 %v747
        %1166 = vmatprep.subr.mxu0 %v744
        %1167 = vmatpush1.msra.mxu0 %v743
        %1168 = vmatprep.subr.mxu0 %v740
        %1169 = vmatpush1.msra.mxu0 %v739
        %1170 = vmatprep.subr.mxu0 %v736
        %1171 = vmatpush1.msra.mxu0 %v735
        %1172 = vmatprep.subr.mxu0 %v732
        %1173 = vmatpush1.msra.mxu0 %v731
        %1174 = vmatprep.subr.mxu0 %v728
        %1175 = vmatpush1.msra.mxu0 %v727
        %1176 = vmatprep.subr.mxu0 %v724
        %1177 = vmatpush1.msra.mxu0 %v723
        %1178 = vmatprep.subr.mxu0 %v720
        %1179 = vmatpush1.msra.mxu0 %v719
        %1180 = vmatprep.subr.mxu0 %v716
        %1181 = vmatpush1.msra.mxu0 %v715
        %1182 = vmatprep.subr.mxu0 0.0
        %1183 = vmatpush2.msra.mxu0 0.0
        %1184 = vmatprep.subr.mxu0 0.0
        %1185 = vmatpush2.msra.mxu0 0.0
        %1186 = vmatprep.subr.mxu0 0.0
        %1187 = vmatpush2.msra.mxu0 0.0
        %1188 = vmatprep.subr.mxu0 0.0
        %1189 = vmatpush2.msra.mxu0 0.0
        %1190 = vmatprep.subr.mxu0 0.0
        %1191 = vmatpush2.msra.mxu0 0.0
        %1192 = vmatprep.subr.mxu0 0.0
        %1193 = vmatpush2.msra.mxu0 0.0
        %1194 = vmatprep.subr.mxu0 0.0
        %1195 = vmatpush2.msra.mxu0 0.0
        %1196 = vmatprep.subr.mxu0 0.0
        %1197 = vmatpush2.msra.mxu0 0.0
        %1198 = vmatprep.subr.mxu0 0.0
        %1199 = vmatpush2.msra.mxu0 0.0
        %1200 = vmatprep.subr.mxu0 0.0
        %1201 = vmatpush2.msra.mxu0 0.0
        %1202 = vmatprep.subr.mxu0 0.0
        %1203 = vmatpush2.msra.mxu0 0.0
        %1204 = vmatprep.subr.mxu0 0.0
        %1205 = vmatpush2.msra.mxu0 0.0
        %1206 = vmatprep.subr.mxu0 0.0
        %1207 = vmatpush2.msra.mxu0 0.0
        %1208 = vmatprep.subr.mxu0 0.0
        %1209 = vmatpush2.msra.mxu0 0.0
        %1210 = vmatprep.subr.mxu0 0.0
        %1211 = vmatpush2.msra.mxu0 0.0
        %1212 = vmatprep.subr.mxu0 0.0
        %1213 = vmatpush2.msra.mxu0 0.0
        %1214 = vmatprep.mubr.f32.mxu0 0.0
        %1215 = vmatmul.mubr.f32.gmra.mxu0 %v1138
        %v1216 = vpop.f32.mrf.mxu0
        %v1217 = vadd.f32 0.0, %v1216
        %v1218 = vpop.f32.mrf.mxu0
        %v1219 = vadd.f32 0.0, %v1218
        %1220 = vdwg.mxu0
        %1221 = vmatprep.subr.mxu0 %v778
        %1222 = vmatpush1.msra.mxu0 %v777
        %1223 = vmatprep.subr.mxu0 %v774
        %1224 = vmatpush1.msra.mxu0 %v773
        %1225 = vmatprep.subr.mxu0 %v770
        %1226 = vmatpush1.msra.mxu0 %v769
        %1227 = vmatprep.subr.mxu0 %v766
        %1228 = vmatpush1.msra.mxu0 %v765
        %1229 = vmatprep.subr.mxu0 %v762
        %1230 = vmatpush1.msra.mxu0 %v761
        %1231 = vmatprep.subr.mxu0 %v758
        %1232 = vmatpush1.msra.mxu0 %v757
        %1233 = vmatprep.subr.mxu0 %v754
        %1234 = vmatpush1.msra.mxu0 %v753
        %1235 = vmatprep.subr.mxu0 %v750
        %1236 = vmatpush1.msra.mxu0 %v749
        %1237 = vmatprep.subr.mxu0 %v746
        %1238 = vmatpush1.msra.mxu0 %v745
        %1239 = vmatprep.subr.mxu0 %v742
        %1240 = vmatpush1.msra.mxu0 %v741
        %1241 = vmatprep.subr.mxu0 %v738
        %1242 = vmatpush1.msra.mxu0 %v737
        %1243 = vmatprep.subr.mxu0 %v734
        %1244 = vmatpush1.msra.mxu0 %v733
        %1245 = vmatprep.subr.mxu0 %v730
        %1246 = vmatpush1.msra.mxu0 %v729
        %1247 = vmatprep.subr.mxu0 %v726
        %1248 = vmatpush1.msra.mxu0 %v725
        %1249 = vmatprep.subr.mxu0 %v722
        %1250 = vmatpush1.msra.mxu0 %v721
        %1251 = vmatprep.subr.mxu0 %v718
        %1252 = vmatpush1.msra.mxu0 %v717
        %1253 = vmatprep.subr.mxu0 0.0
        %1254 = vmatpush2.msra.mxu0 0.0
        %1255 = vmatprep.subr.mxu0 0.0
        %1256 = vmatpush2.msra.mxu0 0.0
        %1257 = vmatprep.subr.mxu0 0.0
        %1258 = vmatpush2.msra.mxu0 0.0
        %1259 = vmatprep.subr.mxu0 0.0
        %1260 = vmatpush2.msra.mxu0 0.0
        %1261 = vmatprep.subr.mxu0 0.0
        %1262 = vmatpush2.msra.mxu0 0.0
        %1263 = vmatprep.subr.mxu0 0.0
        %1264 = vmatpush2.msra.mxu0 0.0
        %1265 = vmatprep.subr.mxu0 0.0
        %1266 = vmatpush2.msra.mxu0 0.0
        %1267 = vmatprep.subr.mxu0 0.0
        %1268 = vmatpush2.msra.mxu0 0.0
        %1269 = vmatprep.subr.mxu0 0.0
        %1270 = vmatpush2.msra.mxu0 0.0
        %1271 = vmatprep.subr.mxu0 0.0
        %1272 = vmatpush2.msra.mxu0 0.0
        %1273 = vmatprep.subr.mxu0 0.0
        %1274 = vmatpush2.msra.mxu0 0.0
        %1275 = vmatprep.subr.mxu0 0.0
        %1276 = vmatpush2.msra.mxu0 0.0
        %1277 = vmatprep.subr.mxu0 0.0
        %1278 = vmatpush2.msra.mxu0 0.0
        %1279 = vmatprep.subr.mxu0 0.0
        %1280 = vmatpush2.msra.mxu0 0.0
        %1281 = vmatprep.subr.mxu0 0.0
        %1282 = vmatpush2.msra.mxu0 0.0
        %1283 = vmatprep.subr.mxu0 0.0
        %1284 = vmatpush2.msra.mxu0 0.0
        %1285 = vmatprep.mubr.f32.mxu0 0.0
        %1286 = vmatmul.mubr.f32.gmra.mxu0 %v1138
        %v1287 = vpop.f32.mrf.mxu0
        %v1288 = vadd.f32 0.0, %v1287
        %v1289 = vpop.f32.mrf.mxu0
        %v1290 = vadd.f32 0.0, %v1289
        %1291 = vdwg.mxu0
        %v1292 = vadd.f32 %v1146, %v1217
        %v1293 = vadd.f32 %v1147, %v1219
        %v1294 = vadd.f32 %v1148, %v1288
        %v1295 = vadd.f32 %v1149, %v1290
        %v1296 = vxor.u32 %v1292, 2147483648
        %v1297 = vmul.f32 %v1296, 1.442695
        %v1298 = vpow.pop %v1297
        %v1299 = vadd.f32 %v1298, 1.0
        %v1300 = vrcp.pop %v1299
        %v1301 = vmul.f32 1.0, %v1300
        %v1302 = vxor.u32 %v1293, 2147483648
        %v1303 = vmul.f32 %v1302, 1.442695
        %v1304 = vpow.pop %v1303
        %v1305 = vadd.f32 %v1304, 1.0
        %v1306 = vrcp.pop %v1305
        %v1307 = vmul.f32 1.0, %v1306
        %v1308 = vtanh.pop %v1294
        %v1309 = vxor.u32 %v1295, 2147483648
        %v1310 = vmul.f32 %v1309, 1.442695
        %v1311 = vpow.pop %v1310
        %v1312 = vadd.f32 %v1311, 1.0
        %v1313 = vrcp.pop %v1312
        %v1314 = vmul.f32 1.0, %v1313
        %v1315 = vmul.f32 %v1307, %v1136
        %v1316 = vmul.f32 %v1301, %v1308
        %v1317 = vadd.f32 %v1315, %v1316
        %v1318 = vtanh.pop %v1317
        %v1319 = vmul.f32 %v1314, %v1318
        %s1320 = smul.u32 %s1142, 8
        %s1321 = scalar_lea.vmem %s271, %s1320 [#allocation6]
        %1322 = vst [vmem:[%s1321] sm:$0xff] %v1319
        %s1323 = scalar_select %p779, 3, 4
        %s1324 = smul.u32 %s1323, 4
        %s1325 = smul.addr %s1324, 8
        %s1326 = scalar_lea.vmem [#allocation2], %s1325
        %v1327 = vld [vmem:[%s1326] sm:$0xff]
        %v1328 = vld [vmem:[%s1326 + $0x8] sm:$0xff]
        %v1329 = vld [vmem:[%s1326 + $0x10] sm:$0xff]
        %v1330 = vld [vmem:[%s1326 + $0x18] sm:$0xff]
        %1331 = vmatprep.subr.mxu0 %v776
        %1332 = vmatpush1.msra.mxu0 %v775
        %1333 = vmatprep.subr.mxu0 %v772
        %1334 = vmatpush1.msra.mxu0 %v771
        %1335 = vmatprep.subr.mxu0 %v768
        %1336 = vmatpush1.msra.mxu0 %v767
        %1337 = vmatprep.subr.mxu0 %v764
        %1338 = vmatpush1.msra.mxu0 %v763
        %1339 = vmatprep.subr.mxu0 %v760
        %1340 = vmatpush1.msra.mxu0 %v759
        %1341 = vmatprep.subr.mxu0 %v756
        %1342 = vmatpush1.msra.mxu0 %v755
        %1343 = vmatprep.subr.mxu0 %v752
        %1344 = vmatpush1.msra.mxu0 %v751
        %1345 = vmatprep.subr.mxu0 %v748
        %1346 = vmatpush1.msra.mxu0 %v747
        %1347 = vmatprep.subr.mxu0 %v744
        %1348 = vmatpush1.msra.mxu0 %v743
        %1349 = vmatprep.subr.mxu0 %v740
        %1350 = vmatpush1.msra.mxu0 %v739
        %1351 = vmatprep.subr.mxu0 %v736
        %1352 = vmatpush1.msra.mxu0 %v735
        %1353 = vmatprep.subr.mxu0 %v732
        %1354 = vmatpush1.msra.mxu0 %v731
        %1355 = vmatprep.subr.mxu0 %v728
        %1356 = vmatpush1.msra.mxu0 %v727
        %1357 = vmatprep.subr.mxu0 %v724
        %1358 = vmatpush1.msra.mxu0 %v723
        %1359 = vmatprep.subr.mxu0 %v720
        %1360 = vmatpush1.msra.mxu0 %v719
        %1361 = vmatprep.subr.mxu0 %v716
        %1362 = vmatpush1.msra.mxu0 %v715
        %1363 = vmatprep.subr.mxu0 0.0
        %1364 = vmatpush2.msra.mxu0 0.0
        %1365 = vmatprep.subr.mxu0 0.0
        %1366 = vmatpush2.msra.mxu0 0.0
        %1367 = vmatprep.subr.mxu0 0.0
        %1368 = vmatpush2.msra.mxu0 0.0
        %1369 = vmatprep.subr.mxu0 0.0
        %1370 = vmatpush2.msra.mxu0 0.0
        %1371 = vmatprep.subr.mxu0 0.0
        %1372 = vmatpush2.msra.mxu0 0.0
        %1373 = vmatprep.subr.mxu0 0.0
        %1374 = vmatpush2.msra.mxu0 0.0
        %1375 = vmatprep.subr.mxu0 0.0
        %1376 = vmatpush2.msra.mxu0 0.0
        %1377 = vmatprep.subr.mxu0 0.0
        %1378 = vmatpush2.msra.mxu0 0.0
        %1379 = vmatprep.subr.mxu0 0.0
        %1380 = vmatpush2.msra.mxu0 0.0
        %1381 = vmatprep.subr.mxu0 0.0
        %1382 = vmatpush2.msra.mxu0 0.0
        %1383 = vmatprep.subr.mxu0 0.0
        %1384 = vmatpush2.msra.mxu0 0.0
        %1385 = vmatprep.subr.mxu0 0.0
        %1386 = vmatpush2.msra.mxu0 0.0
        %1387 = vmatprep.subr.mxu0 0.0
        %1388 = vmatpush2.msra.mxu0 0.0
        %1389 = vmatprep.subr.mxu0 0.0
        %1390 = vmatpush2.msra.mxu0 0.0
        %1391 = vmatprep.subr.mxu0 0.0
        %1392 = vmatpush2.msra.mxu0 0.0
        %1393 = vmatprep.subr.mxu0 0.0
        %1394 = vmatpush2.msra.mxu0 0.0
        %1395 = vmatprep.mubr.f32.mxu0 0.0
        %1396 = vmatmul.mubr.f32.gmra.mxu0 %v1319
        %v1397 = vpop.f32.mrf.mxu0
        %v1398 = vadd.f32 0.0, %v1397
        %v1399 = vpop.f32.mrf.mxu0
        %v1400 = vadd.f32 0.0, %v1399
        %1401 = vdwg.mxu0
        %1402 = vmatprep.subr.mxu0 %v778
        %1403 = vmatpush1.msra.mxu0 %v777
        %1404 = vmatprep.subr.mxu0 %v774
        %1405 = vmatpush1.msra.mxu0 %v773
        %1406 = vmatprep.subr.mxu0 %v770
        %1407 = vmatpush1.msra.mxu0 %v769
        %1408 = vmatprep.subr.mxu0 %v766
        %1409 = vmatpush1.msra.mxu0 %v765
        %1410 = vmatprep.subr.mxu0 %v762
        %1411 = vmatpush1.msra.mxu0 %v761
        %1412 = vmatprep.subr.mxu0 %v758
        %1413 = vmatpush1.msra.mxu0 %v757
        %1414 = vmatprep.subr.mxu0 %v754
        %1415 = vmatpush1.msra.mxu0 %v753
        %1416 = vmatprep.subr.mxu0 %v750
        %1417 = vmatpush1.msra.mxu0 %v749
        %1418 = vmatprep.subr.mxu0 %v746
        %1419 = vmatpush1.msra.mxu0 %v745
        %1420 = vmatprep.subr.mxu0 %v742
        %1421 = vmatpush1.msra.mxu0 %v741
        %1422 = vmatprep.subr.mxu0 %v738
        %1423 = vmatpush1.msra.mxu0 %v737
        %1424 = vmatprep.subr.mxu0 %v734
        %1425 = vmatpush1.msra.mxu0 %v733
        %1426 = vmatprep.subr.mxu0 %v730
        %1427 = vmatpush1.msra.mxu0 %v729
        %1428 = vmatprep.subr.mxu0 %v726
        %1429 = vmatpush1.msra.mxu0 %v725
        %1430 = vmatprep.subr.mxu0 %v722
        %1431 = vmatpush1.msra.mxu0 %v721
        %1432 = vmatprep.subr.mxu0 %v718
        %1433 = vmatpush1.msra.mxu0 %v717
        %1434 = vmatprep.subr.mxu0 0.0
        %1435 = vmatpush2.msra.mxu0 0.0
        %1436 = vmatprep.subr.mxu0 0.0
        %1437 = vmatpush2.msra.mxu0 0.0
        %1438 = vmatprep.subr.mxu0 0.0
        %1439 = vmatpush2.msra.mxu0 0.0
        %1440 = vmatprep.subr.mxu0 0.0
        %1441 = vmatpush2.msra.mxu0 0.0
        %1442 = vmatprep.subr.mxu0 0.0
        %1443 = vmatpush2.msra.mxu0 0.0
        %1444 = vmatprep.subr.mxu0 0.0
        %1445 = vmatpush2.msra.mxu0 0.0
        %1446 = vmatprep.subr.mxu0 0.0
        %1447 = vmatpush2.msra.mxu0 0.0
        %1448 = vmatprep.subr.mxu0 0.0
        %1449 = vmatpush2.msra.mxu0 0.0
        %1450 = vmatprep.subr.mxu0 0.0
        %1451 = vmatpush2.msra.mxu0 0.0
        %1452 = vmatprep.subr.mxu0 0.0
        %1453 = vmatpush2.msra.mxu0 0.0
        %1454 = vmatprep.subr.mxu0 0.0
        %1455 = vmatpush2.msra.mxu0 0.0
        %1456 = vmatprep.subr.mxu0 0.0
        %1457 = vmatpush2.msra.mxu0 0.0
        %1458 = vmatprep.subr.mxu0 0.0
        %1459 = vmatpush2.msra.mxu0 0.0
        %1460 = vmatprep.subr.mxu0 0.0
        %1461 = vmatpush2.msra.mxu0 0.0
        %1462 = vmatprep.subr.mxu0 0.0
        %1463 = vmatpush2.msra.mxu0 0.0
        %1464 = vmatprep.subr.mxu0 0.0
        %1465 = vmatpush2.msra.mxu0 0.0
        %1466 = vmatprep.mubr.f32.mxu0 0.0
        %1467 = vmatmul.mubr.f32.gmra.mxu0 %v1319
        %v1468 = vpop.f32.mrf.mxu0
        %v1469 = vadd.f32 0.0, %v1468
        %v1470 = vpop.f32.mrf.mxu0
        %v1471 = vadd.f32 0.0, %v1470
        %1472 = vdwg.mxu0
        %v1473 = vadd.f32 %v1327, %v1398
        %v1474 = vadd.f32 %v1328, %v1400
        %v1475 = vadd.f32 %v1329, %v1469
        %v1476 = vadd.f32 %v1330, %v1471
        %v1477 = vxor.u32 %v1473, 2147483648
        %v1478 = vmul.f32 %v1477, 1.442695
        %v1479 = vpow.pop %v1478
        %v1480 = vadd.f32 %v1479, 1.0
        %v1481 = vrcp.pop %v1480
        %v1482 = vmul.f32 1.0, %v1481
        %v1483 = vxor.u32 %v1474, 2147483648
        %v1484 = vmul.f32 %v1483, 1.442695
        %v1485 = vpow.pop %v1484
        %v1486 = vadd.f32 %v1485, 1.0
        %v1487 = vrcp.pop %v1486
        %v1488 = vmul.f32 1.0, %v1487
        %v1489 = vtanh.pop %v1475
        %v1490 = vxor.u32 %v1476, 2147483648
        %v1491 = vmul.f32 %v1490, 1.442695
        %v1492 = vpow.pop %v1491
        %v1493 = vadd.f32 %v1492, 1.0
        %v1494 = vrcp.pop %v1493
        %v1495 = vmul.f32 1.0, %v1494
        %v1496 = vmul.f32 %v1488, %v1317
        %v1497 = vmul.f32 %v1482, %v1489
        %v1498 = vadd.f32 %v1496, %v1497
        %v1499 = vtanh.pop %v1498
        %v1500 = vmul.f32 %v1495, %v1499
        %s1501 = smul.u32 %s1323, 8
        %s1502 = scalar_lea.vmem %s271, %s1501 [#allocation6]
        %1503 = vst [vmem:[%s1502] sm:$0xff] %v1500
        %s1504 = scalar_select %p779, 4, 3
        %s1505 = smul.u32 %s1504, 4
        %s1506 = smul.addr %s1505, 8
        %s1507 = scalar_lea.vmem [#allocation2], %s1506
        %v1508 = vld [vmem:[%s1507] sm:$0xff]
        %v1509 = vld [vmem:[%s1507 + $0x8] sm:$0xff]
        %v1510 = vld [vmem:[%s1507 + $0x10] sm:$0xff]
        %v1511 = vld [vmem:[%s1507 + $0x18] sm:$0xff]
        %1512 = vmatprep.subr.mxu0 %v776
        %1513 = vmatpush1.msra.mxu0 %v775
        %1514 = vmatprep.subr.mxu0 %v772
        %1515 = vmatpush1.msra.mxu0 %v771
        %1516 = vmatprep.subr.mxu0 %v768
        %1517 = vmatpush1.msra.mxu0 %v767
        %1518 = vmatprep.subr.mxu0 %v764
        %1519 = vmatpush1.msra.mxu0 %v763
        %1520 = vmatprep.subr.mxu0 %v760
        %1521 = vmatpush1.msra.mxu0 %v759
        %1522 = vmatprep.subr.mxu0 %v756
        %1523 = vmatpush1.msra.mxu0 %v755
        %1524 = vmatprep.subr.mxu0 %v752
        %1525 = vmatpush1.msra.mxu0 %v751
        %1526 = vmatprep.subr.mxu0 %v748
        %1527 = vmatpush1.msra.mxu0 %v747
        %1528 = vmatprep.subr.mxu0 %v744
        %1529 = vmatpush1.msra.mxu0 %v743
        %1530 = vmatprep.subr.mxu0 %v740
        %1531 = vmatpush1.msra.mxu0 %v739
        %1532 = vmatprep.subr.mxu0 %v736
        %1533 = vmatpush1.msra.mxu0 %v735
        %1534 = vmatprep.subr.mxu0 %v732
        %1535 = vmatpush1.msra.mxu0 %v731
        %1536 = vmatprep.subr.mxu0 %v728
        %1537 = vmatpush1.msra.mxu0 %v727
        %1538 = vmatprep.subr.mxu0 %v724
        %1539 = vmatpush1.msra.mxu0 %v723
        %1540 = vmatprep.subr.mxu0 %v720
        %1541 = vmatpush1.msra.mxu0 %v719
        %1542 = vmatprep.subr.mxu0 %v716
        %1543 = vmatpush1.msra.mxu0 %v715
        %1544 = vmatprep.subr.mxu0 0.0
        %1545 = vmatpush2.msra.mxu0 0.0
        %1546 = vmatprep.subr.mxu0 0.0
        %1547 = vmatpush2.msra.mxu0 0.0
        %1548 = vmatprep.subr.mxu0 0.0
        %1549 = vmatpush2.msra.mxu0 0.0
        %1550 = vmatprep.subr.mxu0 0.0
        %1551 = vmatpush2.msra.mxu0 0.0
        %1552 = vmatprep.subr.mxu0 0.0
        %1553 = vmatpush2.msra.mxu0 0.0
        %1554 = vmatprep.subr.mxu0 0.0
        %1555 = vmatpush2.msra.mxu0 0.0
        %1556 = vmatprep.subr.mxu0 0.0
        %1557 = vmatpush2.msra.mxu0 0.0
        %1558 = vmatprep.subr.mxu0 0.0
        %1559 = vmatpush2.msra.mxu0 0.0
        %1560 = vmatprep.subr.mxu0 0.0
        %1561 = vmatpush2.msra.mxu0 0.0
        %1562 = vmatprep.subr.mxu0 0.0
        %1563 = vmatpush2.msra.mxu0 0.0
        %1564 = vmatprep.subr.mxu0 0.0
        %1565 = vmatpush2.msra.mxu0 0.0
        %1566 = vmatprep.subr.mxu0 0.0
        %1567 = vmatpush2.msra.mxu0 0.0
        %1568 = vmatprep.subr.mxu0 0.0
        %1569 = vmatpush2.msra.mxu0 0.0
        %1570 = vmatprep.subr.mxu0 0.0
        %1571 = vmatpush2.msra.mxu0 0.0
        %1572 = vmatprep.subr.mxu0 0.0
        %1573 = vmatpush2.msra.mxu0 0.0
        %1574 = vmatprep.subr.mxu0 0.0
        %1575 = vmatpush2.msra.mxu0 0.0
        %1576 = vmatprep.mubr.f32.mxu0 0.0
        %1577 = vmatmul.mubr.f32.gmra.mxu0 %v1500
        %v1578 = vpop.f32.mrf.mxu0
        %v1579 = vadd.f32 0.0, %v1578
        %v1580 = vpop.f32.mrf.mxu0
        %v1581 = vadd.f32 0.0, %v1580
        %1582 = vdwg.mxu0
        %1583 = vmatprep.subr.mxu0 %v778
        %1584 = vmatpush1.msra.mxu0 %v777
        %1585 = vmatprep.subr.mxu0 %v774
        %1586 = vmatpush1.msra.mxu0 %v773
        %1587 = vmatprep.subr.mxu0 %v770
        %1588 = vmatpush1.msra.mxu0 %v769
        %1589 = vmatprep.subr.mxu0 %v766
        %1590 = vmatpush1.msra.mxu0 %v765
        %1591 = vmatprep.subr.mxu0 %v762
        %1592 = vmatpush1.msra.mxu0 %v761
        %1593 = vmatprep.subr.mxu0 %v758
        %1594 = vmatpush1.msra.mxu0 %v757
        %1595 = vmatprep.subr.mxu0 %v754
        %1596 = vmatpush1.msra.mxu0 %v753
        %1597 = vmatprep.subr.mxu0 %v750
        %1598 = vmatpush1.msra.mxu0 %v749
        %1599 = vmatprep.subr.mxu0 %v746
        %1600 = vmatpush1.msra.mxu0 %v745
        %1601 = vmatprep.subr.mxu0 %v742
        %1602 = vmatpush1.msra.mxu0 %v741
        %1603 = vmatprep.subr.mxu0 %v738
        %1604 = vmatpush1.msra.mxu0 %v737
        %1605 = vmatprep.subr.mxu0 %v734
        %1606 = vmatpush1.msra.mxu0 %v733
        %1607 = vmatprep.subr.mxu0 %v730
        %1608 = vmatpush1.msra.mxu0 %v729
        %1609 = vmatprep.subr.mxu0 %v726
        %1610 = vmatpush1.msra.mxu0 %v725
        %1611 = vmatprep.subr.mxu0 %v722
        %1612 = vmatpush1.msra.mxu0 %v721
        %1613 = vmatprep.subr.mxu0 %v718
        %1614 = vmatpush1.msra.mxu0 %v717
        %1615 = vmatprep.subr.mxu0 0.0
        %1616 = vmatpush2.msra.mxu0 0.0
        %1617 = vmatprep.subr.mxu0 0.0
        %1618 = vmatpush2.msra.mxu0 0.0
        %1619 = vmatprep.subr.mxu0 0.0
        %1620 = vmatpush2.msra.mxu0 0.0
        %1621 = vmatprep.subr.mxu0 0.0
        %1622 = vmatpush2.msra.mxu0 0.0
        %1623 = vmatprep.subr.mxu0 0.0
        %1624 = vmatpush2.msra.mxu0 0.0
        %1625 = vmatprep.subr.mxu0 0.0
        %1626 = vmatpush2.msra.mxu0 0.0
        %1627 = vmatprep.subr.mxu0 0.0
        %1628 = vmatpush2.msra.mxu0 0.0
        %1629 = vmatprep.subr.mxu0 0.0
        %1630 = vmatpush2.msra.mxu0 0.0
        %1631 = vmatprep.subr.mxu0 0.0
        %1632 = vmatpush2.msra.mxu0 0.0
        %1633 = vmatprep.subr.mxu0 0.0
        %1634 = vmatpush2.msra.mxu0 0.0
        %1635 = vmatprep.subr.mxu0 0.0
        %1636 = vmatpush2.msra.mxu0 0.0
        %1637 = vmatprep.subr.mxu0 0.0
        %1638 = vmatpush2.msra.mxu0 0.0
        %1639 = vmatprep.subr.mxu0 0.0
        %1640 = vmatpush2.msra.mxu0 0.0
        %1641 = vmatprep.subr.mxu0 0.0
        %1642 = vmatpush2.msra.mxu0 0.0
        %1643 = vmatprep.subr.mxu0 0.0
        %1644 = vmatpush2.msra.mxu0 0.0
        %1645 = vmatprep.subr.mxu0 0.0
        %1646 = vmatpush2.msra.mxu0 0.0
        %1647 = vmatprep.mubr.f32.mxu0 0.0
        %1648 = vmatmul.mubr.f32.gmra.mxu0 %v1500
        %v1649 = vpop.f32.mrf.mxu0
        %v1650 = vadd.f32 0.0, %v1649
        %v1651 = vpop.f32.mrf.mxu0
        %v1652 = vadd.f32 0.0, %v1651
        %1653 = vdwg.mxu0
        %v1654 = vadd.f32 %v1508, %v1579
        %v1655 = vadd.f32 %v1509, %v1581
        %v1656 = vadd.f32 %v1510, %v1650
        %v1657 = vadd.f32 %v1511, %v1652
        %v1658 = vxor.u32 %v1654, 2147483648
        %v1659 = vmul.f32 %v1658, 1.442695
        %v1660 = vpow.pop %v1659
        %v1661 = vadd.f32 %v1660, 1.0
        %v1662 = vrcp.pop %v1661
        %v1663 = vmul.f32 1.0, %v1662
        %v1664 = vxor.u32 %v1655, 2147483648
        %v1665 = vmul.f32 %v1664, 1.442695
        %v1666 = vpow.pop %v1665
        %v1667 = vadd.f32 %v1666, 1.0
        %v1668 = vrcp.pop %v1667
        %v1669 = vmul.f32 1.0, %v1668
        %v1670 = vtanh.pop %v1656
        %v1671 = vxor.u32 %v1657, 2147483648
        %v1672 = vmul.f32 %v1671, 1.442695
        %v1673 = vpow.pop %v1672
        %v1674 = vadd.f32 %v1673, 1.0
        %v1675 = vrcp.pop %v1674
        %v1676 = vmul.f32 1.0, %v1675
        %v1677 = vmul.f32 %v1669, %v1498
        %v1678 = vmul.f32 %v1663, %v1670
        %v1679 = vadd.f32 %v1677, %v1678
        %v1680 = vtanh.pop %v1679
        %v1681 = vmul.f32 %v1676, %v1680
        %s1682 = smul.u32 %s1504, 8
        %s1683 = scalar_lea.vmem %s271, %s1682 [#allocation6]
        %1684 = vst [vmem:[%s1683] sm:$0xff] %v1681
        %s1685 = scalar_select %p779, 5, 2
        %s1686 = smul.u32 %s1685, 4
        %s1687 = smul.addr %s1686, 8
        %s1688 = scalar_lea.vmem [#allocation2], %s1687
        %v1689 = vld [vmem:[%s1688] sm:$0xff]
        %v1690 = vld [vmem:[%s1688 + $0x8] sm:$0xff]
        %v1691 = vld [vmem:[%s1688 + $0x10] sm:$0xff]
        %v1692 = vld [vmem:[%s1688 + $0x18] sm:$0xff]
        %1693 = vmatprep.subr.mxu0 %v776
        %1694 = vmatpush1.msra.mxu0 %v775
        %1695 = vmatprep.subr.mxu0 %v772
        %1696 = vmatpush1.msra.mxu0 %v771
        %1697 = vmatprep.subr.mxu0 %v768
        %1698 = vmatpush1.msra.mxu0 %v767
        %1699 = vmatprep.subr.mxu0 %v764
        %1700 = vmatpush1.msra.mxu0 %v763
        %1701 = vmatprep.subr.mxu0 %v760
        %1702 = vmatpush1.msra.mxu0 %v759
        %1703 = vmatprep.subr.mxu0 %v756
        %1704 = vmatpush1.msra.mxu0 %v755
        %1705 = vmatprep.subr.mxu0 %v752
        %1706 = vmatpush1.msra.mxu0 %v751
        %1707 = vmatprep.subr.mxu0 %v748
        %1708 = vmatpush1.msra.mxu0 %v747
        %1709 = vmatprep.subr.mxu0 %v744
        %1710 = vmatpush1.msra.mxu0 %v743
        %1711 = vmatprep.subr.mxu0 %v740
        %1712 = vmatpush1.msra.mxu0 %v739
        %1713 = vmatprep.subr.mxu0 %v736
        %1714 = vmatpush1.msra.mxu0 %v735
        %1715 = vmatprep.subr.mxu0 %v732
        %1716 = vmatpush1.msra.mxu0 %v731
        %1717 = vmatprep.subr.mxu0 %v728
        %1718 = vmatpush1.msra.mxu0 %v727
        %1719 = vmatprep.subr.mxu0 %v724
        %1720 = vmatpush1.msra.mxu0 %v723
        %1721 = vmatprep.subr.mxu0 %v720
        %1722 = vmatpush1.msra.mxu0 %v719
        %1723 = vmatprep.subr.mxu0 %v716
        %1724 = vmatpush1.msra.mxu0 %v715
        %1725 = vmatprep.subr.mxu0 0.0
        %1726 = vmatpush2.msra.mxu0 0.0
        %1727 = vmatprep.subr.mxu0 0.0
        %1728 = vmatpush2.msra.mxu0 0.0
        %1729 = vmatprep.subr.mxu0 0.0
        %1730 = vmatpush2.msra.mxu0 0.0
        %1731 = vmatprep.subr.mxu0 0.0
        %1732 = vmatpush2.msra.mxu0 0.0
        %1733 = vmatprep.subr.mxu0 0.0
        %1734 = vmatpush2.msra.mxu0 0.0
        %1735 = vmatprep.subr.mxu0 0.0
        %1736 = vmatpush2.msra.mxu0 0.0
        %1737 = vmatprep.subr.mxu0 0.0
        %1738 = vmatpush2.msra.mxu0 0.0
        %1739 = vmatprep.subr.mxu0 0.0
        %1740 = vmatpush2.msra.mxu0 0.0
        %1741 = vmatprep.subr.mxu0 0.0
        %1742 = vmatpush2.msra.mxu0 0.0
        %1743 = vmatprep.subr.mxu0 0.0
        %1744 = vmatpush2.msra.mxu0 0.0
        %1745 = vmatprep.subr.mxu0 0.0
        %1746 = vmatpush2.msra.mxu0 0.0
        %1747 = vmatprep.subr.mxu0 0.0
        %1748 = vmatpush2.msra.mxu0 0.0
        %1749 = vmatprep.subr.mxu0 0.0
        %1750 = vmatpush2.msra.mxu0 0.0
        %1751 = vmatprep.subr.mxu0 0.0
        %1752 = vmatpush2.msra.mxu0 0.0
        %1753 = vmatprep.subr.mxu0 0.0
        %1754 = vmatpush2.msra.mxu0 0.0
        %1755 = vmatprep.subr.mxu0 0.0
        %1756 = vmatpush2.msra.mxu0 0.0
        %1757 = vmatprep.mubr.f32.mxu0 0.0
        %1758 = vmatmul.mubr.f32.gmra.mxu0 %v1681
        %v1759 = vpop.f32.mrf.mxu0
        %v1760 = vadd.f32 0.0, %v1759
        %v1761 = vpop.f32.mrf.mxu0
        %v1762 = vadd.f32 0.0, %v1761
        %1763 = vdwg.mxu0
        %1764 = vmatprep.subr.mxu0 %v778
        %1765 = vmatpush1.msra.mxu0 %v777
        %1766 = vmatprep.subr.mxu0 %v774
        %1767 = vmatpush1.msra.mxu0 %v773
        %1768 = vmatprep.subr.mxu0 %v770
        %1769 = vmatpush1.msra.mxu0 %v769
        %1770 = vmatprep.subr.mxu0 %v766
        %1771 = vmatpush1.msra.mxu0 %v765
        %1772 = vmatprep.subr.mxu0 %v762
        %1773 = vmatpush1.msra.mxu0 %v761
        %1774 = vmatprep.subr.mxu0 %v758
        %1775 = vmatpush1.msra.mxu0 %v757
        %1776 = vmatprep.subr.mxu0 %v754
        %1777 = vmatpush1.msra.mxu0 %v753
        %1778 = vmatprep.subr.mxu0 %v750
        %1779 = vmatpush1.msra.mxu0 %v749
        %1780 = vmatprep.subr.mxu0 %v746
        %1781 = vmatpush1.msra.mxu0 %v745
        %1782 = vmatprep.subr.mxu0 %v742
        %1783 = vmatpush1.msra.mxu0 %v741
        %1784 = vmatprep.subr.mxu0 %v738
        %1785 = vmatpush1.msra.mxu0 %v737
        %1786 = vmatprep.subr.mxu0 %v734
        %1787 = vmatpush1.msra.mxu0 %v733
        %1788 = vmatprep.subr.mxu0 %v730
        %1789 = vmatpush1.msra.mxu0 %v729
        %1790 = vmatprep.subr.mxu0 %v726
        %1791 = vmatpush1.msra.mxu0 %v725
        %1792 = vmatprep.subr.mxu0 %v722
        %1793 = vmatpush1.msra.mxu0 %v721
        %1794 = vmatprep.subr.mxu0 %v718
        %1795 = vmatpush1.msra.mxu0 %v717
        %1796 = vmatprep.subr.mxu0 0.0
        %1797 = vmatpush2.msra.mxu0 0.0
        %1798 = vmatprep.subr.mxu0 0.0
        %1799 = vmatpush2.msra.mxu0 0.0
        %1800 = vmatprep.subr.mxu0 0.0
        %1801 = vmatpush2.msra.mxu0 0.0
        %1802 = vmatprep.subr.mxu0 0.0
        %1803 = vmatpush2.msra.mxu0 0.0
        %1804 = vmatprep.subr.mxu0 0.0
        %1805 = vmatpush2.msra.mxu0 0.0
        %1806 = vmatprep.subr.mxu0 0.0
        %1807 = vmatpush2.msra.mxu0 0.0
        %1808 = vmatprep.subr.mxu0 0.0
        %1809 = vmatpush2.msra.mxu0 0.0
        %1810 = vmatprep.subr.mxu0 0.0
        %1811 = vmatpush2.msra.mxu0 0.0
        %1812 = vmatprep.subr.mxu0 0.0
        %1813 = vmatpush2.msra.mxu0 0.0
        %1814 = vmatprep.subr.mxu0 0.0
        %1815 = vmatpush2.msra.mxu0 0.0
        %1816 = vmatprep.subr.mxu0 0.0
        %1817 = vmatpush2.msra.mxu0 0.0
        %1818 = vmatprep.subr.mxu0 0.0
        %1819 = vmatpush2.msra.mxu0 0.0
        %1820 = vmatprep.subr.mxu0 0.0
        %1821 = vmatpush2.msra.mxu0 0.0
        %1822 = vmatprep.subr.mxu0 0.0
        %1823 = vmatpush2.msra.mxu0 0.0
        %1824 = vmatprep.subr.mxu0 0.0
        %1825 = vmatpush2.msra.mxu0 0.0
        %1826 = vmatprep.subr.mxu0 0.0
        %1827 = vmatpush2.msra.mxu0 0.0
        %1828 = vmatprep.mubr.f32.mxu0 0.0
        %1829 = vmatmul.mubr.f32.gmra.mxu0 %v1681
        %v1830 = vpop.f32.mrf.mxu0
        %v1831 = vadd.f32 0.0, %v1830
        %v1832 = vpop.f32.mrf.mxu0
        %v1833 = vadd.f32 0.0, %v1832
        %1834 = vdwg.mxu0
        %v1835 = vadd.f32 %v1689, %v1760
        %v1836 = vadd.f32 %v1690, %v1762
        %v1837 = vadd.f32 %v1691, %v1831
        %v1838 = vadd.f32 %v1692, %v1833
        %v1839 = vxor.u32 %v1835, 2147483648
        %v1840 = vmul.f32 %v1839, 1.442695
        %v1841 = vpow.pop %v1840
        %v1842 = vadd.f32 %v1841, 1.0
        %v1843 = vrcp.pop %v1842
        %v1844 = vmul.f32 1.0, %v1843
        %v1845 = vxor.u32 %v1836, 2147483648
        %v1846 = vmul.f32 %v1845, 1.442695
        %v1847 = vpow.pop %v1846
        %v1848 = vadd.f32 %v1847, 1.0
        %v1849 = vrcp.pop %v1848
        %v1850 = vmul.f32 1.0, %v1849
        %v1851 = vtanh.pop %v1837
        %v1852 = vxor.u32 %v1838, 2147483648
        %v1853 = vmul.f32 %v1852, 1.442695
        %v1854 = vpow.pop %v1853
        %v1855 = vadd.f32 %v1854, 1.0
        %v1856 = vrcp.pop %v1855
        %v1857 = vmul.f32 1.0, %v1856
        %v1858 = vmul.f32 %v1850, %v1679
        %v1859 = vmul.f32 %v1844, %v1851
        %v1860 = vadd.f32 %v1858, %v1859
        %v1861 = vtanh.pop %v1860
        %v1862 = vmul.f32 %v1857, %v1861
        %s1863 = smul.u32 %s1685, 8
        %s1864 = scalar_lea.vmem %s271, %s1863 [#allocation6]
        %1865 = vst [vmem:[%s1864] sm:$0xff] %v1862
        %s1866 = scalar_select %p779, 6, 1
        %s1867 = smul.u32 %s1866, 4
        %s1868 = smul.addr %s1867, 8
        %s1869 = scalar_lea.vmem [#allocation2], %s1868
        %v1870 = vld [vmem:[%s1869] sm:$0xff]
        %v1871 = vld [vmem:[%s1869 + $0x8] sm:$0xff]
        %v1872 = vld [vmem:[%s1869 + $0x10] sm:$0xff]
        %v1873 = vld [vmem:[%s1869 + $0x18] sm:$0xff]
        %1874 = vmatprep.subr.mxu0 %v776
        %1875 = vmatpush1.msra.mxu0 %v775
        %1876 = vmatprep.subr.mxu0 %v772
        %1877 = vmatpush1.msra.mxu0 %v771
        %1878 = vmatprep.subr.mxu0 %v768
        %1879 = vmatpush1.msra.mxu0 %v767
        %1880 = vmatprep.subr.mxu0 %v764
        %1881 = vmatpush1.msra.mxu0 %v763
        %1882 = vmatprep.subr.mxu0 %v760
        %1883 = vmatpush1.msra.mxu0 %v759
        %1884 = vmatprep.subr.mxu0 %v756
        %1885 = vmatpush1.msra.mxu0 %v755
        %1886 = vmatprep.subr.mxu0 %v752
        %1887 = vmatpush1.msra.mxu0 %v751
        %1888 = vmatprep.subr.mxu0 %v748
        %1889 = vmatpush1.msra.mxu0 %v747
        %1890 = vmatprep.subr.mxu0 %v744
        %1891 = vmatpush1.msra.mxu0 %v743
        %1892 = vmatprep.subr.mxu0 %v740
        %1893 = vmatpush1.msra.mxu0 %v739
        %1894 = vmatprep.subr.mxu0 %v736
        %1895 = vmatpush1.msra.mxu0 %v735
        %1896 = vmatprep.subr.mxu0 %v732
        %1897 = vmatpush1.msra.mxu0 %v731
        %1898 = vmatprep.subr.mxu0 %v728
        %1899 = vmatpush1.msra.mxu0 %v727
        %1900 = vmatprep.subr.mxu0 %v724
        %1901 = vmatpush1.msra.mxu0 %v723
        %1902 = vmatprep.subr.mxu0 %v720
        %1903 = vmatpush1.msra.mxu0 %v719
        %1904 = vmatprep.subr.mxu0 %v716
        %1905 = vmatpush1.msra.mxu0 %v715
        %1906 = vmatprep.subr.mxu0 0.0
        %1907 = vmatpush2.msra.mxu0 0.0
        %1908 = vmatprep.subr.mxu0 0.0
        %1909 = vmatpush2.msra.mxu0 0.0
        %1910 = vmatprep.subr.mxu0 0.0
        %1911 = vmatpush2.msra.mxu0 0.0
        %1912 = vmatprep.subr.mxu0 0.0
        %1913 = vmatpush2.msra.mxu0 0.0
        %1914 = vmatprep.subr.mxu0 0.0
        %1915 = vmatpush2.msra.mxu0 0.0
        %1916 = vmatprep.subr.mxu0 0.0
        %1917 = vmatpush2.msra.mxu0 0.0
        %1918 = vmatprep.subr.mxu0 0.0
        %1919 = vmatpush2.msra.mxu0 0.0
        %1920 = vmatprep.subr.mxu0 0.0
        %1921 = vmatpush2.msra.mxu0 0.0
        %1922 = vmatprep.subr.mxu0 0.0
        %1923 = vmatpush2.msra.mxu0 0.0
        %1924 = vmatprep.subr.mxu0 0.0
        %1925 = vmatpush2.msra.mxu0 0.0
        %1926 = vmatprep.subr.mxu0 0.0
        %1927 = vmatpush2.msra.mxu0 0.0
        %1928 = vmatprep.subr.mxu0 0.0
        %1929 = vmatpush2.msra.mxu0 0.0
        %1930 = vmatprep.subr.mxu0 0.0
        %1931 = vmatpush2.msra.mxu0 0.0
        %1932 = vmatprep.subr.mxu0 0.0
        %1933 = vmatpush2.msra.mxu0 0.0
        %1934 = vmatprep.subr.mxu0 0.0
        %1935 = vmatpush2.msra.mxu0 0.0
        %1936 = vmatprep.subr.mxu0 0.0
        %1937 = vmatpush2.msra.mxu0 0.0
        %1938 = vmatprep.mubr.f32.mxu0 0.0
        %1939 = vmatmul.mubr.f32.gmra.mxu0 %v1862
        %v1940 = vpop.f32.mrf.mxu0
        %v1941 = vadd.f32 0.0, %v1940
        %v1942 = vpop.f32.mrf.mxu0
        %v1943 = vadd.f32 0.0, %v1942
        %1944 = vdwg.mxu0
        %1945 = vmatprep.subr.mxu0 %v778
        %1946 = vmatpush1.msra.mxu0 %v777
        %1947 = vmatprep.subr.mxu0 %v774
        %1948 = vmatpush1.msra.mxu0 %v773
        %1949 = vmatprep.subr.mxu0 %v770
        %1950 = vmatpush1.msra.mxu0 %v769
        %1951 = vmatprep.subr.mxu0 %v766
        %1952 = vmatpush1.msra.mxu0 %v765
        %1953 = vmatprep.subr.mxu0 %v762
        %1954 = vmatpush1.msra.mxu0 %v761
        %1955 = vmatprep.subr.mxu0 %v758
        %1956 = vmatpush1.msra.mxu0 %v757
        %1957 = vmatprep.subr.mxu0 %v754
        %1958 = vmatpush1.msra.mxu0 %v753
        %1959 = vmatprep.subr.mxu0 %v750
        %1960 = vmatpush1.msra.mxu0 %v749
        %1961 = vmatprep.subr.mxu0 %v746
        %1962 = vmatpush1.msra.mxu0 %v745
        %1963 = vmatprep.subr.mxu0 %v742
        %1964 = vmatpush1.msra.mxu0 %v741
        %1965 = vmatprep.subr.mxu0 %v738
        %1966 = vmatpush1.msra.mxu0 %v737
        %1967 = vmatprep.subr.mxu0 %v734
        %1968 = vmatpush1.msra.mxu0 %v733
        %1969 = vmatprep.subr.mxu0 %v730
        %1970 = vmatpush1.msra.mxu0 %v729
        %1971 = vmatprep.subr.mxu0 %v726
        %1972 = vmatpush1.msra.mxu0 %v725
        %1973 = vmatprep.subr.mxu0 %v722
        %1974 = vmatpush1.msra.mxu0 %v721
        %1975 = vmatprep.subr.mxu0 %v718
        %1976 = vmatpush1.msra.mxu0 %v717
        %1977 = vmatprep.subr.mxu0 0.0
        %1978 = vmatpush2.msra.mxu0 0.0
        %1979 = vmatprep.subr.mxu0 0.0
        %1980 = vmatpush2.msra.mxu0 0.0
        %1981 = vmatprep.subr.mxu0 0.0
        %1982 = vmatpush2.msra.mxu0 0.0
        %1983 = vmatprep.subr.mxu0 0.0
        %1984 = vmatpush2.msra.mxu0 0.0
        %1985 = vmatprep.subr.mxu0 0.0
        %1986 = vmatpush2.msra.mxu0 0.0
        %1987 = vmatprep.subr.mxu0 0.0
        %1988 = vmatpush2.msra.mxu0 0.0
        %1989 = vmatprep.subr.mxu0 0.0
        %1990 = vmatpush2.msra.mxu0 0.0
        %1991 = vmatprep.subr.mxu0 0.0
        %1992 = vmatpush2.msra.mxu0 0.0
        %1993 = vmatprep.subr.mxu0 0.0
        %1994 = vmatpush2.msra.mxu0 0.0
        %1995 = vmatprep.subr.mxu0 0.0
        %1996 = vmatpush2.msra.mxu0 0.0
        %1997 = vmatprep.subr.mxu0 0.0
        %1998 = vmatpush2.msra.mxu0 0.0
        %1999 = vmatprep.subr.mxu0 0.0
        %2000 = vmatpush2.msra.mxu0 0.0
        %2001 = vmatprep.subr.mxu0 0.0
        %2002 = vmatpush2.msra.mxu0 0.0
        %2003 = vmatprep.subr.mxu0 0.0
        %2004 = vmatpush2.msra.mxu0 0.0
        %2005 = vmatprep.subr.mxu0 0.0
        %2006 = vmatpush2.msra.mxu0 0.0
        %2007 = vmatprep.subr.mxu0 0.0
        %2008 = vmatpush2.msra.mxu0 0.0
        %2009 = vmatprep.mubr.f32.mxu0 0.0
        %2010 = vmatmul.mubr.f32.gmra.mxu0 %v1862
        %v2011 = vpop.f32.mrf.mxu0
        %v2012 = vadd.f32 0.0, %v2011
        %v2013 = vpop.f32.mrf.mxu0
        %v2014 = vadd.f32 0.0, %v2013
        %2015 = vdwg.mxu0
        %v2016 = vadd.f32 %v1870, %v1941
        %v2017 = vadd.f32 %v1871, %v1943
        %v2018 = vadd.f32 %v1872, %v2012
        %v2019 = vadd.f32 %v1873, %v2014
        %v2020 = vxor.u32 %v2016, 2147483648
        %v2021 = vmul.f32 %v2020, 1.442695
        %v2022 = vpow.pop %v2021
        %v2023 = vadd.f32 %v2022, 1.0
        %v2024 = vrcp.pop %v2023
        %v2025 = vmul.f32 1.0, %v2024
        %v2026 = vxor.u32 %v2017, 2147483648
        %v2027 = vmul.f32 %v2026, 1.442695
        %v2028 = vpow.pop %v2027
        %v2029 = vadd.f32 %v2028, 1.0
        %v2030 = vrcp.pop %v2029
        %v2031 = vmul.f32 1.0, %v2030
        %v2032 = vtanh.pop %v2018
        %v2033 = vxor.u32 %v2019, 2147483648
        %v2034 = vmul.f32 %v2033, 1.442695
        %v2035 = vpow.pop %v2034
        %v2036 = vadd.f32 %v2035, 1.0
        %v2037 = vrcp.pop %v2036
        %v2038 = vmul.f32 1.0, %v2037
        %v2039 = vmul.f32 %v2031, %v1860
        %v2040 = vmul.f32 %v2025, %v2032
        %v2041 = vadd.f32 %v2039, %v2040
        %v2042 = vtanh.pop %v2041
        %v2043 = vmul.f32 %v2038, %v2042
        %s2044 = smul.u32 %s1866, 8
        %s2045 = scalar_lea.vmem %s271, %s2044 [#allocation6]
        %2046 = vst [vmem:[%s2045] sm:$0xff] %v2043
        %s2047 = scalar_select %p779, 7, 0
        %s2048 = smul.u32 %s2047, 4
        %s2049 = smul.addr %s2048, 8
        %s2050 = scalar_lea.vmem [#allocation2], %s2049
        %v2051 = vld [vmem:[%s2050] sm:$0xff]
        %v2052 = vld [vmem:[%s2050 + $0x8] sm:$0xff]
        %v2053 = vld [vmem:[%s2050 + $0x10] sm:$0xff]
        %v2054 = vld [vmem:[%s2050 + $0x18] sm:$0xff]
        %2055 = vmatprep.subr.mxu0 %v776
        %2056 = vmatpush1.msra.mxu0 %v775
        %2057 = vmatprep.subr.mxu0 %v772
        %2058 = vmatpush1.msra.mxu0 %v771
        %2059 = vmatprep.subr.mxu0 %v768
        %2060 = vmatpush1.msra.mxu0 %v767
        %2061 = vmatprep.subr.mxu0 %v764
        %2062 = vmatpush1.msra.mxu0 %v763
        %2063 = vmatprep.subr.mxu0 %v760
        %2064 = vmatpush1.msra.mxu0 %v759
        %2065 = vmatprep.subr.mxu0 %v756
        %2066 = vmatpush1.msra.mxu0 %v755
        %2067 = vmatprep.subr.mxu0 %v752
        %2068 = vmatpush1.msra.mxu0 %v751
        %2069 = vmatprep.subr.mxu0 %v748
        %2070 = vmatpush1.msra.mxu0 %v747
        %2071 = vmatprep.subr.mxu0 %v744
        %2072 = vmatpush1.msra.mxu0 %v743
        %2073 = vmatprep.subr.mxu0 %v740
        %2074 = vmatpush1.msra.mxu0 %v739
        %2075 = vmatprep.subr.mxu0 %v736
        %2076 = vmatpush1.msra.mxu0 %v735
        %2077 = vmatprep.subr.mxu0 %v732
        %2078 = vmatpush1.msra.mxu0 %v731
        %2079 = vmatprep.subr.mxu0 %v728
        %2080 = vmatpush1.msra.mxu0 %v727
        %2081 = vmatprep.subr.mxu0 %v724
        %2082 = vmatpush1.msra.mxu0 %v723
        %2083 = vmatprep.subr.mxu0 %v720
        %2084 = vmatpush1.msra.mxu0 %v719
        %2085 = vmatprep.subr.mxu0 %v716
        %2086 = vmatpush1.msra.mxu0 %v715
        %2087 = vmatprep.subr.mxu0 0.0
        %2088 = vmatpush2.msra.mxu0 0.0
        %2089 = vmatprep.subr.mxu0 0.0
        %2090 = vmatpush2.msra.mxu0 0.0
        %2091 = vmatprep.subr.mxu0 0.0
        %2092 = vmatpush2.msra.mxu0 0.0
        %2093 = vmatprep.subr.mxu0 0.0
        %2094 = vmatpush2.msra.mxu0 0.0
        %2095 = vmatprep.subr.mxu0 0.0
        %2096 = vmatpush2.msra.mxu0 0.0
        %2097 = vmatprep.subr.mxu0 0.0
        %2098 = vmatpush2.msra.mxu0 0.0
        %2099 = vmatprep.subr.mxu0 0.0
        %2100 = vmatpush2.msra.mxu0 0.0
        %2101 = vmatprep.subr.mxu0 0.0
        %2102 = vmatpush2.msra.mxu0 0.0
        %2103 = vmatprep.subr.mxu0 0.0
        %2104 = vmatpush2.msra.mxu0 0.0
        %2105 = vmatprep.subr.mxu0 0.0
        %2106 = vmatpush2.msra.mxu0 0.0
        %2107 = vmatprep.subr.mxu0 0.0
        %2108 = vmatpush2.msra.mxu0 0.0
        %2109 = vmatprep.subr.mxu0 0.0
        %2110 = vmatpush2.msra.mxu0 0.0
        %2111 = vmatprep.subr.mxu0 0.0
        %2112 = vmatpush2.msra.mxu0 0.0
        %2113 = vmatprep.subr.mxu0 0.0
        %2114 = vmatpush2.msra.mxu0 0.0
        %2115 = vmatprep.subr.mxu0 0.0
        %2116 = vmatpush2.msra.mxu0 0.0
        %2117 = vmatprep.subr.mxu0 0.0
        %2118 = vmatpush2.msra.mxu0 0.0
        %2119 = vmatprep.mubr.f32.mxu0 0.0
        %2120 = vmatmul.mubr.f32.gmra.mxu0 %v2043
        %v2121 = vpop.f32.mrf.mxu0
        %v2122 = vadd.f32 0.0, %v2121
        %v2123 = vpop.f32.mrf.mxu0
        %v2124 = vadd.f32 0.0, %v2123
        %2125 = vdwg.mxu0
        %2126 = vmatprep.subr.mxu0 %v778
        %2127 = vmatpush1.msra.mxu0 %v777
        %2128 = vmatprep.subr.mxu0 %v774
        %2129 = vmatpush1.msra.mxu0 %v773
        %2130 = vmatprep.subr.mxu0 %v770
        %2131 = vmatpush1.msra.mxu0 %v769
        %2132 = vmatprep.subr.mxu0 %v766
        %2133 = vmatpush1.msra.mxu0 %v765
        %2134 = vmatprep.subr.mxu0 %v762
        %2135 = vmatpush1.msra.mxu0 %v761
        %2136 = vmatprep.subr.mxu0 %v758
        %2137 = vmatpush1.msra.mxu0 %v757
        %2138 = vmatprep.subr.mxu0 %v754
        %2139 = vmatpush1.msra.mxu0 %v753
        %2140 = vmatprep.subr.mxu0 %v750
        %2141 = vmatpush1.msra.mxu0 %v749
        %2142 = vmatprep.subr.mxu0 %v746
        %2143 = vmatpush1.msra.mxu0 %v745
        %2144 = vmatprep.subr.mxu0 %v742
        %2145 = vmatpush1.msra.mxu0 %v741
        %2146 = vmatprep.subr.mxu0 %v738
        %2147 = vmatpush1.msra.mxu0 %v737
        %2148 = vmatprep.subr.mxu0 %v734
        %2149 = vmatpush1.msra.mxu0 %v733
        %2150 = vmatprep.subr.mxu0 %v730
        %2151 = vmatpush1.msra.mxu0 %v729
        %2152 = vmatprep.subr.mxu0 %v726
        %2153 = vmatpush1.msra.mxu0 %v725
        %2154 = vmatprep.subr.mxu0 %v722
        %2155 = vmatpush1.msra.mxu0 %v721
        %2156 = vmatprep.subr.mxu0 %v718
        %2157 = vmatpush1.msra.mxu0 %v717
        %2158 = vmatprep.subr.mxu0 0.0
        %2159 = vmatpush2.msra.mxu0 0.0
        %2160 = vmatprep.subr.mxu0 0.0
        %2161 = vmatpush2.msra.mxu0 0.0
        %2162 = vmatprep.subr.mxu0 0.0
        %2163 = vmatpush2.msra.mxu0 0.0
        %2164 = vmatprep.subr.mxu0 0.0
        %2165 = vmatpush2.msra.mxu0 0.0
        %2166 = vmatprep.subr.mxu0 0.0
        %2167 = vmatpush2.msra.mxu0 0.0
        %2168 = vmatprep.subr.mxu0 0.0
        %2169 = vmatpush2.msra.mxu0 0.0
        %2170 = vmatprep.subr.mxu0 0.0
        %2171 = vmatpush2.msra.mxu0 0.0
        %2172 = vmatprep.subr.mxu0 0.0
        %2173 = vmatpush2.msra.mxu0 0.0
        %2174 = vmatprep.subr.mxu0 0.0
        %2175 = vmatpush2.msra.mxu0 0.0
        %2176 = vmatprep.subr.mxu0 0.0
        %2177 = vmatpush2.msra.mxu0 0.0
        %2178 = vmatprep.subr.mxu0 0.0
        %2179 = vmatpush2.msra.mxu0 0.0
        %2180 = vmatprep.subr.mxu0 0.0
        %2181 = vmatpush2.msra.mxu0 0.0
        %2182 = vmatprep.subr.mxu0 0.0
        %2183 = vmatpush2.msra.mxu0 0.0
        %2184 = vmatprep.subr.mxu0 0.0
        %2185 = vmatpush2.msra.mxu0 0.0
        %2186 = vmatprep.subr.mxu0 0.0
        %2187 = vmatpush2.msra.mxu0 0.0
        %2188 = vmatprep.subr.mxu0 0.0
        %2189 = vmatpush2.msra.mxu0 0.0
        %2190 = vmatprep.mubr.f32.mxu0 0.0
        %2191 = vmatmul.mubr.f32.gmra.mxu0 %v2043
        %v2192 = vpop.f32.mrf.mxu0
        %v2193 = vadd.f32 0.0, %v2192
        %v2194 = vpop.f32.mrf.mxu0
        %v2195 = vadd.f32 0.0, %v2194
        %2196 = vdwg.mxu0
        %v2197 = vadd.f32 %v2051, %v2122
        %v2198 = vadd.f32 %v2052, %v2124
        %v2199 = vadd.f32 %v2053, %v2193
        %v2200 = vadd.f32 %v2054, %v2195
        %v2201 = vxor.u32 %v2197, 2147483648
        %v2202 = vmul.f32 %v2201, 1.442695
        %v2203 = vpow.pop %v2202
        %v2204 = vadd.f32 %v2203, 1.0
        %v2205 = vrcp.pop %v2204
        %v2206 = vmul.f32 1.0, %v2205
        %v2207 = vxor.u32 %v2198, 2147483648
        %v2208 = vmul.f32 %v2207, 1.442695
        %v2209 = vpow.pop %v2208
        %v2210 = vadd.f32 %v2209, 1.0
        %v2211 = vrcp.pop %v2210
        %v2212 = vmul.f32 1.0, %v2211
        %v2213 = vtanh.pop %v2199
        %v2214 = vxor.u32 %v2200, 2147483648
        %v2215 = vmul.f32 %v2214, 1.442695
        %v2216 = vpow.pop %v2215
        %v2217 = vadd.f32 %v2216, 1.0
        %v2218 = vrcp.pop %v2217
        %v2219 = vmul.f32 1.0, %v2218
        %v2220 = vmul.f32 %v2212, %v2041
        %v2221 = vmul.f32 %v2206, %v2213
        %v2222 = vadd.f32 %v2220, %v2221
        %v2223 = vtanh.pop %v2222
        %v2224 = vmul.f32 %v2219, %v2223
        %s2225 = smul.u32 %s2047, 8
        %s2226 = scalar_lea.vmem %s271, %s2225 [#allocation6]
        %2227 = vst [vmem:[%s2226] sm:$0xff] %v2224
        %2228 = vst [vmem:[%s290] sm:$0xff] %v2224
        %s2229 = sand.u32 %s130, 1
        %s2230 = scalar_lea.sflag [#allocation5], %s2229
        %s2231 = sand.u32 %s130, 1
        %s2232 = smul.addr %s2231, 64
        %s2233 = scalar_lea.vmem [#allocation6], %s2232
        %p2234 = scmp.lt.s32.totalorder %s23, 1
        %s2235 = scalar_select %p2234, %s23, 1
        %s2236 = smul.addr %s2235, 8
        %s2237 = scalar_lea.vmem %s5, %s2236
        // Predicated region
        $region41: #{base_network_forward.3} parent=35 // pred_check
          %p2238 = pneg %p140
        $region42: #{base_network_forward.3} parent=35 // pred_check_branch
          %2240 = sbr.rel (%p2238) target = $region44
        $region43: #{base_network_forward.3} parent=35 // pred_region
          %s2242 = ssub.s32 1024, 1024
          %2243 = vsyncadd %s2230, %s2242
          %s2244 = smul.addr %s23, 128
          %s2245 = scalar_lea.hbm %s4, %s2244
          %s2246 = sshll.u32 %s2233, 4
          %s2247 = int_to_ptr.vmem [resolvable:$true] %s2246
          %2252 = dma.vmem_to_hbm [thread:$0]  %s2247, 1024, %s2245, %s2230, 128, 256, 8
        $region44: #{base_network_forward.3} parent=35 // pred_fallthru
          _
        // Predicated region
        $region45: #{base_network_forward.3} parent=35 // pred_check
          %p2253 = pneg %p166
        $region46: #{base_network_forward.3} parent=35 // pred_check_branch
          %2255 = sbr.rel (%p2253) target = $region48
        $region47: #{base_network_forward.3} parent=35 // pred_region
          _
        $region48: #{base_network_forward.3} parent=35 // pred_fallthru
          _
      $region36: #{base_network_forward.3} parent=5 // pred_fallthru
        _
      %p2256 = scmp.le.s32.totalorder 2, %s18
      // Predicated region
      $region49: #{base_network_forward.3} parent=5 // pred_check
        %p2257 = pneg %p2256
      $region50: #{base_network_forward.3} parent=5 // pred_check_branch
        %2259 = sbr.rel (%p2257) target = $region52
      $region51: #{base_network_forward.3} parent=5 // pred_region
        %s2260 = ssub.s32 %s18, 2
        // Predicated region
        $region53: #{base_network_forward.3} parent=51 // pred_check
          %p2261 = pneg %p146
        $region54: #{base_network_forward.3} parent=51 // pred_check_branch
          %2263 = sbr.rel (%p2261) target = $region56
        $region55: #{base_network_forward.3} parent=51 // pred_region
          %s2264 = sand.u32 %s131, 1
          %s2265 = scalar_lea.sflag [#allocation5], %s2264
          %s2266 = sand.u32 %s131, 1
          %s2267 = smul.addr %s2266, 64
          %s2268 = scalar_lea.vmem [#allocation6], %s2267
          %2269 = dma.done %s2265, 1024
        $region56: #{base_network_forward.3} parent=51 // pred_fallthru
          _
        // Predicated region
        $region57: #{base_network_forward.3} parent=51 // pred_check
          %p2270 = pneg %p172
        $region58: #{base_network_forward.3} parent=51 // pred_check_branch
          %2272 = sbr.rel (%p2270) target = $region60
        $region59: #{base_network_forward.3} parent=51 // pred_region
          %p2273 = scmp.lt.s32.totalorder %s24, 1
          %s2274 = scalar_select %p2273, %s24, 1
          %s2275 = smul.addr %s2274, 8
          %s2276 = scalar_lea.vmem %s5, %s2275
        $region60: #{base_network_forward.3} parent=51 // pred_fallthru
          _
      $region52: #{base_network_forward.3} parent=5 // pred_fallthru
        _
    $region6: #{base_network_forward.3} parent=1 // loop_footer
      %s22 = sadd.s32 1, %s18
    $region7: #{base_network_forward.3} parent=1 // loop_footer_branch
      %17 = sbr.rel target = $region3
    $region8: #{base_network_forward.3} parent=1 // loop_exit
      _
    %2277 = vsyncpa [#allocation4], 1
    %s2278 = scalar_lea.sflag [#allocation4], 1
    %2279 = vsyncpa %s2278, 1
    %2280 = vsyncpa [#allocation5], 1
    %s2281 = scalar_lea.sflag [#allocation5], 1
    %2282 = vsyncpa %s2281, 1

</llo_original>
